<compile_context>
chip_gen: v7x
topology: tpu7x:2x2x1
jax: 0.10.0
libtpu: 0.0.40
codegen_flags: <defaults>
</compile_context>

<pallas_src>
import functools

import jax
import jax.numpy as jnp
from jax.experimental import pallas as pl
from jax.experimental.pallas import tpu as pltpu


# ------------------------------------------------------------------------------------------
# In-kernel helpers (traced inline; H / approx / mxu_dtype are Python statics)
# ------------------------------------------------------------------------------------------
def _sigmoid(z, approx):
    e = jnp.exp(-z)                                   # one EUP pass over the full (B,4H) tile
    if approx:
        return pl.reciprocal(1.0 + e, approx=True)    # EUP vrcp (fast_math only)
    return 1.0 / (1.0 + e)


def _cell(gates, c, H, approx):
    """LSTM cell; gates is (B,4H), PyTorch order [i,f,g,o].  The g columns of every tensor
    feeding `gates` were pre-doubled, so tanh(g) == 2*sigmoid(2g)-1 comes out of the single
    full-tile sigmoid below (no separate tanh pass for g)."""
    sg = _sigmoid(gates, approx)
    i = sg[:, 0:H]
    f = sg[:, H:2 * H]
    o = sg[:, 3 * H:4 * H]
    g = 2.0 * sg[:, 2 * H:3 * H] - 1.0
    c_new = f * c + i * g
    h_new = o * jnp.tanh(c_new)
    return h_new, c_new


def _mm(a, b, mxu_dtype):
    return jnp.dot(a.astype(mxu_dtype), b, preferred_element_type=jnp.float32)


def _scan_lstm2(pre, w_big, b1_b, state, H, approx, mxu_dtype, collect_h1):
    """Two-layer LSTM scan with precomputed layer-0 input pregates `pre` (T, B, 4H).
    One MXU push per step: [h0_t | h1_{t-1}] @ blockdiag([whh0|wih1], whh1) -> (B, 12H)."""
    h0, c0, h1, c1 = state
    T = pre.shape[0]
    H4 = 4 * H
    # m = [h0_prev@whh0 | h0_prev@wih1 | h1_prev@whh1]; only the first third is read before m
    # is recomputed inside the step, so this init only has to make m[:, :4H] correct.
    m = _mm(jnp.concatenate([h0, h1], axis=1), w_big, mxu_dtype)
    h1_steps = []
    for t in range(T):                                # T static -> fully unrolled
        gates0 = pre[t] + m[:, 0:H4]
        h0, c0 = _cell(gates0, c0, H, approx)
        m = _mm(jnp.concatenate([h0, h1], axis=1), w_big, mxu_dtype)
        gates1 = m[:, H4:2 * H4] + m[:, 2 * H4:3 * H4] + b1_b
        h1, c1 = _cell(gates1, c1, H, approx)
        if collect_h1:
            h1_steps.append(h1)
    return (h0, c0, h1, c1), h1_steps


def _bulk_head(h1_steps, out_w, out_b, B, H):
    """Linear head over all T steps at once (off the recurrence critical path)."""
    h1_all = jnp.stack(h1_steps, axis=0)                              # (T, B, H)
    out_w_b = jnp.broadcast_to(out_w, (B, H))
    return jnp.sum(h1_all * out_w_b[None, :, :], axis=-1) + out_b     # (T, B)


# ------------------------------------------------------------------------------------------
# Kernels
# ------------------------------------------------------------------------------------------
def _lstm_ae_train_kernel(x_ref, e_wih0, e_b0, e_wbig, e_b1,
                          d_wih0, d_b0, d_wbig, d_b1, out_w, out_b,
                          y_ref, *, H, approx, mxu_dtype):
    T, B, _ = x_ref.shape
    H4 = 4 * H
    x_all = x_ref[...]                                                 # (T, B, 1)

    # ---------------- encoder ----------------
    enc_pre = x_all * e_wih0[...][None, :, :] + e_b0[...][None, :, :]  # (T, B, 4H) bulk
    e_b1_b = jnp.broadcast_to(e_b1[...], (B, H4))
    zeros = jnp.zeros((B, H), jnp.float32)
    state, _ = _scan_lstm2(enc_pre, e_wbig[...], e_b1_b, (zeros, zeros, zeros, zeros),
                           H, approx, mxu_dtype, collect_h1=False)

    # -------- teacher-forced decoder (inputs known for all T -> bulk pregates) --------
    dec_pre = x_all * d_wih0[...][None, :, :] + d_b0[...][None, :, :]
    d_b1_b = jnp.broadcast_to(d_b1[...], (B, H4))
    _, h1_steps = _scan_lstm2(dec_pre, d_wbig[...], d_b1_b, state,
                              H, approx, mxu_dtype, collect_h1=True)

    # ---------------- bulk head, lane-dense (T, B) store ----------------
    y_ref[...] = _bulk_head(h1_steps, out_w[...], out_b[...], B, H)


def _lstm_ae_eval_kernel(x_ref, e_wih0, e_b0, e_wbig, e_b1,
                         d_wih0, d_b0, d_b0fb, d_wA, d_wB, d_b1, out_w, out_b,
                         y_ref, *, H, approx, mxu_dtype):
    T, B, _ = x_ref.shape
    H4 = 4 * H
    x_all = x_ref[...]

    # ---------------- encoder ----------------
    enc_pre = x_all * e_wih0[...][None, :, :] + e_b0[...][None, :, :]
    e_b1_b = jnp.broadcast_to(e_b1[...], (B, H4))
    zeros = jnp.zeros((B, H), jnp.float32)
    (dh0, dc0, dh1, dc1), _ = _scan_lstm2(
        enc_pre, e_wbig[...], e_b1_b, (zeros, zeros, zeros, zeros),
        H, approx, mxu_dtype, collect_h1=False)

    # -------- autoregressive decoder, linear head folded out of the recurrence --------
    #   mA = dh0 @ [d_whh0 | d_wih1]   (next-step layer-0 recurrence | this-step layer-1 in)
    #   mB = dh1 @ [W_feed | d_whh1]   (next-step layer-0 feedback   | next-step layer-1 rec)
    wA = d_wA[...]
    wB = d_wB[...]
    d_b1_b = jnp.broadcast_to(d_b1[...], (B, H4))
    b0fb_b = jnp.broadcast_to(d_b0fb[...], (B, H4))    # out_b*d_wih0 + d_b0 (feedback bias)
    mA = _mm(dh0, wA, mxu_dtype)
    mB = _mm(dh1, wB, mxu_dtype)

    # Step 0 input is x[:, 0, :]; later steps use the folded feedback (no per-step head,
    # no cross-lane reduction, no (B,1)->(B,4H) broadcast inside the serial chain).
    gates0_first = x_all[0] * d_wih0[...] + d_b0[...] + mA[:, 0:H4]

    h1_steps = []
    for t in range(T):
        gates0 = gates0_first if t == 0 else mA[:, 0:H4] + mB[:, 0:H4] + b0fb_b
        dh0, dc0 = _cell(gates0, dc0, H, approx)
        mA = _mm(dh0, wA, mxu_dtype)
        gates1 = mA[:, H4:2 * H4] + mB[:, H4:2 * H4] + d_b1_b
        dh1, dc1 = _cell(gates1, dc1, H, approx)
        mB = _mm(dh1, wB, mxu_dtype)
        h1_steps.append(dh1)

    # y_t is recomputed in bulk (mathematically identical to the folded feedback).
    y_ref[...] = _bulk_head(h1_steps, out_w[...], out_b[...], B, H)


# ------------------------------------------------------------------------------------------
# Parameter prep (plain JAX, outside the kernel): gate pre-scaling + weight fusion
# ------------------------------------------------------------------------------------------
def _scale_g_cols(w, H):
    """Double the g ("cell") gate columns [2H:3H] of a (..., 4H) gate-stacked tensor."""
    return w.at[..., 2 * H:3 * H].multiply(2.0)


def _prep_params(params, H, mxu_dtype):
    (e_wih0, e_whh0, e_b0, e_wih1, e_whh1, e_b1,
     d_wih0, d_whh0, d_b0, d_wih1, d_whh1, d_b1, out_w, out_b) = params
    s = lambda w: _scale_g_cols(w, H)

    e_wih0s, e_b0s, e_b1s = s(e_wih0), s(e_b0), s(e_b1)
    d_wih0s, d_b0s, d_b1s = s(d_wih0), s(d_b0), s(d_b1)

    def blockdiag(whh0, wih1, whh1):
        z = jnp.zeros((H, 4 * H), jnp.float32)
        top = jnp.concatenate([s(whh0), s(wih1), z], axis=1)            # rows for h0
        bot = jnp.concatenate([z, z, s(whh1)], axis=1)                  # rows for h1
        return jnp.concatenate([top, bot], axis=0).astype(mxu_dtype)    # (2H, 12H)

    e_wbig = blockdiag(e_whh0, e_wih1, e_whh1)
    d_wbig = blockdiag(d_whh0, d_wih1, d_whh1)                          # teacher-forced path

    # Eval-mode fold: dec_in_{t+1} * d_wih0 = dh1_t @ (out_w.T @ d_wih0) + out_b * d_wih0
    w_feed = out_w.T @ s(d_wih0)                                        # (H, 4H), g-scaled
    d_wA = jnp.concatenate([s(d_whh0), s(d_wih1)], axis=1).astype(mxu_dtype)   # (H, 8H)
    d_wB = jnp.concatenate([w_feed, s(d_whh1)], axis=1).astype(mxu_dtype)      # (H, 8H)
    d_b0fb = out_b * s(d_wih0) + d_b0s                                  # (1, 4H)

    common = (e_wih0s, e_b0s, e_wbig, e_b1s)
    train_extra = (d_wih0s, d_b0s, d_wbig, d_b1s, out_w, out_b)
    eval_extra = (d_wih0s, d_b0s, d_b0fb, d_wA, d_wB, d_b1s, out_w, out_b)
    return common, train_extra, eval_extra


# ------------------------------------------------------------------------------------------
# Wrapper
# ------------------------------------------------------------------------------------------
def lstm_autoencoder_forward(x, params, hidden_size, training=False, fast_math=False):
    """x: (B, T, 1) float32 -> (B, T, 1) float32 (matches the PyTorch forward).

    fast_math=True feeds the MXU bf16 operands (f32 accumulate) and uses the approximate EUP
    reciprocal in the sigmoids; keep it off when bit-level agreement with f32 matters."""
    B, T, _ = x.shape
    H = hidden_size
    mxu_dtype = jnp.bfloat16 if fast_math else jnp.float32
    common, train_extra, eval_extra = _prep_params(params, H, mxu_dtype)
    x_tb = jnp.transpose(x, (1, 0, 2))                    # time-major (T, B, 1)
    if training:
        args = (x_tb,) + common + train_extra
        kernel = functools.partial(_lstm_ae_train_kernel, H=H, approx=fast_math,
                                   mxu_dtype=mxu_dtype)
    else:
        args = (x_tb,) + common + eval_extra
        kernel = functools.partial(_lstm_ae_eval_kernel, H=H, approx=fast_math,
                                   mxu_dtype=mxu_dtype)
    # Single grid point: weights + (T,B,4H) pregates are a few tens of KiB, far below VMEM on
    # v5e/v6e/v7x.  For non-toy B, add a batch grid axis with dimension_semantics=("parallel",).
    y_tb = pl.pallas_call(
        kernel,
        out_shape=jax.ShapeDtypeStruct((T, B), jnp.float32),   # lane-dense 2-D slab
        in_specs=[pl.BlockSpec(memory_space=pltpu.MemorySpace.VMEM)] * len(args),
        out_specs=pl.BlockSpec(memory_space=pltpu.MemorySpace.VMEM),
    )(*args)
    return jnp.transpose(y_tb, (1, 0))[:, :, None]        # back to (B, T, 1)


# ------------------------------------------------------------------------------------------
# Deterministic parameter init (PyTorch LSTM-style uniform(-1/sqrt(H), 1/sqrt(H)))
#   weight_ih stored transposed: (in, 4H); weight_hh transposed: (H, 4H); b = b_ih + b_hh.
# ------------------------------------------------------------------------------------------
def init_params(key, hidden_size):
    H = hidden_size
    bound = 1.0 / float(H) ** 0.5
    ks = jax.random.split(key, 14)

    def u(k, shape):
        return jax.random.uniform(k, shape, jnp.float32, -bound, bound)

    return [
        # encoder layer 0 / layer 1
        u(ks[0], (1, 4 * H)), u(ks[1], (H, 4 * H)), u(ks[2], (1, 4 * H)),
        u(ks[3], (H, 4 * H)), u(ks[4], (H, 4 * H)), u(ks[5], (1, 4 * H)),
        # decoder layer 0 / layer 1
        u(ks[6], (1, 4 * H)), u(ks[7], (H, 4 * H)), u(ks[8], (1, 4 * H)),
        u(ks[9], (H, 4 * H)), u(ks[10], (H, 4 * H)), u(ks[11], (1, 4 * H)),
        # output linear (H -> 1)
        u(ks[12], (1, H)), u(ks[13], (1, 1)),
    ]


# ------------------------------------------------------------------------------------------
# Pure-JAX reference (unfused params, no Pallas) for correctness checking
# ------------------------------------------------------------------------------------------
def reference_forward(x, params, H, training=False):
    (e_wih0, e_whh0, e_b0, e_wih1, e_whh1, e_b1,
     d_wih0, d_whh0, d_b0, d_wih1, d_whh1, d_b1, out_w, out_b) = params
    B, T, _ = x.shape

    def cell(xg, h, c, whh, b):
        gates = xg + h @ whh + b
        i = jax.nn.sigmoid(gates[:, 0:H]); f = jax.nn.sigmoid(gates[:, H:2 * H])
        g = jnp.tanh(gates[:, 2 * H:3 * H]); o = jax.nn.sigmoid(gates[:, 3 * H:4 * H])
        c = f * c + i * g
        return o * jnp.tanh(c), c

    h0 = c0 = h1 = c1 = jnp.zeros((B, H), jnp.float32)
    for t in range(T):
        xt = x[:, t, :]
        h0, c0 = cell(xt * e_wih0, h0, c0, e_whh0, e_b0)
        h1, c1 = cell(h0 @ e_wih1, h1, c1, e_whh1, e_b1)

    dec_in = x[:, 0, :]
    outs = []
    for t in range(T):
        inp = x[:, t, :] if training else dec_in
        h0, c0 = cell(inp * d_wih0, h0, c0, d_whh0, d_b0)
        h1, c1 = cell(h0 @ d_wih1, h1, c1, d_whh1, d_b1)
        out = jnp.sum(h1 * out_w, axis=1, keepdims=True) + out_b
        outs.append(out)
        dec_in = out
    return jnp.stack(outs, axis=1)                        # (B, T, 1)


if __name__ == "__main__":
    B, T, H = 8, 8, 32                                    # hidden_size=32, num_layers=2, in=1
    key = jax.random.PRNGKey(0)
    k_x, k_p = jax.random.split(key)
    x = jax.random.normal(k_x, (B, T, 1), jnp.float32)
    params = init_params(k_p, H)

    # ---- precise mode (f32 MXU, exact reciprocal): checked against the pure-JAX reference
    y_eval = jax.block_until_ready(lstm_autoencoder_forward(x, params, H, training=False))
    y_eval_ref = reference_forward(x, params, H, training=False)
    assert y_eval.shape == (B, T, 1)
    assert jnp.allclose(y_eval, y_eval_ref, atol=1e-4, rtol=1e-4), "eval-mode mismatch"

    y_tr = jax.block_until_ready(lstm_autoencoder_forward(x, params, H, training=True))
    y_tr_ref = reference_forward(x, params, H, training=True)
    assert jnp.allclose(y_tr, y_tr_ref, atol=1e-4, rtol=1e-4), "training-mode mismatch"

    # ---- fast-math mode (bf16 MXU operands + approx EUP reciprocal): loose sanity band
    y_fast = jax.block_until_ready(
        lstm_autoencoder_forward(x, params, H, training=False, fast_math=True))
    assert jnp.all(jnp.isfinite(y_fast))
    assert float(jnp.max(jnp.abs(y_fast - y_eval_ref))) < 0.1, "fast-math sanity fail"

    print("KERNEL_OK")
</pallas_src>

<mosaic_0001>
module attributes {stable_mosaic.version = 11 : i64} {
  func.func @_lstm_ae_eval_kernel(%arg0: memref<8x8x1xf32, #tpu.memory_space<vmem>>, %arg1: memref<1x128xf32, #tpu.memory_space<vmem>>, %arg2: memref<1x128xf32, #tpu.memory_space<vmem>>, %arg3: memref<64x384xf32, #tpu.memory_space<vmem>>, %arg4: memref<1x128xf32, #tpu.memory_space<vmem>>, %arg5: memref<1x128xf32, #tpu.memory_space<vmem>>, %arg6: memref<1x128xf32, #tpu.memory_space<vmem>>, %arg7: memref<1x128xf32, #tpu.memory_space<vmem>>, %arg8: memref<32x256xf32, #tpu.memory_space<vmem>>, %arg9: memref<32x256xf32, #tpu.memory_space<vmem>>, %arg10: memref<1x128xf32, #tpu.memory_space<vmem>>, %arg11: memref<1x32xf32, #tpu.memory_space<vmem>>, %arg12: memref<1x1xf32, #tpu.memory_space<vmem>>, %arg13: memref<8x8xf32, #tpu.memory_space<vmem>>) attributes {dimension_semantics = [], scalar_prefetch = 0 : i64, scratch_operands = 0 : i64, tpu.core_type = #tpu.core_type<tc>} {
    %c0 = arith.constant 0 : index
    %c0_0 = arith.constant 0 : index
    %c0_1 = arith.constant 0 : index
    %0 = vector.load %arg0[%c0, %c0_0, %c0_1] : memref<8x8x1xf32, #tpu.memory_space<vmem>>, vector<8x8x1xf32>
    %c0_2 = arith.constant 0 : index
    %c0_3 = arith.constant 0 : index
    %1 = vector.load %arg1[%c0_2, %c0_3] : memref<1x128xf32, #tpu.memory_space<vmem>>, vector<1x128xf32>
    %2 = vector.shape_cast %1 : vector<1x128xf32> to vector<1x1x128xf32>
    %3 = vector.broadcast %0 : vector<8x8x1xf32> to vector<8x8x128xf32>
    %4 = vector.broadcast %2 : vector<1x1x128xf32> to vector<8x8x128xf32>
    %5 = arith.mulf %3, %4 : vector<8x8x128xf32>
    %c0_4 = arith.constant 0 : index
    %c0_5 = arith.constant 0 : index
    %6 = vector.load %arg2[%c0_4, %c0_5] : memref<1x128xf32, #tpu.memory_space<vmem>>, vector<1x128xf32>
    %7 = vector.shape_cast %6 : vector<1x128xf32> to vector<1x1x128xf32>
    %8 = vector.broadcast %7 : vector<1x1x128xf32> to vector<8x8x128xf32>
    %9 = arith.addf %5, %8 : vector<8x8x128xf32>
    %c0_6 = arith.constant 0 : index
    %c0_7 = arith.constant 0 : index
    %10 = vector.load %arg4[%c0_6, %c0_7] : memref<1x128xf32, #tpu.memory_space<vmem>>, vector<1x128xf32>
    %11 = vector.shape_cast %10 : vector<1x128xf32> to vector<1x128xf32>
    %12 = vector.broadcast %11 : vector<1x128xf32> to vector<8x128xf32>
    %cst = arith.constant 0.000000e+00 : f32
    %13 = vector.broadcast %cst : f32 to vector<8x32xf32>
    %c0_8 = arith.constant 0 : index
    %c0_9 = arith.constant 0 : index
    %14 = vector.load %arg3[%c0_8, %c0_9] : memref<64x384xf32, #tpu.memory_space<vmem>>, vector<64x384xf32>
    %15 = tpu.concatenate %13, %13 in 1 : vector<8x32xf32>, vector<8x32xf32> -> vector<8x64xf32>
    %cst_10 = arith.constant dense<0.000000e+00> : vector<8x384xf32>
    %16 = tpu.matmul %15, %14, %cst_10 {dimension_numbers = #tpu.dot_dimension_numbers<[1], [0], [0], [1], [0, 0, 1, 1], [], []>} : vector<8x64xf32>, vector<64x384xf32>, vector<8x384xf32> -> vector<8x384xf32>
    %17 = vector.extract_strided_slice %9 {offsets = [0, 0, 0], sizes = [1, 8, 128], strides = [1, 1, 1]} : vector<8x8x128xf32> to vector<1x8x128xf32>
    %18 = vector.shape_cast %17 : vector<1x8x128xf32> to vector<8x128xf32>
    %19 = vector.extract_strided_slice %16 {offsets = [0, 0], sizes = [8, 128], strides = [1, 1]} : vector<8x384xf32> to vector<8x128xf32>
    %20 = arith.addf %18, %19 : vector<8x128xf32>
    %cst_11 = arith.constant 0.000000e+00 : f32
    %21 = vector.broadcast %cst_11 : f32 to vector<8x128xf32>
    %22 = arith.subf %21, %20 : vector<8x128xf32>
    %23 = math.exp %22 : vector<8x128xf32>
    %cst_12 = arith.constant 1.000000e+00 : f32
    %24 = vector.broadcast %cst_12 : f32 to vector<8x128xf32>
    %25 = arith.addf %24, %23 : vector<8x128xf32>
    %cst_13 = arith.constant 1.000000e+00 : f32
    %26 = vector.broadcast %cst_13 : f32 to vector<8x128xf32>
    %27 = arith.divf %26, %25 : vector<8x128xf32>
    %28 = vector.extract_strided_slice %27 {offsets = [0, 0], sizes = [8, 32], strides = [1, 1]} : vector<8x128xf32> to vector<8x32xf32>
    %29 = vector.extract_strided_slice %27 {offsets = [0, 32], sizes = [8, 32], strides = [1, 1]} : vector<8x128xf32> to vector<8x32xf32>
    %30 = vector.extract_strided_slice %27 {offsets = [0, 96], sizes = [8, 32], strides = [1, 1]} : vector<8x128xf32> to vector<8x32xf32>
    %31 = vector.extract_strided_slice %27 {offsets = [0, 64], sizes = [8, 32], strides = [1, 1]} : vector<8x128xf32> to vector<8x32xf32>
    %cst_14 = arith.constant 2.000000e+00 : f32
    %32 = vector.broadcast %cst_14 : f32 to vector<8x32xf32>
    %33 = arith.mulf %32, %31 : vector<8x32xf32>
    %cst_15 = arith.constant 1.000000e+00 : f32
    %34 = vector.broadcast %cst_15 : f32 to vector<8x32xf32>
    %35 = arith.subf %33, %34 : vector<8x32xf32>
    %36 = arith.mulf %29, %13 : vector<8x32xf32>
    %37 = arith.mulf %28, %35 : vector<8x32xf32>
    %38 = arith.addf %36, %37 : vector<8x32xf32>
    %39 = math.tanh %38 : vector<8x32xf32>
    %40 = arith.mulf %30, %39 : vector<8x32xf32>
    %41 = tpu.concatenate %40, %13 in 1 : vector<8x32xf32>, vector<8x32xf32> -> vector<8x64xf32>
    %cst_16 = arith.constant dense<0.000000e+00> : vector<8x384xf32>
    %42 = tpu.matmul %41, %14, %cst_16 {dimension_numbers = #tpu.dot_dimension_numbers<[1], [0], [0], [1], [0, 0, 1, 1], [], []>} : vector<8x64xf32>, vector<64x384xf32>, vector<8x384xf32> -> vector<8x384xf32>
    %43 = vector.extract_strided_slice %42 {offsets = [0, 128], sizes = [8, 128], strides = [1, 1]} : vector<8x384xf32> to vector<8x128xf32>
    %44 = vector.extract_strided_slice %42 {offsets = [0, 256], sizes = [8, 128], strides = [1, 1]} : vector<8x384xf32> to vector<8x128xf32>
    %45 = arith.addf %43, %44 : vector<8x128xf32>
    %46 = arith.addf %45, %12 : vector<8x128xf32>
    %cst_17 = arith.constant 0.000000e+00 : f32
    %47 = vector.broadcast %cst_17 : f32 to vector<8x128xf32>
    %48 = arith.subf %47, %46 : vector<8x128xf32>
    %49 = math.exp %48 : vector<8x128xf32>
    %cst_18 = arith.constant 1.000000e+00 : f32
    %50 = vector.broadcast %cst_18 : f32 to vector<8x128xf32>
    %51 = arith.addf %50, %49 : vector<8x128xf32>
    %cst_19 = arith.constant 1.000000e+00 : f32
    %52 = vector.broadcast %cst_19 : f32 to vector<8x128xf32>
    %53 = arith.divf %52, %51 : vector<8x128xf32>
    %54 = vector.extract_strided_slice %53 {offsets = [0, 0], sizes = [8, 32], strides = [1, 1]} : vector<8x128xf32> to vector<8x32xf32>
    %55 = vector.extract_strided_slice %53 {offsets = [0, 32], sizes = [8, 32], strides = [1, 1]} : vector<8x128xf32> to vector<8x32xf32>
    %56 = vector.extract_strided_slice %53 {offsets = [0, 96], sizes = [8, 32], strides = [1, 1]} : vector<8x128xf32> to vector<8x32xf32>
    %57 = vector.extract_strided_slice %53 {offsets = [0, 64], sizes = [8, 32], strides = [1, 1]} : vector<8x128xf32> to vector<8x32xf32>
    %cst_20 = arith.constant 2.000000e+00 : f32
    %58 = vector.broadcast %cst_20 : f32 to vector<8x32xf32>
    %59 = arith.mulf %58, %57 : vector<8x32xf32>
    %cst_21 = arith.constant 1.000000e+00 : f32
    %60 = vector.broadcast %cst_21 : f32 to vector<8x32xf32>
    %61 = arith.subf %59, %60 : vector<8x32xf32>
    %62 = arith.mulf %55, %13 : vector<8x32xf32>
    %63 = arith.mulf %54, %61 : vector<8x32xf32>
    %64 = arith.addf %62, %63 : vector<8x32xf32>
    %65 = math.tanh %64 : vector<8x32xf32>
    %66 = arith.mulf %56, %65 : vector<8x32xf32>
    %67 = vector.extract_strided_slice %9 {offsets = [1, 0, 0], sizes = [1, 8, 128], strides = [1, 1, 1]} : vector<8x8x128xf32> to vector<1x8x128xf32>
    %68 = vector.shape_cast %67 : vector<1x8x128xf32> to vector<8x128xf32>
    %69 = vector.extract_strided_slice %42 {offsets = [0, 0], sizes = [8, 128], strides = [1, 1]} : vector<8x384xf32> to vector<8x128xf32>
    %70 = arith.addf %68, %69 : vector<8x128xf32>
    %cst_22 = arith.constant 0.000000e+00 : f32
    %71 = vector.broadcast %cst_22 : f32 to vector<8x128xf32>
    %72 = arith.subf %71, %70 : vector<8x128xf32>
    %73 = math.exp %72 : vector<8x128xf32>
    %cst_23 = arith.constant 1.000000e+00 : f32
    %74 = vector.broadcast %cst_23 : f32 to vector<8x128xf32>
    %75 = arith.addf %74, %73 : vector<8x128xf32>
    %cst_24 = arith.constant 1.000000e+00 : f32
    %76 = vector.broadcast %cst_24 : f32 to vector<8x128xf32>
    %77 = arith.divf %76, %75 : vector<8x128xf32>
    %78 = vector.extract_strided_slice %77 {offsets = [0, 0], sizes = [8, 32], strides = [1, 1]} : vector<8x128xf32> to vector<8x32xf32>
    %79 = vector.extract_strided_slice %77 {offsets = [0, 32], sizes = [8, 32], strides = [1, 1]} : vector<8x128xf32> to vector<8x32xf32>
    %80 = vector.extract_strided_slice %77 {offsets = [0, 96], sizes = [8, 32], strides = [1, 1]} : vector<8x128xf32> to vector<8x32xf32>
    %81 = vector.extract_strided_slice %77 {offsets = [0, 64], sizes = [8, 32], strides = [1, 1]} : vector<8x128xf32> to vector<8x32xf32>
    %cst_25 = arith.constant 2.000000e+00 : f32
    %82 = vector.broadcast %cst_25 : f32 to vector<8x32xf32>
    %83 = arith.mulf %82, %81 : vector<8x32xf32>
    %cst_26 = arith.constant 1.000000e+00 : f32
    %84 = vector.broadcast %cst_26 : f32 to vector<8x32xf32>
    %85 = arith.subf %83, %84 : vector<8x32xf32>
    %86 = arith.mulf %79, %38 : vector<8x32xf32>
    %87 = arith.mulf %78, %85 : vector<8x32xf32>
    %88 = arith.addf %86, %87 : vector<8x32xf32>
    %89 = math.tanh %88 : vector<8x32xf32>
    %90 = arith.mulf %80, %89 : vector<8x32xf32>
    %91 = tpu.concatenate %90, %66 in 1 : vector<8x32xf32>, vector<8x32xf32> -> vector<8x64xf32>
    %cst_27 = arith.constant dense<0.000000e+00> : vector<8x384xf32>
    %92 = tpu.matmul %91, %14, %cst_27 {dimension_numbers = #tpu.dot_dimension_numbers<[1], [0], [0], [1], [0, 0, 1, 1], [], []>} : vector<8x64xf32>, vector<64x384xf32>, vector<8x384xf32> -> vector<8x384xf32>
    %93 = vector.extract_strided_slice %92 {offsets = [0, 128], sizes = [8, 128], strides = [1, 1]} : vector<8x384xf32> to vector<8x128xf32>
    %94 = vector.extract_strided_slice %92 {offsets = [0, 256], sizes = [8, 128], strides = [1, 1]} : vector<8x384xf32> to vector<8x128xf32>
    %95 = arith.addf %93, %94 : vector<8x128xf32>
    %96 = arith.addf %95, %12 : vector<8x128xf32>
    %cst_28 = arith.constant 0.000000e+00 : f32
    %97 = vector.broadcast %cst_28 : f32 to vector<8x128xf32>
    %98 = arith.subf %97, %96 : vector<8x128xf32>
    %99 = math.exp %98 : vector<8x128xf32>
    %cst_29 = arith.constant 1.000000e+00 : f32
    %100 = vector.broadcast %cst_29 : f32 to vector<8x128xf32>
    %101 = arith.addf %100, %99 : vector<8x128xf32>
    %cst_30 = arith.constant 1.000000e+00 : f32
    %102 = vector.broadcast %cst_30 : f32 to vector<8x128xf32>
    %103 = arith.divf %102, %101 : vector<8x128xf32>
    %104 = vector.extract_strided_slice %103 {offsets = [0, 0], sizes = [8, 32], strides = [1, 1]} : vector<8x128xf32> to vector<8x32xf32>
    %105 = vector.extract_strided_slice %103 {offsets = [0, 32], sizes = [8, 32], strides = [1, 1]} : vector<8x128xf32> to vector<8x32xf32>
    %106 = vector.extract_strided_slice %103 {offsets = [0, 96], sizes = [8, 32], strides = [1, 1]} : vector<8x128xf32> to vector<8x32xf32>
    %107 = vector.extract_strided_slice %103 {offsets = [0, 64], sizes = [8, 32], strides = [1, 1]} : vector<8x128xf32> to vector<8x32xf32>
    %cst_31 = arith.constant 2.000000e+00 : f32
    %108 = vector.broadcast %cst_31 : f32 to vector<8x32xf32>
    %109 = arith.mulf %108, %107 : vector<8x32xf32>
    %cst_32 = arith.constant 1.000000e+00 : f32
    %110 = vector.broadcast %cst_32 : f32 to vector<8x32xf32>
    %111 = arith.subf %109, %110 : vector<8x32xf32>
    %112 = arith.mulf %105, %64 : vector<8x32xf32>
    %113 = arith.mulf %104, %111 : vector<8x32xf32>
    %114 = arith.addf %112, %113 : vector<8x32xf32>
    %115 = math.tanh %114 : vector<8x32xf32>
    %116 = arith.mulf %106, %115 : vector<8x32xf32>
    %117 = vector.extract_strided_slice %9 {offsets = [2, 0, 0], sizes = [1, 8, 128], strides = [1, 1, 1]} : vector<8x8x128xf32> to vector<1x8x128xf32>
    %118 = vector.shape_cast %117 : vector<1x8x128xf32> to vector<8x128xf32>
    %119 = vector.extract_strided_slice %92 {offsets = [0, 0], sizes = [8, 128], strides = [1, 1]} : vector<8x384xf32> to vector<8x128xf32>
    %120 = arith.addf %118, %119 : vector<8x128xf32>
    %cst_33 = arith.constant 0.000000e+00 : f32
    %121 = vector.broadcast %cst_33 : f32 to vector<8x128xf32>
    %122 = arith.subf %121, %120 : vector<8x128xf32>
    %123 = math.exp %122 : vector<8x128xf32>
    %cst_34 = arith.constant 1.000000e+00 : f32
    %124 = vector.broadcast %cst_34 : f32 to vector<8x128xf32>
    %125 = arith.addf %124, %123 : vector<8x128xf32>
    %cst_35 = arith.constant 1.000000e+00 : f32
    %126 = vector.broadcast %cst_35 : f32 to vector<8x128xf32>
    %127 = arith.divf %126, %125 : vector<8x128xf32>
    %128 = vector.extract_strided_slice %127 {offsets = [0, 0], sizes = [8, 32], strides = [1, 1]} : vector<8x128xf32> to vector<8x32xf32>
    %129 = vector.extract_strided_slice %127 {offsets = [0, 32], sizes = [8, 32], strides = [1, 1]} : vector<8x128xf32> to vector<8x32xf32>
    %130 = vector.extract_strided_slice %127 {offsets = [0, 96], sizes = [8, 32], strides = [1, 1]} : vector<8x128xf32> to vector<8x32xf32>
    %131 = vector.extract_strided_slice %127 {offsets = [0, 64], sizes = [8, 32], strides = [1, 1]} : vector<8x128xf32> to vector<8x32xf32>
    %cst_36 = arith.constant 2.000000e+00 : f32
    %132 = vector.broadcast %cst_36 : f32 to vector<8x32xf32>
    %133 = arith.mulf %132, %131 : vector<8x32xf32>
    %cst_37 = arith.constant 1.000000e+00 : f32
    %134 = vector.broadcast %cst_37 : f32 to vector<8x32xf32>
    %135 = arith.subf %133, %134 : vector<8x32xf32>
    %136 = arith.mulf %129, %88 : vector<8x32xf32>
    %137 = arith.mulf %128, %135 : vector<8x32xf32>
    %138 = arith.addf %136, %137 : vector<8x32xf32>
    %139 = math.tanh %138 : vector<8x32xf32>
    %140 = arith.mulf %130, %139 : vector<8x32xf32>
    %141 = tpu.concatenate %140, %116 in 1 : vector<8x32xf32>, vector<8x32xf32> -> vector<8x64xf32>
    %cst_38 = arith.constant dense<0.000000e+00> : vector<8x384xf32>
    %142 = tpu.matmul %141, %14, %cst_38 {dimension_numbers = #tpu.dot_dimension_numbers<[1], [0], [0], [1], [0, 0, 1, 1], [], []>} : vector<8x64xf32>, vector<64x384xf32>, vector<8x384xf32> -> vector<8x384xf32>
    %143 = vector.extract_strided_slice %142 {offsets = [0, 128], sizes = [8, 128], strides = [1, 1]} : vector<8x384xf32> to vector<8x128xf32>
    %144 = vector.extract_strided_slice %142 {offsets = [0, 256], sizes = [8, 128], strides = [1, 1]} : vector<8x384xf32> to vector<8x128xf32>
    %145 = arith.addf %143, %144 : vector<8x128xf32>
    %146 = arith.addf %145, %12 : vector<8x128xf32>
    %cst_39 = arith.constant 0.000000e+00 : f32
    %147 = vector.broadcast %cst_39 : f32 to vector<8x128xf32>
    %148 = arith.subf %147, %146 : vector<8x128xf32>
    %149 = math.exp %148 : vector<8x128xf32>
    %cst_40 = arith.constant 1.000000e+00 : f32
    %150 = vector.broadcast %cst_40 : f32 to vector<8x128xf32>
    %151 = arith.addf %150, %149 : vector<8x128xf32>
    %cst_41 = arith.constant 1.000000e+00 : f32
    %152 = vector.broadcast %cst_41 : f32 to vector<8x128xf32>
    %153 = arith.divf %152, %151 : vector<8x128xf32>
    %154 = vector.extract_strided_slice %153 {offsets = [0, 0], sizes = [8, 32], strides = [1, 1]} : vector<8x128xf32> to vector<8x32xf32>
    %155 = vector.extract_strided_slice %153 {offsets = [0, 32], sizes = [8, 32], strides = [1, 1]} : vector<8x128xf32> to vector<8x32xf32>
    %156 = vector.extract_strided_slice %153 {offsets = [0, 96], sizes = [8, 32], strides = [1, 1]} : vector<8x128xf32> to vector<8x32xf32>
    %157 = vector.extract_strided_slice %153 {offsets = [0, 64], sizes = [8, 32], strides = [1, 1]} : vector<8x128xf32> to vector<8x32xf32>
    %cst_42 = arith.constant 2.000000e+00 : f32
    %158 = vector.broadcast %cst_42 : f32 to vector<8x32xf32>
    %159 = arith.mulf %158, %157 : vector<8x32xf32>
    %cst_43 = arith.constant 1.000000e+00 : f32
    %160 = vector.broadcast %cst_43 : f32 to vector<8x32xf32>
    %161 = arith.subf %159, %160 : vector<8x32xf32>
    %162 = arith.mulf %155, %114 : vector<8x32xf32>
    %163 = arith.mulf %154, %161 : vector<8x32xf32>
    %164 = arith.addf %162, %163 : vector<8x32xf32>
    %165 = math.tanh %164 : vector<8x32xf32>
    %166 = arith.mulf %156, %165 : vector<8x32xf32>
    %167 = vector.extract_strided_slice %9 {offsets = [3, 0, 0], sizes = [1, 8, 128], strides = [1, 1, 1]} : vector<8x8x128xf32> to vector<1x8x128xf32>
    %168 = vector.shape_cast %167 : vector<1x8x128xf32> to vector<8x128xf32>
    %169 = vector.extract_strided_slice %142 {offsets = [0, 0], sizes = [8, 128], strides = [1, 1]} : vector<8x384xf32> to vector<8x128xf32>
    %170 = arith.addf %168, %169 : vector<8x128xf32>
    %cst_44 = arith.constant 0.000000e+00 : f32
    %171 = vector.broadcast %cst_44 : f32 to vector<8x128xf32>
    %172 = arith.subf %171, %170 : vector<8x128xf32>
    %173 = math.exp %172 : vector<8x128xf32>
    %cst_45 = arith.constant 1.000000e+00 : f32
    %174 = vector.broadcast %cst_45 : f32 to vector<8x128xf32>
    %175 = arith.addf %174, %173 : vector<8x128xf32>
    %cst_46 = arith.constant 1.000000e+00 : f32
    %176 = vector.broadcast %cst_46 : f32 to vector<8x128xf32>
    %177 = arith.divf %176, %175 : vector<8x128xf32>
    %178 = vector.extract_strided_slice %177 {offsets = [0, 0], sizes = [8, 32], strides = [1, 1]} : vector<8x128xf32> to vector<8x32xf32>
    %179 = vector.extract_strided_slice %177 {offsets = [0, 32], sizes = [8, 32], strides = [1, 1]} : vector<8x128xf32> to vector<8x32xf32>
    %180 = vector.extract_strided_slice %177 {offsets = [0, 96], sizes = [8, 32], strides = [1, 1]} : vector<8x128xf32> to vector<8x32xf32>
    %181 = vector.extract_strided_slice %177 {offsets = [0, 64], sizes = [8, 32], strides = [1, 1]} : vector<8x128xf32> to vector<8x32xf32>
    %cst_47 = arith.constant 2.000000e+00 : f32
    %182 = vector.broadcast %cst_47 : f32 to vector<8x32xf32>
    %183 = arith.mulf %182, %181 : vector<8x32xf32>
    %cst_48 = arith.constant 1.000000e+00 : f32
    %184 = vector.broadcast %cst_48 : f32 to vector<8x32xf32>
    %185 = arith.subf %183, %184 : vector<8x32xf32>
    %186 = arith.mulf %179, %138 : vector<8x32xf32>
    %187 = arith.mulf %178, %185 : vector<8x32xf32>
    %188 = arith.addf %186, %187 : vector<8x32xf32>
    %189 = math.tanh %188 : vector<8x32xf32>
    %190 = arith.mulf %180, %189 : vector<8x32xf32>
    %191 = tpu.concatenate %190, %166 in 1 : vector<8x32xf32>, vector<8x32xf32> -> vector<8x64xf32>
    %cst_49 = arith.constant dense<0.000000e+00> : vector<8x384xf32>
    %192 = tpu.matmul %191, %14, %cst_49 {dimension_numbers = #tpu.dot_dimension_numbers<[1], [0], [0], [1], [0, 0, 1, 1], [], []>} : vector<8x64xf32>, vector<64x384xf32>, vector<8x384xf32> -> vector<8x384xf32>
    %193 = vector.extract_strided_slice %192 {offsets = [0, 128], sizes = [8, 128], strides = [1, 1]} : vector<8x384xf32> to vector<8x128xf32>
    %194 = vector.extract_strided_slice %192 {offsets = [0, 256], sizes = [8, 128], strides = [1, 1]} : vector<8x384xf32> to vector<8x128xf32>
    %195 = arith.addf %193, %194 : vector<8x128xf32>
    %196 = arith.addf %195, %12 : vector<8x128xf32>
    %cst_50 = arith.constant 0.000000e+00 : f32
    %197 = vector.broadcast %cst_50 : f32 to vector<8x128xf32>
    %198 = arith.subf %197, %196 : vector<8x128xf32>
    %199 = math.exp %198 : vector<8x128xf32>
    %cst_51 = arith.constant 1.000000e+00 : f32
    %200 = vector.broadcast %cst_51 : f32 to vector<8x128xf32>
    %201 = arith.addf %200, %199 : vector<8x128xf32>
    %cst_52 = arith.constant 1.000000e+00 : f32
    %202 = vector.broadcast %cst_52 : f32 to vector<8x128xf32>
    %203 = arith.divf %202, %201 : vector<8x128xf32>
    %204 = vector.extract_strided_slice %203 {offsets = [0, 0], sizes = [8, 32], strides = [1, 1]} : vector<8x128xf32> to vector<8x32xf32>
    %205 = vector.extract_strided_slice %203 {offsets = [0, 32], sizes = [8, 32], strides = [1, 1]} : vector<8x128xf32> to vector<8x32xf32>
    %206 = vector.extract_strided_slice %203 {offsets = [0, 96], sizes = [8, 32], strides = [1, 1]} : vector<8x128xf32> to vector<8x32xf32>
    %207 = vector.extract_strided_slice %203 {offsets = [0, 64], sizes = [8, 32], strides = [1, 1]} : vector<8x128xf32> to vector<8x32xf32>
    %cst_53 = arith.constant 2.000000e+00 : f32
    %208 = vector.broadcast %cst_53 : f32 to vector<8x32xf32>
    %209 = arith.mulf %208, %207 : vector<8x32xf32>
    %cst_54 = arith.constant 1.000000e+00 : f32
    %210 = vector.broadcast %cst_54 : f32 to vector<8x32xf32>
    %211 = arith.subf %209, %210 : vector<8x32xf32>
    %212 = arith.mulf %205, %164 : vector<8x32xf32>
    %213 = arith.mulf %204, %211 : vector<8x32xf32>
    %214 = arith.addf %212, %213 : vector<8x32xf32>
    %215 = math.tanh %214 : vector<8x32xf32>
    %216 = arith.mulf %206, %215 : vector<8x32xf32>
    %217 = vector.extract_strided_slice %9 {offsets = [4, 0, 0], sizes = [1, 8, 128], strides = [1, 1, 1]} : vector<8x8x128xf32> to vector<1x8x128xf32>
    %218 = vector.shape_cast %217 : vector<1x8x128xf32> to vector<8x128xf32>
    %219 = vector.extract_strided_slice %192 {offsets = [0, 0], sizes = [8, 128], strides = [1, 1]} : vector<8x384xf32> to vector<8x128xf32>
    %220 = arith.addf %218, %219 : vector<8x128xf32>
    %cst_55 = arith.constant 0.000000e+00 : f32
    %221 = vector.broadcast %cst_55 : f32 to vector<8x128xf32>
    %222 = arith.subf %221, %220 : vector<8x128xf32>
    %223 = math.exp %222 : vector<8x128xf32>
    %cst_56 = arith.constant 1.000000e+00 : f32
    %224 = vector.broadcast %cst_56 : f32 to vector<8x128xf32>
    %225 = arith.addf %224, %223 : vector<8x128xf32>
    %cst_57 = arith.constant 1.000000e+00 : f32
    %226 = vector.broadcast %cst_57 : f32 to vector<8x128xf32>
    %227 = arith.divf %226, %225 : vector<8x128xf32>
    %228 = vector.extract_strided_slice %227 {offsets = [0, 0], sizes = [8, 32], strides = [1, 1]} : vector<8x128xf32> to vector<8x32xf32>
    %229 = vector.extract_strided_slice %227 {offsets = [0, 32], sizes = [8, 32], strides = [1, 1]} : vector<8x128xf32> to vector<8x32xf32>
    %230 = vector.extract_strided_slice %227 {offsets = [0, 96], sizes = [8, 32], strides = [1, 1]} : vector<8x128xf32> to vector<8x32xf32>
    %231 = vector.extract_strided_slice %227 {offsets = [0, 64], sizes = [8, 32], strides = [1, 1]} : vector<8x128xf32> to vector<8x32xf32>
    %cst_58 = arith.constant 2.000000e+00 : f32
    %232 = vector.broadcast %cst_58 : f32 to vector<8x32xf32>
    %233 = arith.mulf %232, %231 : vector<8x32xf32>
    %cst_59 = arith.constant 1.000000e+00 : f32
    %234 = vector.broadcast %cst_59 : f32 to vector<8x32xf32>
    %235 = arith.subf %233, %234 : vector<8x32xf32>
    %236 = arith.mulf %229, %188 : vector<8x32xf32>
    %237 = arith.mulf %228, %235 : vector<8x32xf32>
    %238 = arith.addf %236, %237 : vector<8x32xf32>
    %239 = math.tanh %238 : vector<8x32xf32>
    %240 = arith.mulf %230, %239 : vector<8x32xf32>
    %241 = tpu.concatenate %240, %216 in 1 : vector<8x32xf32>, vector<8x32xf32> -> vector<8x64xf32>
    %cst_60 = arith.constant dense<0.000000e+00> : vector<8x384xf32>
    %242 = tpu.matmul %241, %14, %cst_60 {dimension_numbers = #tpu.dot_dimension_numbers<[1], [0], [0], [1], [0, 0, 1, 1], [], []>} : vector<8x64xf32>, vector<64x384xf32>, vector<8x384xf32> -> vector<8x384xf32>
    %243 = vector.extract_strided_slice %242 {offsets = [0, 128], sizes = [8, 128], strides = [1, 1]} : vector<8x384xf32> to vector<8x128xf32>
    %244 = vector.extract_strided_slice %242 {offsets = [0, 256], sizes = [8, 128], strides = [1, 1]} : vector<8x384xf32> to vector<8x128xf32>
    %245 = arith.addf %243, %244 : vector<8x128xf32>
    %246 = arith.addf %245, %12 : vector<8x128xf32>
    %cst_61 = arith.constant 0.000000e+00 : f32
    %247 = vector.broadcast %cst_61 : f32 to vector<8x128xf32>
    %248 = arith.subf %247, %246 : vector<8x128xf32>
    %249 = math.exp %248 : vector<8x128xf32>
    %cst_62 = arith.constant 1.000000e+00 : f32
    %250 = vector.broadcast %cst_62 : f32 to vector<8x128xf32>
    %251 = arith.addf %250, %249 : vector<8x128xf32>
    %cst_63 = arith.constant 1.000000e+00 : f32
    %252 = vector.broadcast %cst_63 : f32 to vector<8x128xf32>
    %253 = arith.divf %252, %251 : vector<8x128xf32>
    %254 = vector.extract_strided_slice %253 {offsets = [0, 0], sizes = [8, 32], strides = [1, 1]} : vector<8x128xf32> to vector<8x32xf32>
    %255 = vector.extract_strided_slice %253 {offsets = [0, 32], sizes = [8, 32], strides = [1, 1]} : vector<8x128xf32> to vector<8x32xf32>
    %256 = vector.extract_strided_slice %253 {offsets = [0, 96], sizes = [8, 32], strides = [1, 1]} : vector<8x128xf32> to vector<8x32xf32>
    %257 = vector.extract_strided_slice %253 {offsets = [0, 64], sizes = [8, 32], strides = [1, 1]} : vector<8x128xf32> to vector<8x32xf32>
    %cst_64 = arith.constant 2.000000e+00 : f32
    %258 = vector.broadcast %cst_64 : f32 to vector<8x32xf32>
    %259 = arith.mulf %258, %257 : vector<8x32xf32>
    %cst_65 = arith.constant 1.000000e+00 : f32
    %260 = vector.broadcast %cst_65 : f32 to vector<8x32xf32>
    %261 = arith.subf %259, %260 : vector<8x32xf32>
    %262 = arith.mulf %255, %214 : vector<8x32xf32>
    %263 = arith.mulf %254, %261 : vector<8x32xf32>
    %264 = arith.addf %262, %263 : vector<8x32xf32>
    %265 = math.tanh %264 : vector<8x32xf32>
    %266 = arith.mulf %256, %265 : vector<8x32xf32>
    %267 = vector.extract_strided_slice %9 {offsets = [5, 0, 0], sizes = [1, 8, 128], strides = [1, 1, 1]} : vector<8x8x128xf32> to vector<1x8x128xf32>
    %268 = vector.shape_cast %267 : vector<1x8x128xf32> to vector<8x128xf32>
    %269 = vector.extract_strided_slice %242 {offsets = [0, 0], sizes = [8, 128], strides = [1, 1]} : vector<8x384xf32> to vector<8x128xf32>
    %270 = arith.addf %268, %269 : vector<8x128xf32>
    %cst_66 = arith.constant 0.000000e+00 : f32
    %271 = vector.broadcast %cst_66 : f32 to vector<8x128xf32>
    %272 = arith.subf %271, %270 : vector<8x128xf32>
    %273 = math.exp %272 : vector<8x128xf32>
    %cst_67 = arith.constant 1.000000e+00 : f32
    %274 = vector.broadcast %cst_67 : f32 to vector<8x128xf32>
    %275 = arith.addf %274, %273 : vector<8x128xf32>
    %cst_68 = arith.constant 1.000000e+00 : f32
    %276 = vector.broadcast %cst_68 : f32 to vector<8x128xf32>
    %277 = arith.divf %276, %275 : vector<8x128xf32>
    %278 = vector.extract_strided_slice %277 {offsets = [0, 0], sizes = [8, 32], strides = [1, 1]} : vector<8x128xf32> to vector<8x32xf32>
    %279 = vector.extract_strided_slice %277 {offsets = [0, 32], sizes = [8, 32], strides = [1, 1]} : vector<8x128xf32> to vector<8x32xf32>
    %280 = vector.extract_strided_slice %277 {offsets = [0, 96], sizes = [8, 32], strides = [1, 1]} : vector<8x128xf32> to vector<8x32xf32>
    %281 = vector.extract_strided_slice %277 {offsets = [0, 64], sizes = [8, 32], strides = [1, 1]} : vector<8x128xf32> to vector<8x32xf32>
    %cst_69 = arith.constant 2.000000e+00 : f32
    %282 = vector.broadcast %cst_69 : f32 to vector<8x32xf32>
    %283 = arith.mulf %282, %281 : vector<8x32xf32>
    %cst_70 = arith.constant 1.000000e+00 : f32
    %284 = vector.broadcast %cst_70 : f32 to vector<8x32xf32>
    %285 = arith.subf %283, %284 : vector<8x32xf32>
    %286 = arith.mulf %279, %238 : vector<8x32xf32>
    %287 = arith.mulf %278, %285 : vector<8x32xf32>
    %288 = arith.addf %286, %287 : vector<8x32xf32>
    %289 = math.tanh %288 : vector<8x32xf32>
    %290 = arith.mulf %280, %289 : vector<8x32xf32>
    %291 = tpu.concatenate %290, %266 in 1 : vector<8x32xf32>, vector<8x32xf32> -> vector<8x64xf32>
    %cst_71 = arith.constant dense<0.000000e+00> : vector<8x384xf32>
    %292 = tpu.matmul %291, %14, %cst_71 {dimension_numbers = #tpu.dot_dimension_numbers<[1], [0], [0], [1], [0, 0, 1, 1], [], []>} : vector<8x64xf32>, vector<64x384xf32>, vector<8x384xf32> -> vector<8x384xf32>
    %293 = vector.extract_strided_slice %292 {offsets = [0, 128], sizes = [8, 128], strides = [1, 1]} : vector<8x384xf32> to vector<8x128xf32>
    %294 = vector.extract_strided_slice %292 {offsets = [0, 256], sizes = [8, 128], strides = [1, 1]} : vector<8x384xf32> to vector<8x128xf32>
    %295 = arith.addf %293, %294 : vector<8x128xf32>
    %296 = arith.addf %295, %12 : vector<8x128xf32>
    %cst_72 = arith.constant 0.000000e+00 : f32
    %297 = vector.broadcast %cst_72 : f32 to vector<8x128xf32>
    %298 = arith.subf %297, %296 : vector<8x128xf32>
    %299 = math.exp %298 : vector<8x128xf32>
    %cst_73 = arith.constant 1.000000e+00 : f32
    %300 = vector.broadcast %cst_73 : f32 to vector<8x128xf32>
    %301 = arith.addf %300, %299 : vector<8x128xf32>
    %cst_74 = arith.constant 1.000000e+00 : f32
    %302 = vector.broadcast %cst_74 : f32 to vector<8x128xf32>
    %303 = arith.divf %302, %301 : vector<8x128xf32>
    %304 = vector.extract_strided_slice %303 {offsets = [0, 0], sizes = [8, 32], strides = [1, 1]} : vector<8x128xf32> to vector<8x32xf32>
    %305 = vector.extract_strided_slice %303 {offsets = [0, 32], sizes = [8, 32], strides = [1, 1]} : vector<8x128xf32> to vector<8x32xf32>
    %306 = vector.extract_strided_slice %303 {offsets = [0, 96], sizes = [8, 32], strides = [1, 1]} : vector<8x128xf32> to vector<8x32xf32>
    %307 = vector.extract_strided_slice %303 {offsets = [0, 64], sizes = [8, 32], strides = [1, 1]} : vector<8x128xf32> to vector<8x32xf32>
    %cst_75 = arith.constant 2.000000e+00 : f32
    %308 = vector.broadcast %cst_75 : f32 to vector<8x32xf32>
    %309 = arith.mulf %308, %307 : vector<8x32xf32>
    %cst_76 = arith.constant 1.000000e+00 : f32
    %310 = vector.broadcast %cst_76 : f32 to vector<8x32xf32>
    %311 = arith.subf %309, %310 : vector<8x32xf32>
    %312 = arith.mulf %305, %264 : vector<8x32xf32>
    %313 = arith.mulf %304, %311 : vector<8x32xf32>
    %314 = arith.addf %312, %313 : vector<8x32xf32>
    %315 = math.tanh %314 : vector<8x32xf32>
    %316 = arith.mulf %306, %315 : vector<8x32xf32>
    %317 = vector.extract_strided_slice %9 {offsets = [6, 0, 0], sizes = [1, 8, 128], strides = [1, 1, 1]} : vector<8x8x128xf32> to vector<1x8x128xf32>
    %318 = vector.shape_cast %317 : vector<1x8x128xf32> to vector<8x128xf32>
    %319 = vector.extract_strided_slice %292 {offsets = [0, 0], sizes = [8, 128], strides = [1, 1]} : vector<8x384xf32> to vector<8x128xf32>
    %320 = arith.addf %318, %319 : vector<8x128xf32>
    %cst_77 = arith.constant 0.000000e+00 : f32
    %321 = vector.broadcast %cst_77 : f32 to vector<8x128xf32>
    %322 = arith.subf %321, %320 : vector<8x128xf32>
    %323 = math.exp %322 : vector<8x128xf32>
    %cst_78 = arith.constant 1.000000e+00 : f32
    %324 = vector.broadcast %cst_78 : f32 to vector<8x128xf32>
    %325 = arith.addf %324, %323 : vector<8x128xf32>
    %cst_79 = arith.constant 1.000000e+00 : f32
    %326 = vector.broadcast %cst_79 : f32 to vector<8x128xf32>
    %327 = arith.divf %326, %325 : vector<8x128xf32>
    %328 = vector.extract_strided_slice %327 {offsets = [0, 0], sizes = [8, 32], strides = [1, 1]} : vector<8x128xf32> to vector<8x32xf32>
    %329 = vector.extract_strided_slice %327 {offsets = [0, 32], sizes = [8, 32], strides = [1, 1]} : vector<8x128xf32> to vector<8x32xf32>
    %330 = vector.extract_strided_slice %327 {offsets = [0, 96], sizes = [8, 32], strides = [1, 1]} : vector<8x128xf32> to vector<8x32xf32>
    %331 = vector.extract_strided_slice %327 {offsets = [0, 64], sizes = [8, 32], strides = [1, 1]} : vector<8x128xf32> to vector<8x32xf32>
    %cst_80 = arith.constant 2.000000e+00 : f32
    %332 = vector.broadcast %cst_80 : f32 to vector<8x32xf32>
    %333 = arith.mulf %332, %331 : vector<8x32xf32>
    %cst_81 = arith.constant 1.000000e+00 : f32
    %334 = vector.broadcast %cst_81 : f32 to vector<8x32xf32>
    %335 = arith.subf %333, %334 : vector<8x32xf32>
    %336 = arith.mulf %329, %288 : vector<8x32xf32>
    %337 = arith.mulf %328, %335 : vector<8x32xf32>
    %338 = arith.addf %336, %337 : vector<8x32xf32>
    %339 = math.tanh %338 : vector<8x32xf32>
    %340 = arith.mulf %330, %339 : vector<8x32xf32>
    %341 = tpu.concatenate %340, %316 in 1 : vector<8x32xf32>, vector<8x32xf32> -> vector<8x64xf32>
    %cst_82 = arith.constant dense<0.000000e+00> : vector<8x384xf32>
    %342 = tpu.matmul %341, %14, %cst_82 {dimension_numbers = #tpu.dot_dimension_numbers<[1], [0], [0], [1], [0, 0, 1, 1], [], []>} : vector<8x64xf32>, vector<64x384xf32>, vector<8x384xf32> -> vector<8x384xf32>
    %343 = vector.extract_strided_slice %342 {offsets = [0, 128], sizes = [8, 128], strides = [1, 1]} : vector<8x384xf32> to vector<8x128xf32>
    %344 = vector.extract_strided_slice %342 {offsets = [0, 256], sizes = [8, 128], strides = [1, 1]} : vector<8x384xf32> to vector<8x128xf32>
    %345 = arith.addf %343, %344 : vector<8x128xf32>
    %346 = arith.addf %345, %12 : vector<8x128xf32>
    %cst_83 = arith.constant 0.000000e+00 : f32
    %347 = vector.broadcast %cst_83 : f32 to vector<8x128xf32>
    %348 = arith.subf %347, %346 : vector<8x128xf32>
    %349 = math.exp %348 : vector<8x128xf32>
    %cst_84 = arith.constant 1.000000e+00 : f32
    %350 = vector.broadcast %cst_84 : f32 to vector<8x128xf32>
    %351 = arith.addf %350, %349 : vector<8x128xf32>
    %cst_85 = arith.constant 1.000000e+00 : f32
    %352 = vector.broadcast %cst_85 : f32 to vector<8x128xf32>
    %353 = arith.divf %352, %351 : vector<8x128xf32>
    %354 = vector.extract_strided_slice %353 {offsets = [0, 0], sizes = [8, 32], strides = [1, 1]} : vector<8x128xf32> to vector<8x32xf32>
    %355 = vector.extract_strided_slice %353 {offsets = [0, 32], sizes = [8, 32], strides = [1, 1]} : vector<8x128xf32> to vector<8x32xf32>
    %356 = vector.extract_strided_slice %353 {offsets = [0, 96], sizes = [8, 32], strides = [1, 1]} : vector<8x128xf32> to vector<8x32xf32>
    %357 = vector.extract_strided_slice %353 {offsets = [0, 64], sizes = [8, 32], strides = [1, 1]} : vector<8x128xf32> to vector<8x32xf32>
    %cst_86 = arith.constant 2.000000e+00 : f32
    %358 = vector.broadcast %cst_86 : f32 to vector<8x32xf32>
    %359 = arith.mulf %358, %357 : vector<8x32xf32>
    %cst_87 = arith.constant 1.000000e+00 : f32
    %360 = vector.broadcast %cst_87 : f32 to vector<8x32xf32>
    %361 = arith.subf %359, %360 : vector<8x32xf32>
    %362 = arith.mulf %355, %314 : vector<8x32xf32>
    %363 = arith.mulf %354, %361 : vector<8x32xf32>
    %364 = arith.addf %362, %363 : vector<8x32xf32>
    %365 = math.tanh %364 : vector<8x32xf32>
    %366 = arith.mulf %356, %365 : vector<8x32xf32>
    %367 = vector.extract_strided_slice %9 {offsets = [7, 0, 0], sizes = [1, 8, 128], strides = [1, 1, 1]} : vector<8x8x128xf32> to vector<1x8x128xf32>
    %368 = vector.shape_cast %367 : vector<1x8x128xf32> to vector<8x128xf32>
    %369 = vector.extract_strided_slice %342 {offsets = [0, 0], sizes = [8, 128], strides = [1, 1]} : vector<8x384xf32> to vector<8x128xf32>
    %370 = arith.addf %368, %369 : vector<8x128xf32>
    %cst_88 = arith.constant 0.000000e+00 : f32
    %371 = vector.broadcast %cst_88 : f32 to vector<8x128xf32>
    %372 = arith.subf %371, %370 : vector<8x128xf32>
    %373 = math.exp %372 : vector<8x128xf32>
    %cst_89 = arith.constant 1.000000e+00 : f32
    %374 = vector.broadcast %cst_89 : f32 to vector<8x128xf32>
    %375 = arith.addf %374, %373 : vector<8x128xf32>
    %cst_90 = arith.constant 1.000000e+00 : f32
    %376 = vector.broadcast %cst_90 : f32 to vector<8x128xf32>
    %377 = arith.divf %376, %375 : vector<8x128xf32>
    %378 = vector.extract_strided_slice %377 {offsets = [0, 0], sizes = [8, 32], strides = [1, 1]} : vector<8x128xf32> to vector<8x32xf32>
    %379 = vector.extract_strided_slice %377 {offsets = [0, 32], sizes = [8, 32], strides = [1, 1]} : vector<8x128xf32> to vector<8x32xf32>
    %380 = vector.extract_strided_slice %377 {offsets = [0, 96], sizes = [8, 32], strides = [1, 1]} : vector<8x128xf32> to vector<8x32xf32>
    %381 = vector.extract_strided_slice %377 {offsets = [0, 64], sizes = [8, 32], strides = [1, 1]} : vector<8x128xf32> to vector<8x32xf32>
    %cst_91 = arith.constant 2.000000e+00 : f32
    %382 = vector.broadcast %cst_91 : f32 to vector<8x32xf32>
    %383 = arith.mulf %382, %381 : vector<8x32xf32>
    %cst_92 = arith.constant 1.000000e+00 : f32
    %384 = vector.broadcast %cst_92 : f32 to vector<8x32xf32>
    %385 = arith.subf %383, %384 : vector<8x32xf32>
    %386 = arith.mulf %379, %338 : vector<8x32xf32>
    %387 = arith.mulf %378, %385 : vector<8x32xf32>
    %388 = arith.addf %386, %387 : vector<8x32xf32>
    %389 = math.tanh %388 : vector<8x32xf32>
    %390 = arith.mulf %380, %389 : vector<8x32xf32>
    %391 = tpu.concatenate %390, %366 in 1 : vector<8x32xf32>, vector<8x32xf32> -> vector<8x64xf32>
    %cst_93 = arith.constant dense<0.000000e+00> : vector<8x384xf32>
    %392 = tpu.matmul %391, %14, %cst_93 {dimension_numbers = #tpu.dot_dimension_numbers<[1], [0], [0], [1], [0, 0, 1, 1], [], []>} : vector<8x64xf32>, vector<64x384xf32>, vector<8x384xf32> -> vector<8x384xf32>
    %393 = vector.extract_strided_slice %392 {offsets = [0, 128], sizes = [8, 128], strides = [1, 1]} : vector<8x384xf32> to vector<8x128xf32>
    %394 = vector.extract_strided_slice %392 {offsets = [0, 256], sizes = [8, 128], strides = [1, 1]} : vector<8x384xf32> to vector<8x128xf32>
    %395 = arith.addf %393, %394 : vector<8x128xf32>
    %396 = arith.addf %395, %12 : vector<8x128xf32>
    %cst_94 = arith.constant 0.000000e+00 : f32
    %397 = vector.broadcast %cst_94 : f32 to vector<8x128xf32>
    %398 = arith.subf %397, %396 : vector<8x128xf32>
    %399 = math.exp %398 : vector<8x128xf32>
    %cst_95 = arith.constant 1.000000e+00 : f32
    %400 = vector.broadcast %cst_95 : f32 to vector<8x128xf32>
    %401 = arith.addf %400, %399 : vector<8x128xf32>
    %cst_96 = arith.constant 1.000000e+00 : f32
    %402 = vector.broadcast %cst_96 : f32 to vector<8x128xf32>
    %403 = arith.divf %402, %401 : vector<8x128xf32>
    %404 = vector.extract_strided_slice %403 {offsets = [0, 0], sizes = [8, 32], strides = [1, 1]} : vector<8x128xf32> to vector<8x32xf32>
    %405 = vector.extract_strided_slice %403 {offsets = [0, 32], sizes = [8, 32], strides = [1, 1]} : vector<8x128xf32> to vector<8x32xf32>
    %406 = vector.extract_strided_slice %403 {offsets = [0, 96], sizes = [8, 32], strides = [1, 1]} : vector<8x128xf32> to vector<8x32xf32>
    %407 = vector.extract_strided_slice %403 {offsets = [0, 64], sizes = [8, 32], strides = [1, 1]} : vector<8x128xf32> to vector<8x32xf32>
    %cst_97 = arith.constant 2.000000e+00 : f32
    %408 = vector.broadcast %cst_97 : f32 to vector<8x32xf32>
    %409 = arith.mulf %408, %407 : vector<8x32xf32>
    %cst_98 = arith.constant 1.000000e+00 : f32
    %410 = vector.broadcast %cst_98 : f32 to vector<8x32xf32>
    %411 = arith.subf %409, %410 : vector<8x32xf32>
    %412 = arith.mulf %405, %364 : vector<8x32xf32>
    %413 = arith.mulf %404, %411 : vector<8x32xf32>
    %414 = arith.addf %412, %413 : vector<8x32xf32>
    %415 = math.tanh %414 : vector<8x32xf32>
    %416 = arith.mulf %406, %415 : vector<8x32xf32>
    %c0_99 = arith.constant 0 : index
    %c0_100 = arith.constant 0 : index
    %417 = vector.load %arg8[%c0_99, %c0_100] : memref<32x256xf32, #tpu.memory_space<vmem>>, vector<32x256xf32>
    %c0_101 = arith.constant 0 : index
    %c0_102 = arith.constant 0 : index
    %418 = vector.load %arg9[%c0_101, %c0_102] : memref<32x256xf32, #tpu.memory_space<vmem>>, vector<32x256xf32>
    %c0_103 = arith.constant 0 : index
    %c0_104 = arith.constant 0 : index
    %419 = vector.load %arg10[%c0_103, %c0_104] : memref<1x128xf32, #tpu.memory_space<vmem>>, vector<1x128xf32>
    %420 = vector.shape_cast %419 : vector<1x128xf32> to vector<1x128xf32>
    %421 = vector.broadcast %420 : vector<1x128xf32> to vector<8x128xf32>
    %c0_105 = arith.constant 0 : index
    %c0_106 = arith.constant 0 : index
    %422 = vector.load %arg7[%c0_105, %c0_106] : memref<1x128xf32, #tpu.memory_space<vmem>>, vector<1x128xf32>
    %423 = vector.shape_cast %422 : vector<1x128xf32> to vector<1x128xf32>
    %424 = vector.broadcast %423 : vector<1x128xf32> to vector<8x128xf32>
    %cst_107 = arith.constant dense<0.000000e+00> : vector<8x256xf32>
    %425 = tpu.matmul %390, %417, %cst_107 {dimension_numbers = #tpu.dot_dimension_numbers<[1], [0], [0], [1], [0, 0, 1, 1], [], []>} : vector<8x32xf32>, vector<32x256xf32>, vector<8x256xf32> -> vector<8x256xf32>
    %cst_108 = arith.constant dense<0.000000e+00> : vector<8x256xf32>
    %426 = tpu.matmul %416, %418, %cst_108 {dimension_numbers = #tpu.dot_dimension_numbers<[1], [0], [0], [1], [0, 0, 1, 1], [], []>} : vector<8x32xf32>, vector<32x256xf32>, vector<8x256xf32> -> vector<8x256xf32>
    %427 = vector.extract_strided_slice %0 {offsets = [0, 0, 0], sizes = [1, 8, 1], strides = [1, 1, 1]} : vector<8x8x1xf32> to vector<1x8x1xf32>
    %428 = vector.shape_cast %427 : vector<1x8x1xf32> to vector<8x1xf32>
    %c0_109 = arith.constant 0 : index
    %c0_110 = arith.constant 0 : index
    %429 = vector.load %arg5[%c0_109, %c0_110] : memref<1x128xf32, #tpu.memory_space<vmem>>, vector<1x128xf32>
    %430 = vector.broadcast %428 : vector<8x1xf32> to vector<8x128xf32>
    %431 = vector.broadcast %429 : vector<1x128xf32> to vector<8x128xf32>
    %432 = arith.mulf %430, %431 : vector<8x128xf32>
    %c0_111 = arith.constant 0 : index
    %c0_112 = arith.constant 0 : index
    %433 = vector.load %arg6[%c0_111, %c0_112] : memref<1x128xf32, #tpu.memory_space<vmem>>, vector<1x128xf32>
    %434 = vector.broadcast %433 : vector<1x128xf32> to vector<8x128xf32>
    %435 = arith.addf %432, %434 : vector<8x128xf32>
    %436 = vector.extract_strided_slice %425 {offsets = [0, 0], sizes = [8, 128], strides = [1, 1]} : vector<8x256xf32> to vector<8x128xf32>
    %437 = arith.addf %435, %436 : vector<8x128xf32>
    %cst_113 = arith.constant 0.000000e+00 : f32
    %438 = vector.broadcast %cst_113 : f32 to vector<8x128xf32>
    %439 = arith.subf %438, %437 : vector<8x128xf32>
    %440 = math.exp %439 : vector<8x128xf32>
    %cst_114 = arith.constant 1.000000e+00 : f32
    %441 = vector.broadcast %cst_114 : f32 to vector<8x128xf32>
    %442 = arith.addf %441, %440 : vector<8x128xf32>
    %cst_115 = arith.constant 1.000000e+00 : f32
    %443 = vector.broadcast %cst_115 : f32 to vector<8x128xf32>
    %444 = arith.divf %443, %442 : vector<8x128xf32>
    %445 = vector.extract_strided_slice %444 {offsets = [0, 0], sizes = [8, 32], strides = [1, 1]} : vector<8x128xf32> to vector<8x32xf32>
    %446 = vector.extract_strided_slice %444 {offsets = [0, 32], sizes = [8, 32], strides = [1, 1]} : vector<8x128xf32> to vector<8x32xf32>
    %447 = vector.extract_strided_slice %444 {offsets = [0, 96], sizes = [8, 32], strides = [1, 1]} : vector<8x128xf32> to vector<8x32xf32>
    %448 = vector.extract_strided_slice %444 {offsets = [0, 64], sizes = [8, 32], strides = [1, 1]} : vector<8x128xf32> to vector<8x32xf32>
    %cst_116 = arith.constant 2.000000e+00 : f32
    %449 = vector.broadcast %cst_116 : f32 to vector<8x32xf32>
    %450 = arith.mulf %449, %448 : vector<8x32xf32>
    %cst_117 = arith.constant 1.000000e+00 : f32
    %451 = vector.broadcast %cst_117 : f32 to vector<8x32xf32>
    %452 = arith.subf %450, %451 : vector<8x32xf32>
    %453 = arith.mulf %446, %388 : vector<8x32xf32>
    %454 = arith.mulf %445, %452 : vector<8x32xf32>
    %455 = arith.addf %453, %454 : vector<8x32xf32>
    %456 = math.tanh %455 : vector<8x32xf32>
    %457 = arith.mulf %447, %456 : vector<8x32xf32>
    %cst_118 = arith.constant dense<0.000000e+00> : vector<8x256xf32>
    %458 = tpu.matmul %457, %417, %cst_118 {dimension_numbers = #tpu.dot_dimension_numbers<[1], [0], [0], [1], [0, 0, 1, 1], [], []>} : vector<8x32xf32>, vector<32x256xf32>, vector<8x256xf32> -> vector<8x256xf32>
    %459 = vector.extract_strided_slice %458 {offsets = [0, 128], sizes = [8, 128], strides = [1, 1]} : vector<8x256xf32> to vector<8x128xf32>
    %460 = vector.extract_strided_slice %426 {offsets = [0, 128], sizes = [8, 128], strides = [1, 1]} : vector<8x256xf32> to vector<8x128xf32>
    %461 = arith.addf %459, %460 : vector<8x128xf32>
    %462 = arith.addf %461, %421 : vector<8x128xf32>
    %cst_119 = arith.constant 0.000000e+00 : f32
    %463 = vector.broadcast %cst_119 : f32 to vector<8x128xf32>
    %464 = arith.subf %463, %462 : vector<8x128xf32>
    %465 = math.exp %464 : vector<8x128xf32>
    %cst_120 = arith.constant 1.000000e+00 : f32
    %466 = vector.broadcast %cst_120 : f32 to vector<8x128xf32>
    %467 = arith.addf %466, %465 : vector<8x128xf32>
    %cst_121 = arith.constant 1.000000e+00 : f32
    %468 = vector.broadcast %cst_121 : f32 to vector<8x128xf32>
    %469 = arith.divf %468, %467 : vector<8x128xf32>
    %470 = vector.extract_strided_slice %469 {offsets = [0, 0], sizes = [8, 32], strides = [1, 1]} : vector<8x128xf32> to vector<8x32xf32>
    %471 = vector.extract_strided_slice %469 {offsets = [0, 32], sizes = [8, 32], strides = [1, 1]} : vector<8x128xf32> to vector<8x32xf32>
    %472 = vector.extract_strided_slice %469 {offsets = [0, 96], sizes = [8, 32], strides = [1, 1]} : vector<8x128xf32> to vector<8x32xf32>
    %473 = vector.extract_strided_slice %469 {offsets = [0, 64], sizes = [8, 32], strides = [1, 1]} : vector<8x128xf32> to vector<8x32xf32>
    %cst_122 = arith.constant 2.000000e+00 : f32
    %474 = vector.broadcast %cst_122 : f32 to vector<8x32xf32>
    %475 = arith.mulf %474, %473 : vector<8x32xf32>
    %cst_123 = arith.constant 1.000000e+00 : f32
    %476 = vector.broadcast %cst_123 : f32 to vector<8x32xf32>
    %477 = arith.subf %475, %476 : vector<8x32xf32>
    %478 = arith.mulf %471, %414 : vector<8x32xf32>
    %479 = arith.mulf %470, %477 : vector<8x32xf32>
    %480 = arith.addf %478, %479 : vector<8x32xf32>
    %481 = math.tanh %480 : vector<8x32xf32>
    %482 = arith.mulf %472, %481 : vector<8x32xf32>
    %cst_124 = arith.constant dense<0.000000e+00> : vector<8x256xf32>
    %483 = tpu.matmul %482, %418, %cst_124 {dimension_numbers = #tpu.dot_dimension_numbers<[1], [0], [0], [1], [0, 0, 1, 1], [], []>} : vector<8x32xf32>, vector<32x256xf32>, vector<8x256xf32> -> vector<8x256xf32>
    %484 = vector.extract_strided_slice %458 {offsets = [0, 0], sizes = [8, 128], strides = [1, 1]} : vector<8x256xf32> to vector<8x128xf32>
    %485 = vector.extract_strided_slice %483 {offsets = [0, 0], sizes = [8, 128], strides = [1, 1]} : vector<8x256xf32> to vector<8x128xf32>
    %486 = arith.addf %484, %485 : vector<8x128xf32>
    %487 = arith.addf %486, %424 : vector<8x128xf32>
    %cst_125 = arith.constant 0.000000e+00 : f32
    %488 = vector.broadcast %cst_125 : f32 to vector<8x128xf32>
    %489 = arith.subf %488, %487 : vector<8x128xf32>
    %490 = math.exp %489 : vector<8x128xf32>
    %cst_126 = arith.constant 1.000000e+00 : f32
    %491 = vector.broadcast %cst_126 : f32 to vector<8x128xf32>
    %492 = arith.addf %491, %490 : vector<8x128xf32>
    %cst_127 = arith.constant 1.000000e+00 : f32
    %493 = vector.broadcast %cst_127 : f32 to vector<8x128xf32>
    %494 = arith.divf %493, %492 : vector<8x128xf32>
    %495 = vector.extract_strided_slice %494 {offsets = [0, 0], sizes = [8, 32], strides = [1, 1]} : vector<8x128xf32> to vector<8x32xf32>
    %496 = vector.extract_strided_slice %494 {offsets = [0, 32], sizes = [8, 32], strides = [1, 1]} : vector<8x128xf32> to vector<8x32xf32>
    %497 = vector.extract_strided_slice %494 {offsets = [0, 96], sizes = [8, 32], strides = [1, 1]} : vector<8x128xf32> to vector<8x32xf32>
    %498 = vector.extract_strided_slice %494 {offsets = [0, 64], sizes = [8, 32], strides = [1, 1]} : vector<8x128xf32> to vector<8x32xf32>
    %cst_128 = arith.constant 2.000000e+00 : f32
    %499 = vector.broadcast %cst_128 : f32 to vector<8x32xf32>
    %500 = arith.mulf %499, %498 : vector<8x32xf32>
    %cst_129 = arith.constant 1.000000e+00 : f32
    %501 = vector.broadcast %cst_129 : f32 to vector<8x32xf32>
    %502 = arith.subf %500, %501 : vector<8x32xf32>
    %503 = arith.mulf %496, %455 : vector<8x32xf32>
    %504 = arith.mulf %495, %502 : vector<8x32xf32>
    %505 = arith.addf %503, %504 : vector<8x32xf32>
    %506 = math.tanh %505 : vector<8x32xf32>
    %507 = arith.mulf %497, %506 : vector<8x32xf32>
    %cst_130 = arith.constant dense<0.000000e+00> : vector<8x256xf32>
    %508 = tpu.matmul %507, %417, %cst_130 {dimension_numbers = #tpu.dot_dimension_numbers<[1], [0], [0], [1], [0, 0, 1, 1], [], []>} : vector<8x32xf32>, vector<32x256xf32>, vector<8x256xf32> -> vector<8x256xf32>
    %509 = vector.extract_strided_slice %508 {offsets = [0, 128], sizes = [8, 128], strides = [1, 1]} : vector<8x256xf32> to vector<8x128xf32>
    %510 = vector.extract_strided_slice %483 {offsets = [0, 128], sizes = [8, 128], strides = [1, 1]} : vector<8x256xf32> to vector<8x128xf32>
    %511 = arith.addf %509, %510 : vector<8x128xf32>
    %512 = arith.addf %511, %421 : vector<8x128xf32>
    %cst_131 = arith.constant 0.000000e+00 : f32
    %513 = vector.broadcast %cst_131 : f32 to vector<8x128xf32>
    %514 = arith.subf %513, %512 : vector<8x128xf32>
    %515 = math.exp %514 : vector<8x128xf32>
    %cst_132 = arith.constant 1.000000e+00 : f32
    %516 = vector.broadcast %cst_132 : f32 to vector<8x128xf32>
    %517 = arith.addf %516, %515 : vector<8x128xf32>
    %cst_133 = arith.constant 1.000000e+00 : f32
    %518 = vector.broadcast %cst_133 : f32 to vector<8x128xf32>
    %519 = arith.divf %518, %517 : vector<8x128xf32>
    %520 = vector.extract_strided_slice %519 {offsets = [0, 0], sizes = [8, 32], strides = [1, 1]} : vector<8x128xf32> to vector<8x32xf32>
    %521 = vector.extract_strided_slice %519 {offsets = [0, 32], sizes = [8, 32], strides = [1, 1]} : vector<8x128xf32> to vector<8x32xf32>
    %522 = vector.extract_strided_slice %519 {offsets = [0, 96], sizes = [8, 32], strides = [1, 1]} : vector<8x128xf32> to vector<8x32xf32>
    %523 = vector.extract_strided_slice %519 {offsets = [0, 64], sizes = [8, 32], strides = [1, 1]} : vector<8x128xf32> to vector<8x32xf32>
    %cst_134 = arith.constant 2.000000e+00 : f32
    %524 = vector.broadcast %cst_134 : f32 to vector<8x32xf32>
    %525 = arith.mulf %524, %523 : vector<8x32xf32>
    %cst_135 = arith.constant 1.000000e+00 : f32
    %526 = vector.broadcast %cst_135 : f32 to vector<8x32xf32>
    %527 = arith.subf %525, %526 : vector<8x32xf32>
    %528 = arith.mulf %521, %480 : vector<8x32xf32>
    %529 = arith.mulf %520, %527 : vector<8x32xf32>
    %530 = arith.addf %528, %529 : vector<8x32xf32>
    %531 = math.tanh %530 : vector<8x32xf32>
    %532 = arith.mulf %522, %531 : vector<8x32xf32>
    %cst_136 = arith.constant dense<0.000000e+00> : vector<8x256xf32>
    %533 = tpu.matmul %532, %418, %cst_136 {dimension_numbers = #tpu.dot_dimension_numbers<[1], [0], [0], [1], [0, 0, 1, 1], [], []>} : vector<8x32xf32>, vector<32x256xf32>, vector<8x256xf32> -> vector<8x256xf32>
    %534 = vector.extract_strided_slice %508 {offsets = [0, 0], sizes = [8, 128], strides = [1, 1]} : vector<8x256xf32> to vector<8x128xf32>
    %535 = vector.extract_strided_slice %533 {offsets = [0, 0], sizes = [8, 128], strides = [1, 1]} : vector<8x256xf32> to vector<8x128xf32>
    %536 = arith.addf %534, %535 : vector<8x128xf32>
    %537 = arith.addf %536, %424 : vector<8x128xf32>
    %cst_137 = arith.constant 0.000000e+00 : f32
    %538 = vector.broadcast %cst_137 : f32 to vector<8x128xf32>
    %539 = arith.subf %538, %537 : vector<8x128xf32>
    %540 = math.exp %539 : vector<8x128xf32>
    %cst_138 = arith.constant 1.000000e+00 : f32
    %541 = vector.broadcast %cst_138 : f32 to vector<8x128xf32>
    %542 = arith.addf %541, %540 : vector<8x128xf32>
    %cst_139 = arith.constant 1.000000e+00 : f32
    %543 = vector.broadcast %cst_139 : f32 to vector<8x128xf32>
    %544 = arith.divf %543, %542 : vector<8x128xf32>
    %545 = vector.extract_strided_slice %544 {offsets = [0, 0], sizes = [8, 32], strides = [1, 1]} : vector<8x128xf32> to vector<8x32xf32>
    %546 = vector.extract_strided_slice %544 {offsets = [0, 32], sizes = [8, 32], strides = [1, 1]} : vector<8x128xf32> to vector<8x32xf32>
    %547 = vector.extract_strided_slice %544 {offsets = [0, 96], sizes = [8, 32], strides = [1, 1]} : vector<8x128xf32> to vector<8x32xf32>
    %548 = vector.extract_strided_slice %544 {offsets = [0, 64], sizes = [8, 32], strides = [1, 1]} : vector<8x128xf32> to vector<8x32xf32>
    %cst_140 = arith.constant 2.000000e+00 : f32
    %549 = vector.broadcast %cst_140 : f32 to vector<8x32xf32>
    %550 = arith.mulf %549, %548 : vector<8x32xf32>
    %cst_141 = arith.constant 1.000000e+00 : f32
    %551 = vector.broadcast %cst_141 : f32 to vector<8x32xf32>
    %552 = arith.subf %550, %551 : vector<8x32xf32>
    %553 = arith.mulf %546, %505 : vector<8x32xf32>
    %554 = arith.mulf %545, %552 : vector<8x32xf32>
    %555 = arith.addf %553, %554 : vector<8x32xf32>
    %556 = math.tanh %555 : vector<8x32xf32>
    %557 = arith.mulf %547, %556 : vector<8x32xf32>
    %cst_142 = arith.constant dense<0.000000e+00> : vector<8x256xf32>
    %558 = tpu.matmul %557, %417, %cst_142 {dimension_numbers = #tpu.dot_dimension_numbers<[1], [0], [0], [1], [0, 0, 1, 1], [], []>} : vector<8x32xf32>, vector<32x256xf32>, vector<8x256xf32> -> vector<8x256xf32>
    %559 = vector.extract_strided_slice %558 {offsets = [0, 128], sizes = [8, 128], strides = [1, 1]} : vector<8x256xf32> to vector<8x128xf32>
    %560 = vector.extract_strided_slice %533 {offsets = [0, 128], sizes = [8, 128], strides = [1, 1]} : vector<8x256xf32> to vector<8x128xf32>
    %561 = arith.addf %559, %560 : vector<8x128xf32>
    %562 = arith.addf %561, %421 : vector<8x128xf32>
    %cst_143 = arith.constant 0.000000e+00 : f32
    %563 = vector.broadcast %cst_143 : f32 to vector<8x128xf32>
    %564 = arith.subf %563, %562 : vector<8x128xf32>
    %565 = math.exp %564 : vector<8x128xf32>
    %cst_144 = arith.constant 1.000000e+00 : f32
    %566 = vector.broadcast %cst_144 : f32 to vector<8x128xf32>
    %567 = arith.addf %566, %565 : vector<8x128xf32>
    %cst_145 = arith.constant 1.000000e+00 : f32
    %568 = vector.broadcast %cst_145 : f32 to vector<8x128xf32>
    %569 = arith.divf %568, %567 : vector<8x128xf32>
    %570 = vector.extract_strided_slice %569 {offsets = [0, 0], sizes = [8, 32], strides = [1, 1]} : vector<8x128xf32> to vector<8x32xf32>
    %571 = vector.extract_strided_slice %569 {offsets = [0, 32], sizes = [8, 32], strides = [1, 1]} : vector<8x128xf32> to vector<8x32xf32>
    %572 = vector.extract_strided_slice %569 {offsets = [0, 96], sizes = [8, 32], strides = [1, 1]} : vector<8x128xf32> to vector<8x32xf32>
    %573 = vector.extract_strided_slice %569 {offsets = [0, 64], sizes = [8, 32], strides = [1, 1]} : vector<8x128xf32> to vector<8x32xf32>
    %cst_146 = arith.constant 2.000000e+00 : f32
    %574 = vector.broadcast %cst_146 : f32 to vector<8x32xf32>
    %575 = arith.mulf %574, %573 : vector<8x32xf32>
    %cst_147 = arith.constant 1.000000e+00 : f32
    %576 = vector.broadcast %cst_147 : f32 to vector<8x32xf32>
    %577 = arith.subf %575, %576 : vector<8x32xf32>
    %578 = arith.mulf %571, %530 : vector<8x32xf32>
    %579 = arith.mulf %570, %577 : vector<8x32xf32>
    %580 = arith.addf %578, %579 : vector<8x32xf32>
    %581 = math.tanh %580 : vector<8x32xf32>
    %582 = arith.mulf %572, %581 : vector<8x32xf32>
    %cst_148 = arith.constant dense<0.000000e+00> : vector<8x256xf32>
    %583 = tpu.matmul %582, %418, %cst_148 {dimension_numbers = #tpu.dot_dimension_numbers<[1], [0], [0], [1], [0, 0, 1, 1], [], []>} : vector<8x32xf32>, vector<32x256xf32>, vector<8x256xf32> -> vector<8x256xf32>
    %584 = vector.extract_strided_slice %558 {offsets = [0, 0], sizes = [8, 128], strides = [1, 1]} : vector<8x256xf32> to vector<8x128xf32>
    %585 = vector.extract_strided_slice %583 {offsets = [0, 0], sizes = [8, 128], strides = [1, 1]} : vector<8x256xf32> to vector<8x128xf32>
    %586 = arith.addf %584, %585 : vector<8x128xf32>
    %587 = arith.addf %586, %424 : vector<8x128xf32>
    %cst_149 = arith.constant 0.000000e+00 : f32
    %588 = vector.broadcast %cst_149 : f32 to vector<8x128xf32>
    %589 = arith.subf %588, %587 : vector<8x128xf32>
    %590 = math.exp %589 : vector<8x128xf32>
    %cst_150 = arith.constant 1.000000e+00 : f32
    %591 = vector.broadcast %cst_150 : f32 to vector<8x128xf32>
    %592 = arith.addf %591, %590 : vector<8x128xf32>
    %cst_151 = arith.constant 1.000000e+00 : f32
    %593 = vector.broadcast %cst_151 : f32 to vector<8x128xf32>
    %594 = arith.divf %593, %592 : vector<8x128xf32>
    %595 = vector.extract_strided_slice %594 {offsets = [0, 0], sizes = [8, 32], strides = [1, 1]} : vector<8x128xf32> to vector<8x32xf32>
    %596 = vector.extract_strided_slice %594 {offsets = [0, 32], sizes = [8, 32], strides = [1, 1]} : vector<8x128xf32> to vector<8x32xf32>
    %597 = vector.extract_strided_slice %594 {offsets = [0, 96], sizes = [8, 32], strides = [1, 1]} : vector<8x128xf32> to vector<8x32xf32>
    %598 = vector.extract_strided_slice %594 {offsets = [0, 64], sizes = [8, 32], strides = [1, 1]} : vector<8x128xf32> to vector<8x32xf32>
    %cst_152 = arith.constant 2.000000e+00 : f32
    %599 = vector.broadcast %cst_152 : f32 to vector<8x32xf32>
    %600 = arith.mulf %599, %598 : vector<8x32xf32>
    %cst_153 = arith.constant 1.000000e+00 : f32
    %601 = vector.broadcast %cst_153 : f32 to vector<8x32xf32>
    %602 = arith.subf %600, %601 : vector<8x32xf32>
    %603 = arith.mulf %596, %555 : vector<8x32xf32>
    %604 = arith.mulf %595, %602 : vector<8x32xf32>
    %605 = arith.addf %603, %604 : vector<8x32xf32>
    %606 = math.tanh %605 : vector<8x32xf32>
    %607 = arith.mulf %597, %606 : vector<8x32xf32>
    %cst_154 = arith.constant dense<0.000000e+00> : vector<8x256xf32>
    %608 = tpu.matmul %607, %417, %cst_154 {dimension_numbers = #tpu.dot_dimension_numbers<[1], [0], [0], [1], [0, 0, 1, 1], [], []>} : vector<8x32xf32>, vector<32x256xf32>, vector<8x256xf32> -> vector<8x256xf32>
    %609 = vector.extract_strided_slice %608 {offsets = [0, 128], sizes = [8, 128], strides = [1, 1]} : vector<8x256xf32> to vector<8x128xf32>
    %610 = vector.extract_strided_slice %583 {offsets = [0, 128], sizes = [8, 128], strides = [1, 1]} : vector<8x256xf32> to vector<8x128xf32>
    %611 = arith.addf %609, %610 : vector<8x128xf32>
    %612 = arith.addf %611, %421 : vector<8x128xf32>
    %cst_155 = arith.constant 0.000000e+00 : f32
    %613 = vector.broadcast %cst_155 : f32 to vector<8x128xf32>
    %614 = arith.subf %613, %612 : vector<8x128xf32>
    %615 = math.exp %614 : vector<8x128xf32>
    %cst_156 = arith.constant 1.000000e+00 : f32
    %616 = vector.broadcast %cst_156 : f32 to vector<8x128xf32>
    %617 = arith.addf %616, %615 : vector<8x128xf32>
    %cst_157 = arith.constant 1.000000e+00 : f32
    %618 = vector.broadcast %cst_157 : f32 to vector<8x128xf32>
    %619 = arith.divf %618, %617 : vector<8x128xf32>
    %620 = vector.extract_strided_slice %619 {offsets = [0, 0], sizes = [8, 32], strides = [1, 1]} : vector<8x128xf32> to vector<8x32xf32>
    %621 = vector.extract_strided_slice %619 {offsets = [0, 32], sizes = [8, 32], strides = [1, 1]} : vector<8x128xf32> to vector<8x32xf32>
    %622 = vector.extract_strided_slice %619 {offsets = [0, 96], sizes = [8, 32], strides = [1, 1]} : vector<8x128xf32> to vector<8x32xf32>
    %623 = vector.extract_strided_slice %619 {offsets = [0, 64], sizes = [8, 32], strides = [1, 1]} : vector<8x128xf32> to vector<8x32xf32>
    %cst_158 = arith.constant 2.000000e+00 : f32
    %624 = vector.broadcast %cst_158 : f32 to vector<8x32xf32>
    %625 = arith.mulf %624, %623 : vector<8x32xf32>
    %cst_159 = arith.constant 1.000000e+00 : f32
    %626 = vector.broadcast %cst_159 : f32 to vector<8x32xf32>
    %627 = arith.subf %625, %626 : vector<8x32xf32>
    %628 = arith.mulf %621, %580 : vector<8x32xf32>
    %629 = arith.mulf %620, %627 : vector<8x32xf32>
    %630 = arith.addf %628, %629 : vector<8x32xf32>
    %631 = math.tanh %630 : vector<8x32xf32>
    %632 = arith.mulf %622, %631 : vector<8x32xf32>
    %cst_160 = arith.constant dense<0.000000e+00> : vector<8x256xf32>
    %633 = tpu.matmul %632, %418, %cst_160 {dimension_numbers = #tpu.dot_dimension_numbers<[1], [0], [0], [1], [0, 0, 1, 1], [], []>} : vector<8x32xf32>, vector<32x256xf32>, vector<8x256xf32> -> vector<8x256xf32>
    %634 = vector.extract_strided_slice %608 {offsets = [0, 0], sizes = [8, 128], strides = [1, 1]} : vector<8x256xf32> to vector<8x128xf32>
    %635 = vector.extract_strided_slice %633 {offsets = [0, 0], sizes = [8, 128], strides = [1, 1]} : vector<8x256xf32> to vector<8x128xf32>
    %636 = arith.addf %634, %635 : vector<8x128xf32>
    %637 = arith.addf %636, %424 : vector<8x128xf32>
    %cst_161 = arith.constant 0.000000e+00 : f32
    %638 = vector.broadcast %cst_161 : f32 to vector<8x128xf32>
    %639 = arith.subf %638, %637 : vector<8x128xf32>
    %640 = math.exp %639 : vector<8x128xf32>
    %cst_162 = arith.constant 1.000000e+00 : f32
    %641 = vector.broadcast %cst_162 : f32 to vector<8x128xf32>
    %642 = arith.addf %641, %640 : vector<8x128xf32>
    %cst_163 = arith.constant 1.000000e+00 : f32
    %643 = vector.broadcast %cst_163 : f32 to vector<8x128xf32>
    %644 = arith.divf %643, %642 : vector<8x128xf32>
    %645 = vector.extract_strided_slice %644 {offsets = [0, 0], sizes = [8, 32], strides = [1, 1]} : vector<8x128xf32> to vector<8x32xf32>
    %646 = vector.extract_strided_slice %644 {offsets = [0, 32], sizes = [8, 32], strides = [1, 1]} : vector<8x128xf32> to vector<8x32xf32>
    %647 = vector.extract_strided_slice %644 {offsets = [0, 96], sizes = [8, 32], strides = [1, 1]} : vector<8x128xf32> to vector<8x32xf32>
    %648 = vector.extract_strided_slice %644 {offsets = [0, 64], sizes = [8, 32], strides = [1, 1]} : vector<8x128xf32> to vector<8x32xf32>
    %cst_164 = arith.constant 2.000000e+00 : f32
    %649 = vector.broadcast %cst_164 : f32 to vector<8x32xf32>
    %650 = arith.mulf %649, %648 : vector<8x32xf32>
    %cst_165 = arith.constant 1.000000e+00 : f32
    %651 = vector.broadcast %cst_165 : f32 to vector<8x32xf32>
    %652 = arith.subf %650, %651 : vector<8x32xf32>
    %653 = arith.mulf %646, %605 : vector<8x32xf32>
    %654 = arith.mulf %645, %652 : vector<8x32xf32>
    %655 = arith.addf %653, %654 : vector<8x32xf32>
    %656 = math.tanh %655 : vector<8x32xf32>
    %657 = arith.mulf %647, %656 : vector<8x32xf32>
    %cst_166 = arith.constant dense<0.000000e+00> : vector<8x256xf32>
    %658 = tpu.matmul %657, %417, %cst_166 {dimension_numbers = #tpu.dot_dimension_numbers<[1], [0], [0], [1], [0, 0, 1, 1], [], []>} : vector<8x32xf32>, vector<32x256xf32>, vector<8x256xf32> -> vector<8x256xf32>
    %659 = vector.extract_strided_slice %658 {offsets = [0, 128], sizes = [8, 128], strides = [1, 1]} : vector<8x256xf32> to vector<8x128xf32>
    %660 = vector.extract_strided_slice %633 {offsets = [0, 128], sizes = [8, 128], strides = [1, 1]} : vector<8x256xf32> to vector<8x128xf32>
    %661 = arith.addf %659, %660 : vector<8x128xf32>
    %662 = arith.addf %661, %421 : vector<8x128xf32>
    %cst_167 = arith.constant 0.000000e+00 : f32
    %663 = vector.broadcast %cst_167 : f32 to vector<8x128xf32>
    %664 = arith.subf %663, %662 : vector<8x128xf32>
    %665 = math.exp %664 : vector<8x128xf32>
    %cst_168 = arith.constant 1.000000e+00 : f32
    %666 = vector.broadcast %cst_168 : f32 to vector<8x128xf32>
    %667 = arith.addf %666, %665 : vector<8x128xf32>
    %cst_169 = arith.constant 1.000000e+00 : f32
    %668 = vector.broadcast %cst_169 : f32 to vector<8x128xf32>
    %669 = arith.divf %668, %667 : vector<8x128xf32>
    %670 = vector.extract_strided_slice %669 {offsets = [0, 0], sizes = [8, 32], strides = [1, 1]} : vector<8x128xf32> to vector<8x32xf32>
    %671 = vector.extract_strided_slice %669 {offsets = [0, 32], sizes = [8, 32], strides = [1, 1]} : vector<8x128xf32> to vector<8x32xf32>
    %672 = vector.extract_strided_slice %669 {offsets = [0, 96], sizes = [8, 32], strides = [1, 1]} : vector<8x128xf32> to vector<8x32xf32>
    %673 = vector.extract_strided_slice %669 {offsets = [0, 64], sizes = [8, 32], strides = [1, 1]} : vector<8x128xf32> to vector<8x32xf32>
    %cst_170 = arith.constant 2.000000e+00 : f32
    %674 = vector.broadcast %cst_170 : f32 to vector<8x32xf32>
    %675 = arith.mulf %674, %673 : vector<8x32xf32>
    %cst_171 = arith.constant 1.000000e+00 : f32
    %676 = vector.broadcast %cst_171 : f32 to vector<8x32xf32>
    %677 = arith.subf %675, %676 : vector<8x32xf32>
    %678 = arith.mulf %671, %630 : vector<8x32xf32>
    %679 = arith.mulf %670, %677 : vector<8x32xf32>
    %680 = arith.addf %678, %679 : vector<8x32xf32>
    %681 = math.tanh %680 : vector<8x32xf32>
    %682 = arith.mulf %672, %681 : vector<8x32xf32>
    %cst_172 = arith.constant dense<0.000000e+00> : vector<8x256xf32>
    %683 = tpu.matmul %682, %418, %cst_172 {dimension_numbers = #tpu.dot_dimension_numbers<[1], [0], [0], [1], [0, 0, 1, 1], [], []>} : vector<8x32xf32>, vector<32x256xf32>, vector<8x256xf32> -> vector<8x256xf32>
    %684 = vector.extract_strided_slice %658 {offsets = [0, 0], sizes = [8, 128], strides = [1, 1]} : vector<8x256xf32> to vector<8x128xf32>
    %685 = vector.extract_strided_slice %683 {offsets = [0, 0], sizes = [8, 128], strides = [1, 1]} : vector<8x256xf32> to vector<8x128xf32>
    %686 = arith.addf %684, %685 : vector<8x128xf32>
    %687 = arith.addf %686, %424 : vector<8x128xf32>
    %cst_173 = arith.constant 0.000000e+00 : f32
    %688 = vector.broadcast %cst_173 : f32 to vector<8x128xf32>
    %689 = arith.subf %688, %687 : vector<8x128xf32>
    %690 = math.exp %689 : vector<8x128xf32>
    %cst_174 = arith.constant 1.000000e+00 : f32
    %691 = vector.broadcast %cst_174 : f32 to vector<8x128xf32>
    %692 = arith.addf %691, %690 : vector<8x128xf32>
    %cst_175 = arith.constant 1.000000e+00 : f32
    %693 = vector.broadcast %cst_175 : f32 to vector<8x128xf32>
    %694 = arith.divf %693, %692 : vector<8x128xf32>
    %695 = vector.extract_strided_slice %694 {offsets = [0, 0], sizes = [8, 32], strides = [1, 1]} : vector<8x128xf32> to vector<8x32xf32>
    %696 = vector.extract_strided_slice %694 {offsets = [0, 32], sizes = [8, 32], strides = [1, 1]} : vector<8x128xf32> to vector<8x32xf32>
    %697 = vector.extract_strided_slice %694 {offsets = [0, 96], sizes = [8, 32], strides = [1, 1]} : vector<8x128xf32> to vector<8x32xf32>
    %698 = vector.extract_strided_slice %694 {offsets = [0, 64], sizes = [8, 32], strides = [1, 1]} : vector<8x128xf32> to vector<8x32xf32>
    %cst_176 = arith.constant 2.000000e+00 : f32
    %699 = vector.broadcast %cst_176 : f32 to vector<8x32xf32>
    %700 = arith.mulf %699, %698 : vector<8x32xf32>
    %cst_177 = arith.constant 1.000000e+00 : f32
    %701 = vector.broadcast %cst_177 : f32 to vector<8x32xf32>
    %702 = arith.subf %700, %701 : vector<8x32xf32>
    %703 = arith.mulf %696, %655 : vector<8x32xf32>
    %704 = arith.mulf %695, %702 : vector<8x32xf32>
    %705 = arith.addf %703, %704 : vector<8x32xf32>
    %706 = math.tanh %705 : vector<8x32xf32>
    %707 = arith.mulf %697, %706 : vector<8x32xf32>
    %cst_178 = arith.constant dense<0.000000e+00> : vector<8x256xf32>
    %708 = tpu.matmul %707, %417, %cst_178 {dimension_numbers = #tpu.dot_dimension_numbers<[1], [0], [0], [1], [0, 0, 1, 1], [], []>} : vector<8x32xf32>, vector<32x256xf32>, vector<8x256xf32> -> vector<8x256xf32>
    %709 = vector.extract_strided_slice %708 {offsets = [0, 128], sizes = [8, 128], strides = [1, 1]} : vector<8x256xf32> to vector<8x128xf32>
    %710 = vector.extract_strided_slice %683 {offsets = [0, 128], sizes = [8, 128], strides = [1, 1]} : vector<8x256xf32> to vector<8x128xf32>
    %711 = arith.addf %709, %710 : vector<8x128xf32>
    %712 = arith.addf %711, %421 : vector<8x128xf32>
    %cst_179 = arith.constant 0.000000e+00 : f32
    %713 = vector.broadcast %cst_179 : f32 to vector<8x128xf32>
    %714 = arith.subf %713, %712 : vector<8x128xf32>
    %715 = math.exp %714 : vector<8x128xf32>
    %cst_180 = arith.constant 1.000000e+00 : f32
    %716 = vector.broadcast %cst_180 : f32 to vector<8x128xf32>
    %717 = arith.addf %716, %715 : vector<8x128xf32>
    %cst_181 = arith.constant 1.000000e+00 : f32
    %718 = vector.broadcast %cst_181 : f32 to vector<8x128xf32>
    %719 = arith.divf %718, %717 : vector<8x128xf32>
    %720 = vector.extract_strided_slice %719 {offsets = [0, 0], sizes = [8, 32], strides = [1, 1]} : vector<8x128xf32> to vector<8x32xf32>
    %721 = vector.extract_strided_slice %719 {offsets = [0, 32], sizes = [8, 32], strides = [1, 1]} : vector<8x128xf32> to vector<8x32xf32>
    %722 = vector.extract_strided_slice %719 {offsets = [0, 96], sizes = [8, 32], strides = [1, 1]} : vector<8x128xf32> to vector<8x32xf32>
    %723 = vector.extract_strided_slice %719 {offsets = [0, 64], sizes = [8, 32], strides = [1, 1]} : vector<8x128xf32> to vector<8x32xf32>
    %cst_182 = arith.constant 2.000000e+00 : f32
    %724 = vector.broadcast %cst_182 : f32 to vector<8x32xf32>
    %725 = arith.mulf %724, %723 : vector<8x32xf32>
    %cst_183 = arith.constant 1.000000e+00 : f32
    %726 = vector.broadcast %cst_183 : f32 to vector<8x32xf32>
    %727 = arith.subf %725, %726 : vector<8x32xf32>
    %728 = arith.mulf %721, %680 : vector<8x32xf32>
    %729 = arith.mulf %720, %727 : vector<8x32xf32>
    %730 = arith.addf %728, %729 : vector<8x32xf32>
    %731 = math.tanh %730 : vector<8x32xf32>
    %732 = arith.mulf %722, %731 : vector<8x32xf32>
    %cst_184 = arith.constant dense<0.000000e+00> : vector<8x256xf32>
    %733 = tpu.matmul %732, %418, %cst_184 {dimension_numbers = #tpu.dot_dimension_numbers<[1], [0], [0], [1], [0, 0, 1, 1], [], []>} : vector<8x32xf32>, vector<32x256xf32>, vector<8x256xf32> -> vector<8x256xf32>
    %734 = vector.extract_strided_slice %708 {offsets = [0, 0], sizes = [8, 128], strides = [1, 1]} : vector<8x256xf32> to vector<8x128xf32>
    %735 = vector.extract_strided_slice %733 {offsets = [0, 0], sizes = [8, 128], strides = [1, 1]} : vector<8x256xf32> to vector<8x128xf32>
    %736 = arith.addf %734, %735 : vector<8x128xf32>
    %737 = arith.addf %736, %424 : vector<8x128xf32>
    %cst_185 = arith.constant 0.000000e+00 : f32
    %738 = vector.broadcast %cst_185 : f32 to vector<8x128xf32>
    %739 = arith.subf %738, %737 : vector<8x128xf32>
    %740 = math.exp %739 : vector<8x128xf32>
    %cst_186 = arith.constant 1.000000e+00 : f32
    %741 = vector.broadcast %cst_186 : f32 to vector<8x128xf32>
    %742 = arith.addf %741, %740 : vector<8x128xf32>
    %cst_187 = arith.constant 1.000000e+00 : f32
    %743 = vector.broadcast %cst_187 : f32 to vector<8x128xf32>
    %744 = arith.divf %743, %742 : vector<8x128xf32>
    %745 = vector.extract_strided_slice %744 {offsets = [0, 0], sizes = [8, 32], strides = [1, 1]} : vector<8x128xf32> to vector<8x32xf32>
    %746 = vector.extract_strided_slice %744 {offsets = [0, 32], sizes = [8, 32], strides = [1, 1]} : vector<8x128xf32> to vector<8x32xf32>
    %747 = vector.extract_strided_slice %744 {offsets = [0, 96], sizes = [8, 32], strides = [1, 1]} : vector<8x128xf32> to vector<8x32xf32>
    %748 = vector.extract_strided_slice %744 {offsets = [0, 64], sizes = [8, 32], strides = [1, 1]} : vector<8x128xf32> to vector<8x32xf32>
    %cst_188 = arith.constant 2.000000e+00 : f32
    %749 = vector.broadcast %cst_188 : f32 to vector<8x32xf32>
    %750 = arith.mulf %749, %748 : vector<8x32xf32>
    %cst_189 = arith.constant 1.000000e+00 : f32
    %751 = vector.broadcast %cst_189 : f32 to vector<8x32xf32>
    %752 = arith.subf %750, %751 : vector<8x32xf32>
    %753 = arith.mulf %746, %705 : vector<8x32xf32>
    %754 = arith.mulf %745, %752 : vector<8x32xf32>
    %755 = arith.addf %753, %754 : vector<8x32xf32>
    %756 = math.tanh %755 : vector<8x32xf32>
    %757 = arith.mulf %747, %756 : vector<8x32xf32>
    %cst_190 = arith.constant dense<0.000000e+00> : vector<8x256xf32>
    %758 = tpu.matmul %757, %417, %cst_190 {dimension_numbers = #tpu.dot_dimension_numbers<[1], [0], [0], [1], [0, 0, 1, 1], [], []>} : vector<8x32xf32>, vector<32x256xf32>, vector<8x256xf32> -> vector<8x256xf32>
    %759 = vector.extract_strided_slice %758 {offsets = [0, 128], sizes = [8, 128], strides = [1, 1]} : vector<8x256xf32> to vector<8x128xf32>
    %760 = vector.extract_strided_slice %733 {offsets = [0, 128], sizes = [8, 128], strides = [1, 1]} : vector<8x256xf32> to vector<8x128xf32>
    %761 = arith.addf %759, %760 : vector<8x128xf32>
    %762 = arith.addf %761, %421 : vector<8x128xf32>
    %cst_191 = arith.constant 0.000000e+00 : f32
    %763 = vector.broadcast %cst_191 : f32 to vector<8x128xf32>
    %764 = arith.subf %763, %762 : vector<8x128xf32>
    %765 = math.exp %764 : vector<8x128xf32>
    %cst_192 = arith.constant 1.000000e+00 : f32
    %766 = vector.broadcast %cst_192 : f32 to vector<8x128xf32>
    %767 = arith.addf %766, %765 : vector<8x128xf32>
    %cst_193 = arith.constant 1.000000e+00 : f32
    %768 = vector.broadcast %cst_193 : f32 to vector<8x128xf32>
    %769 = arith.divf %768, %767 : vector<8x128xf32>
    %770 = vector.extract_strided_slice %769 {offsets = [0, 0], sizes = [8, 32], strides = [1, 1]} : vector<8x128xf32> to vector<8x32xf32>
    %771 = vector.extract_strided_slice %769 {offsets = [0, 32], sizes = [8, 32], strides = [1, 1]} : vector<8x128xf32> to vector<8x32xf32>
    %772 = vector.extract_strided_slice %769 {offsets = [0, 96], sizes = [8, 32], strides = [1, 1]} : vector<8x128xf32> to vector<8x32xf32>
    %773 = vector.extract_strided_slice %769 {offsets = [0, 64], sizes = [8, 32], strides = [1, 1]} : vector<8x128xf32> to vector<8x32xf32>
    %cst_194 = arith.constant 2.000000e+00 : f32
    %774 = vector.broadcast %cst_194 : f32 to vector<8x32xf32>
    %775 = arith.mulf %774, %773 : vector<8x32xf32>
    %cst_195 = arith.constant 1.000000e+00 : f32
    %776 = vector.broadcast %cst_195 : f32 to vector<8x32xf32>
    %777 = arith.subf %775, %776 : vector<8x32xf32>
    %778 = arith.mulf %771, %730 : vector<8x32xf32>
    %779 = arith.mulf %770, %777 : vector<8x32xf32>
    %780 = arith.addf %778, %779 : vector<8x32xf32>
    %781 = math.tanh %780 : vector<8x32xf32>
    %782 = arith.mulf %772, %781 : vector<8x32xf32>
    %cst_196 = arith.constant dense<0.000000e+00> : vector<8x256xf32>
    %783 = tpu.matmul %782, %418, %cst_196 {dimension_numbers = #tpu.dot_dimension_numbers<[1], [0], [0], [1], [0, 0, 1, 1], [], []>} : vector<8x32xf32>, vector<32x256xf32>, vector<8x256xf32> -> vector<8x256xf32>
    %784 = vector.extract_strided_slice %758 {offsets = [0, 0], sizes = [8, 128], strides = [1, 1]} : vector<8x256xf32> to vector<8x128xf32>
    %785 = vector.extract_strided_slice %783 {offsets = [0, 0], sizes = [8, 128], strides = [1, 1]} : vector<8x256xf32> to vector<8x128xf32>
    %786 = arith.addf %784, %785 : vector<8x128xf32>
    %787 = arith.addf %786, %424 : vector<8x128xf32>
    %cst_197 = arith.constant 0.000000e+00 : f32
    %788 = vector.broadcast %cst_197 : f32 to vector<8x128xf32>
    %789 = arith.subf %788, %787 : vector<8x128xf32>
    %790 = math.exp %789 : vector<8x128xf32>
    %cst_198 = arith.constant 1.000000e+00 : f32
    %791 = vector.broadcast %cst_198 : f32 to vector<8x128xf32>
    %792 = arith.addf %791, %790 : vector<8x128xf32>
    %cst_199 = arith.constant 1.000000e+00 : f32
    %793 = vector.broadcast %cst_199 : f32 to vector<8x128xf32>
    %794 = arith.divf %793, %792 : vector<8x128xf32>
    %795 = vector.extract_strided_slice %794 {offsets = [0, 0], sizes = [8, 32], strides = [1, 1]} : vector<8x128xf32> to vector<8x32xf32>
    %796 = vector.extract_strided_slice %794 {offsets = [0, 32], sizes = [8, 32], strides = [1, 1]} : vector<8x128xf32> to vector<8x32xf32>
    %797 = vector.extract_strided_slice %794 {offsets = [0, 96], sizes = [8, 32], strides = [1, 1]} : vector<8x128xf32> to vector<8x32xf32>
    %798 = vector.extract_strided_slice %794 {offsets = [0, 64], sizes = [8, 32], strides = [1, 1]} : vector<8x128xf32> to vector<8x32xf32>
    %cst_200 = arith.constant 2.000000e+00 : f32
    %799 = vector.broadcast %cst_200 : f32 to vector<8x32xf32>
    %800 = arith.mulf %799, %798 : vector<8x32xf32>
    %cst_201 = arith.constant 1.000000e+00 : f32
    %801 = vector.broadcast %cst_201 : f32 to vector<8x32xf32>
    %802 = arith.subf %800, %801 : vector<8x32xf32>
    %803 = arith.mulf %796, %755 : vector<8x32xf32>
    %804 = arith.mulf %795, %802 : vector<8x32xf32>
    %805 = arith.addf %803, %804 : vector<8x32xf32>
    %806 = math.tanh %805 : vector<8x32xf32>
    %807 = arith.mulf %797, %806 : vector<8x32xf32>
    %cst_202 = arith.constant dense<0.000000e+00> : vector<8x256xf32>
    %808 = tpu.matmul %807, %417, %cst_202 {dimension_numbers = #tpu.dot_dimension_numbers<[1], [0], [0], [1], [0, 0, 1, 1], [], []>} : vector<8x32xf32>, vector<32x256xf32>, vector<8x256xf32> -> vector<8x256xf32>
    %809 = vector.extract_strided_slice %808 {offsets = [0, 128], sizes = [8, 128], strides = [1, 1]} : vector<8x256xf32> to vector<8x128xf32>
    %810 = vector.extract_strided_slice %783 {offsets = [0, 128], sizes = [8, 128], strides = [1, 1]} : vector<8x256xf32> to vector<8x128xf32>
    %811 = arith.addf %809, %810 : vector<8x128xf32>
    %812 = arith.addf %811, %421 : vector<8x128xf32>
    %cst_203 = arith.constant 0.000000e+00 : f32
    %813 = vector.broadcast %cst_203 : f32 to vector<8x128xf32>
    %814 = arith.subf %813, %812 : vector<8x128xf32>
    %815 = math.exp %814 : vector<8x128xf32>
    %cst_204 = arith.constant 1.000000e+00 : f32
    %816 = vector.broadcast %cst_204 : f32 to vector<8x128xf32>
    %817 = arith.addf %816, %815 : vector<8x128xf32>
    %cst_205 = arith.constant 1.000000e+00 : f32
    %818 = vector.broadcast %cst_205 : f32 to vector<8x128xf32>
    %819 = arith.divf %818, %817 : vector<8x128xf32>
    %820 = vector.extract_strided_slice %819 {offsets = [0, 0], sizes = [8, 32], strides = [1, 1]} : vector<8x128xf32> to vector<8x32xf32>
    %821 = vector.extract_strided_slice %819 {offsets = [0, 32], sizes = [8, 32], strides = [1, 1]} : vector<8x128xf32> to vector<8x32xf32>
    %822 = vector.extract_strided_slice %819 {offsets = [0, 96], sizes = [8, 32], strides = [1, 1]} : vector<8x128xf32> to vector<8x32xf32>
    %823 = vector.extract_strided_slice %819 {offsets = [0, 64], sizes = [8, 32], strides = [1, 1]} : vector<8x128xf32> to vector<8x32xf32>
    %cst_206 = arith.constant 2.000000e+00 : f32
    %824 = vector.broadcast %cst_206 : f32 to vector<8x32xf32>
    %825 = arith.mulf %824, %823 : vector<8x32xf32>
    %cst_207 = arith.constant 1.000000e+00 : f32
    %826 = vector.broadcast %cst_207 : f32 to vector<8x32xf32>
    %827 = arith.subf %825, %826 : vector<8x32xf32>
    %828 = arith.mulf %821, %780 : vector<8x32xf32>
    %829 = arith.mulf %820, %827 : vector<8x32xf32>
    %830 = arith.addf %828, %829 : vector<8x32xf32>
    %831 = math.tanh %830 : vector<8x32xf32>
    %832 = arith.mulf %822, %831 : vector<8x32xf32>
    %c0_208 = arith.constant 0 : index
    %c0_209 = arith.constant 0 : index
    %833 = vector.load %arg11[%c0_208, %c0_209] : memref<1x32xf32, #tpu.memory_space<vmem>>, vector<1x32xf32>
    %c0_210 = arith.constant 0 : index
    %c0_211 = arith.constant 0 : index
    %834 = vector.load %arg12[%c0_210, %c0_211] : memref<1x1xf32, #tpu.memory_space<vmem>>, vector<1x1xf32>
    %835 = vector.shape_cast %482 : vector<8x32xf32> to vector<1x8x32xf32>
    %836 = vector.shape_cast %532 : vector<8x32xf32> to vector<1x8x32xf32>
    %837 = vector.shape_cast %582 : vector<8x32xf32> to vector<1x8x32xf32>
    %838 = vector.shape_cast %632 : vector<8x32xf32> to vector<1x8x32xf32>
    %839 = vector.shape_cast %682 : vector<8x32xf32> to vector<1x8x32xf32>
    %840 = vector.shape_cast %732 : vector<8x32xf32> to vector<1x8x32xf32>
    %841 = vector.shape_cast %782 : vector<8x32xf32> to vector<1x8x32xf32>
    %842 = vector.shape_cast %832 : vector<8x32xf32> to vector<1x8x32xf32>
    %843 = tpu.concatenate %835, %836, %837, %838, %839, %840, %841, %842 in 0 : vector<1x8x32xf32>, vector<1x8x32xf32>, vector<1x8x32xf32>, vector<1x8x32xf32>, vector<1x8x32xf32>, vector<1x8x32xf32>, vector<1x8x32xf32>, vector<1x8x32xf32> -> vector<8x8x32xf32>
    %844 = vector.shape_cast %833 : vector<1x32xf32> to vector<1x32xf32>
    %845 = vector.broadcast %844 : vector<1x32xf32> to vector<8x32xf32>
    %846 = vector.shape_cast %845 : vector<8x32xf32> to vector<1x8x32xf32>
    %847 = vector.broadcast %846 : vector<1x8x32xf32> to vector<8x8x32xf32>
    %848 = arith.mulf %843, %847 : vector<8x8x32xf32>
    %cst_212 = arith.constant dense<0.000000e+00> : vector<8x8xf32>
    %849 = vector.multi_reduction <add>, %848, %cst_212 [2] : vector<8x8x32xf32> to vector<8x8xf32>
    %850 = vector.broadcast %834 : vector<1x1xf32> to vector<8x8xf32>
    %851 = arith.addf %849, %850 : vector<8x8xf32>
    %c0_213 = arith.constant 0 : index
    %c0_214 = arith.constant 0 : index
    %852 = vector.load %arg13[%c0_213, %c0_214] : memref<8x8xf32, #tpu.memory_space<vmem>>, vector<8x8xf32>
    tpu.vector_store %arg13[%c0_213, %c0_214], %851 {strides = array<i32>} : memref<8x8xf32, #tpu.memory_space<vmem>>, vector<8x8xf32>,
    return
  }
}

</mosaic_0001>

<llo_original>
// kernel: tpu_custom_call.1
$region0: #{tpu_custom_call.1}
  #allocation0 [shape = 'u32[]', space=smem, size = 0x4, offset = 0x4, fixed_abs, tag = 'smem constant byte address 0x4 - core index']
  #allocation1 [shape = 'u32[144,128]{1,0:T(1,128)}', space=vmem, size = 0x12000, scoped, tag = 'internal scratch']
  #allocation2 [shape = 'f32[1,1]{1,0:T(1,128)S(1)}', space=vmem, size = 0x200, scoped, tag = 'scoped memory for tpu_custom_call.1']
  %s0 = inlined_call_operand.vmem [shape: f32[8,8,1], index: 0, kind: input, shape index: {}]
  %s1 = inlined_call_operand.vmem [shape: f32[1,128], index: 1, kind: input, shape index: {}]
  %s2 = inlined_call_operand.vmem [shape: f32[1,128], index: 2, kind: input, shape index: {}]
  %s3 = inlined_call_operand.hbm [shape: f32[64,384], index: 3, kind: input, shape index: {}]
  %s4 = inlined_call_operand.vmem [shape: f32[1,128], index: 4, kind: input, shape index: {}]
  %s5 = inlined_call_operand.vmem [shape: f32[1,128], index: 5, kind: input, shape index: {}]
  %s6 = inlined_call_operand.vmem [shape: f32[1,128], index: 6, kind: input, shape index: {}]
  %s7 = inlined_call_operand.vmem [shape: f32[1,128], index: 7, kind: input, shape index: {}]
  %s8 = inlined_call_operand.vmem [shape: f32[32,256], index: 8, kind: input, shape index: {}]
  %s9 = inlined_call_operand.hbm [shape: f32[32,256], index: 9, kind: input, shape index: {}]
  %s10 = inlined_call_operand.vmem [shape: f32[1,128], index: 10, kind: input, shape index: {}]
  %s11 = inlined_call_operand.vmem [shape: f32[1,32], index: 11, kind: input, shape index: {}]
  %s12 = inlined_call_operand.<no memory space> [shape: f32[1,1], index: 12, kind: input, shape index: {}]
  %s13 = inlined_call_operand.hbm [shape: f32[8,8], index: 13, kind: output, shape index: {}]
  %s14 = sld [smem:[#allocation0]]
  $region70: #{tpu_custom_call.1} parent=0
    _
  %s16 = ssub.s32 1, %s14
  %s17 = scalar_select 0, %s16, %s14
  %v18 = vstv %s12
  %19 = vst [vmem:[#allocation2] sm:$0x1] %v18
  $region1: #{tpu_custom_call.1} parent=0
    #allocation3 [shape = 'u8[98304]{0}', space=vmem, size = 0x18000, scoped, tag = 'input window, operand 3, single buffered']
    #allocation4 [shape = 's32[1]{0}', space=sflag, size = 0x4, scoped, tag = 'scoped memory for tpu_custom_call.1']
    #allocation5 [shape = 's32[1]{0}', space=sflag, size = 0x4, scoped, tag = 'scoped memory for tpu_custom_call.1']
    #allocation6 [shape = 'u8[32768]{0}', space=vmem, size = 0x8000, scoped, tag = 'input window, operand 9, single buffered']
    #allocation7 [shape = 's32[1]{0}', space=sflag, size = 0x4, scoped, tag = 'scoped memory for tpu_custom_call.1']
    #allocation8 [shape = 'u8[4096]{0}', space=vmem, size = 0x1000, scoped, tag = 'output window, operand 0, single buffered']
    %20 = vsyncpa [#allocation4], 0
    %21 = vsyncpa [#allocation7], 0
    %22 = vsyncpa [#allocation5], 0
    // Predicated region
    $region2: #{tpu_custom_call.1} parent=1 // pred_check
      _
    $region3: #{tpu_custom_call.1} parent=1 // pred_check_branch
      %24 = sbr.rel (0) target = $region5
    $region4: #{tpu_custom_call.1} parent=1 // pred_region
      _
    $region5: #{tpu_custom_call.1} parent=1 // pred_fallthru
      _
    // Predicated region
    $region6: #{tpu_custom_call.1} parent=1 // pred_check
      _
    $region7: #{tpu_custom_call.1} parent=1 // pred_check_branch
      %26 = sbr.rel (0) target = $region9
    $region8: #{tpu_custom_call.1} parent=1 // pred_region
      _
    $region9: #{tpu_custom_call.1} parent=1 // pred_fallthru
      _
    // Predicated region
    $region10: #{tpu_custom_call.1} parent=1 // pred_check
      _
    $region11: #{tpu_custom_call.1} parent=1 // pred_check_branch
      %28 = sbr.rel (0) target = $region13
    $region12: #{tpu_custom_call.1} parent=1 // pred_region
      _
    $region13: #{tpu_custom_call.1} parent=1 // pred_fallthru
      _
    // Predicated region
    $region14: #{tpu_custom_call.1} parent=1 // pred_check
      _
    $region15: #{tpu_custom_call.1} parent=1 // pred_check_branch
      %30 = sbr.rel (0) target = $region17
    $region16: #{tpu_custom_call.1} parent=1 // pred_region
      %s32 = ssub.s32 3072, 3072
      %33 = vsyncadd [#allocation4], %s32
      %s34 = sshll.u32 [#allocation3], 4
      %s35 = int_to_ptr.vmem [resolvable:$true] %s34
      %40 = dma.hbm_to_vmem [thread:$0]  %s3, 3072, %s35, [#allocation4], 384, 384, 24
    $region17: #{tpu_custom_call.1} parent=1 // pred_fallthru
      _
    // Predicated region
    $region18: #{tpu_custom_call.1} parent=1 // pred_check
      _
    $region19: #{tpu_custom_call.1} parent=1 // pred_check_branch
      %42 = sbr.rel (0) target = $region21
    $region20: #{tpu_custom_call.1} parent=1 // pred_region
      _
    $region21: #{tpu_custom_call.1} parent=1 // pred_fallthru
      _
    // Predicated region
    $region22: #{tpu_custom_call.1} parent=1 // pred_check
      _
    $region23: #{tpu_custom_call.1} parent=1 // pred_check_branch
      %44 = sbr.rel (0) target = $region25
    $region24: #{tpu_custom_call.1} parent=1 // pred_region
      _
    $region25: #{tpu_custom_call.1} parent=1 // pred_fallthru
      _
    // Predicated region
    $region26: #{tpu_custom_call.1} parent=1 // pred_check
      _
    $region27: #{tpu_custom_call.1} parent=1 // pred_check_branch
      %46 = sbr.rel (0) target = $region29
    $region28: #{tpu_custom_call.1} parent=1 // pred_region
      _
    $region29: #{tpu_custom_call.1} parent=1 // pred_fallthru
      _
    // Predicated region
    $region30: #{tpu_custom_call.1} parent=1 // pred_check
      _
    $region31: #{tpu_custom_call.1} parent=1 // pred_check_branch
      %48 = sbr.rel (0) target = $region33
    $region32: #{tpu_custom_call.1} parent=1 // pred_region
      _
    $region33: #{tpu_custom_call.1} parent=1 // pred_fallthru
      _
    // Predicated region
    $region34: #{tpu_custom_call.1} parent=1 // pred_check
      _
    $region35: #{tpu_custom_call.1} parent=1 // pred_check_branch
      %50 = sbr.rel (0) target = $region37
    $region36: #{tpu_custom_call.1} parent=1 // pred_region
      _
    $region37: #{tpu_custom_call.1} parent=1 // pred_fallthru
      _
    // Predicated region
    $region38: #{tpu_custom_call.1} parent=1 // pred_check
      _
    $region39: #{tpu_custom_call.1} parent=1 // pred_check_branch
      %52 = sbr.rel (0) target = $region41
    $region40: #{tpu_custom_call.1} parent=1 // pred_region
      %s54 = ssub.s32 1024, 1024
      %55 = vsyncadd [#allocation7], %s54
      %s56 = sshll.u32 [#allocation6], 4
      %s57 = int_to_ptr.vmem [resolvable:$true] %s56
      %62 = dma.hbm_to_vmem [thread:$0]  %s9, 1024, %s57, [#allocation7], 256, 256, 16
    $region41: #{tpu_custom_call.1} parent=1 // pred_fallthru
      _
    // Predicated region
    $region42: #{tpu_custom_call.1} parent=1 // pred_check
      _
    $region43: #{tpu_custom_call.1} parent=1 // pred_check_branch
      %64 = sbr.rel (0) target = $region45
    $region44: #{tpu_custom_call.1} parent=1 // pred_region
      _
    $region45: #{tpu_custom_call.1} parent=1 // pred_fallthru
      _
    // Predicated region
    $region46: #{tpu_custom_call.1} parent=1 // pred_check
      _
    $region47: #{tpu_custom_call.1} parent=1 // pred_check_branch
      %66 = sbr.rel (0) target = $region49
    $region48: #{tpu_custom_call.1} parent=1 // pred_region
      _
    $region49: #{tpu_custom_call.1} parent=1 // pred_fallthru
      _
    // Predicated region
    $region50: #{tpu_custom_call.1} parent=1 // pred_check
      _
    $region51: #{tpu_custom_call.1} parent=1 // pred_check_branch
      %68 = sbr.rel (0) target = $region53
    $region52: #{tpu_custom_call.1} parent=1 // pred_region
      _
    $region53: #{tpu_custom_call.1} parent=1 // pred_fallthru
      _
    // Predicated region
    $region54: #{tpu_custom_call.1} parent=1 // pred_check
      _
    $region55: #{tpu_custom_call.1} parent=1 // pred_check_branch
      %70 = sbr.rel (0) target = $region57
    $region56: #{tpu_custom_call.1} parent=1 // pred_region
      %71 = dma.done [#allocation4], 3072
    $region57: #{tpu_custom_call.1} parent=1 // pred_fallthru
      _
    // Predicated region
    $region58: #{tpu_custom_call.1} parent=1 // pred_check
      _
    $region59: #{tpu_custom_call.1} parent=1 // pred_check_branch
      %73 = sbr.rel (0) target = $region61
    $region60: #{tpu_custom_call.1} parent=1 // pred_region
      %74 = dma.done [#allocation7], 1024
    $region61: #{tpu_custom_call.1} parent=1 // pred_fallthru
      _
    %v75 = vld [vmem:[%s0] sm:$0xff]
    %v76 = vld [vmem:[%s0 + $0x8] sm:$0xff]
    %v77 = vld [vmem:[%s0 + $0x10] sm:$0xff]
    %v78 = vld [vmem:[%s0 + $0x18] sm:$0xff]
    %v79 = vld [vmem:[%s0 + $0x20] sm:$0xff]
    %v80 = vld [vmem:[%s0 + $0x28] sm:$0xff]
    %v81 = vld [vmem:[%s0 + $0x30] sm:$0xff]
    %v82 = vld [vmem:[%s0 + $0x38] sm:$0xff]
    %v83 = vld [vmem:[%s1] sm:$0x1]
    %85 = vset.pattern.permute.xlu0 0
    %86 = vperm.xlu0 %85, %v75
    %v87 = vpop.permute.xlu0 %86
    %90 = vset.pattern.permute.xlu0 0
    %91 = vperm.xlu0 %90, %v76
    %v92 = vpop.permute.xlu0 %91
    %95 = vset.pattern.permute.xlu0 0
    %96 = vperm.xlu0 %95, %v77
    %v97 = vpop.permute.xlu0 %96
    %100 = vset.pattern.permute.xlu0 0
    %101 = vperm.xlu0 %100, %v78
    %v102 = vpop.permute.xlu0 %101
    %105 = vset.pattern.permute.xlu0 0
    %106 = vperm.xlu0 %105, %v79
    %v107 = vpop.permute.xlu0 %106
    %110 = vset.pattern.permute.xlu0 0
    %111 = vperm.xlu0 %110, %v80
    %v112 = vpop.permute.xlu0 %111
    %115 = vset.pattern.permute.xlu0 0
    %116 = vperm.xlu0 %115, %v81
    %v117 = vpop.permute.xlu0 %116
    %120 = vset.pattern.permute.xlu0 0
    %121 = vperm.xlu0 %120, %v82
    %v122 = vpop.permute.xlu0 %121
    %v125 = vlaneseq
    %v126 = vshrl.u32 %v125, 7
    %v127 = vsub.s32 0, %v126
    %v128 = vrot.slane %v83, %v127
    %v130 = vmul.f32 %v87, %v128
    %v131 = vmul.f32 %v92, %v128
    %v132 = vmul.f32 %v97, %v128
    %v133 = vmul.f32 %v102, %v128
    %v134 = vmul.f32 %v107, %v128
    %v135 = vmul.f32 %v112, %v128
    %v136 = vmul.f32 %v117, %v128
    %v137 = vmul.f32 %v122, %v128
    %v138 = vld [vmem:[%s2] sm:$0x1]
    %v140 = vlaneseq
    %v141 = vshrl.u32 %v140, 7
    %v142 = vsub.s32 0, %v141
    %v143 = vrot.slane %v138, %v142
    %v145 = vadd.f32 %v130, %v143
    %v146 = vadd.f32 %v131, %v143
    %v147 = vadd.f32 %v132, %v143
    %v148 = vadd.f32 %v133, %v143
    %v149 = vadd.f32 %v134, %v143
    %v150 = vadd.f32 %v135, %v143
    %v151 = vadd.f32 %v136, %v143
    %v152 = vadd.f32 %v137, %v143
    %v153 = vld [vmem:[%s4] sm:$0x1]
    %v155 = vlaneseq
    %v156 = vshrl.u32 %v155, 7
    %v157 = vsub.s32 0, %v156
    %v158 = vrot.slane %v153, %v157
    %v160 = vld [vmem:[#allocation3] sm:$0xff]
    %v161 = vld [vmem:[#allocation3 + $0x8] sm:$0xff]
    %v162 = vld [vmem:[#allocation3 + $0x10] sm:$0xff]
    %v163 = vld [vmem:[#allocation3 + $0x18] sm:$0xff]
    %v164 = vld [vmem:[#allocation3 + $0x20] sm:$0xff]
    %v165 = vld [vmem:[#allocation3 + $0x28] sm:$0xff]
    %v166 = vld [vmem:[#allocation3 + $0x30] sm:$0xff]
    %v167 = vld [vmem:[#allocation3 + $0x38] sm:$0xff]
    %v168 = vld [vmem:[#allocation3 + $0x40] sm:$0xff]
    %v169 = vld [vmem:[#allocation3 + $0x48] sm:$0xff]
    %v170 = vld [vmem:[#allocation3 + $0x50] sm:$0xff]
    %v171 = vld [vmem:[#allocation3 + $0x58] sm:$0xff]
    %v172 = vld [vmem:[#allocation3 + $0x60] sm:$0xff]
    %v173 = vld [vmem:[#allocation3 + $0x68] sm:$0xff]
    %v174 = vld [vmem:[#allocation3 + $0x70] sm:$0xff]
    %v175 = vld [vmem:[#allocation3 + $0x78] sm:$0xff]
    %v176 = vld [vmem:[#allocation3 + $0x80] sm:$0xff]
    %v177 = vld [vmem:[#allocation3 + $0x88] sm:$0xff]
    %v178 = vld [vmem:[#allocation3 + $0x90] sm:$0xff]
    %v179 = vld [vmem:[#allocation3 + $0x98] sm:$0xff]
    %v180 = vld [vmem:[#allocation3 + $0xa0] sm:$0xff]
    %v181 = vld [vmem:[#allocation3 + $0xa8] sm:$0xff]
    %v182 = vld [vmem:[#allocation3 + $0xb0] sm:$0xff]
    %v183 = vld [vmem:[#allocation3 + $0xb8] sm:$0xff]
    %vm184 = vcmask 523264
    %v186 = vsel %vm184, 0.0, 0
    %188 = vmatprep.subr.mxu0 %v161
    %189 = vmatpush1.msra.mxu0 %v160
    %190 = vmatprep.subr.mxu0 %v164
    %191 = vmatpush1.msra.mxu0 %v163
    %192 = vmatprep.subr.mxu0 %v167
    %193 = vmatpush1.msra.mxu0 %v166
    %194 = vmatprep.subr.mxu0 %v170
    %195 = vmatpush1.msra.mxu0 %v169
    %196 = vmatprep.subr.mxu0 %v173
    %197 = vmatpush1.msra.mxu0 %v172
    %198 = vmatprep.subr.mxu0 %v176
    %199 = vmatpush1.msra.mxu0 %v175
    %200 = vmatprep.subr.mxu0 %v179
    %201 = vmatpush1.msra.mxu0 %v178
    %202 = vmatprep.subr.mxu0 %v182
    %203 = vmatpush1.msra.mxu0 %v181
    %204 = vmatprep.subr.mxu0 0.0
    %205 = vmatpush1.msra.mxu0 0.0
    %206 = vmatprep.subr.mxu0 0.0
    %207 = vmatpush1.msra.mxu0 0.0
    %208 = vmatprep.subr.mxu0 0.0
    %209 = vmatpush1.msra.mxu0 0.0
    %210 = vmatprep.subr.mxu0 0.0
    %211 = vmatpush1.msra.mxu0 0.0
    %212 = vmatprep.subr.mxu0 0.0
    %213 = vmatpush1.msra.mxu0 0.0
    %214 = vmatprep.subr.mxu0 0.0
    %215 = vmatpush1.msra.mxu0 0.0
    %216 = vmatprep.subr.mxu0 0.0
    %217 = vmatpush1.msra.mxu0 0.0
    %218 = vmatprep.subr.mxu0 0.0
    %219 = vmatpush1.msra.mxu0 0.0
    %220 = vmatprep.subr.mxu0 0.0
    %221 = vmatpush1.msra.mxu0 0.0
    %222 = vmatprep.subr.mxu0 0.0
    %223 = vmatpush1.msra.mxu0 0.0
    %224 = vmatprep.subr.mxu0 0.0
    %225 = vmatpush1.msra.mxu0 0.0
    %226 = vmatprep.subr.mxu0 0.0
    %227 = vmatpush1.msra.mxu0 0.0
    %228 = vmatprep.subr.mxu0 0.0
    %229 = vmatpush1.msra.mxu0 0.0
    %230 = vmatprep.subr.mxu0 0.0
    %231 = vmatpush1.msra.mxu0 0.0
    %232 = vmatprep.subr.mxu0 0.0
    %233 = vmatpush1.msra.mxu0 0.0
    %234 = vmatprep.subr.mxu0 0.0
    %235 = vmatpush1.msra.mxu0 0.0
    %236 = vmatprep.subr.mxu0 0.0
    %237 = vmatpush1.msra.mxu0 0.0
    %238 = vmatprep.subr.mxu0 0.0
    %239 = vmatpush1.msra.mxu0 0.0
    %240 = vmatprep.subr.mxu0 0.0
    %241 = vmatpush1.msra.mxu0 0.0
    %242 = vmatprep.subr.mxu0 0.0
    %243 = vmatpush1.msra.mxu0 0.0
    %244 = vmatprep.subr.mxu0 0.0
    %245 = vmatpush1.msra.mxu0 0.0
    %246 = vmatprep.subr.mxu0 0.0
    %247 = vmatpush1.msra.mxu0 0.0
    %248 = vmatprep.subr.mxu0 0.0
    %249 = vmatpush1.msra.mxu0 0.0
    %250 = vmatprep.subr.mxu0 0.0
    %251 = vmatpush1.msra.mxu0 0.0
    %252 = vmatprep.mubr.f32.mxu0 0.0
    %253 = vmatmul.mubr.f32.gmra.mrb[0].mxu0 %v186
    %v254 = vpop.f32.mrb[0].mxu0
    %v255 = vadd.f32 0.0, %v254
    %v256 = vpop.f32.mrb[0].mxu0
    %257 = vdwg.mxu0
    %v258 = vadd.f32 %v145, %v255
    %v259 = vsub.f32 0.0, %v258
    %v260 = vmul.f32 %v259, 1.442695
    %v261 = vpow.pop %v260
    %v262 = vadd.f32 %v261, 1.0
    %v263 = vrcp.pop %v262
    %v264 = vmul.f32 1.0, %v263
    %v265 = vmul.f32 %v264, 2.0
    %v266 = vsub.f32 %v265, 1.0
    %v267 = vmul.f32 %v264, 0.0
    %269 = vrot.lane.b32.xlu0 %v266, 64
    %v270 = vpop.permute.xlu0 %269
    %v272 = vmul.f32 %v264, %v270
    %274 = vrot.lane.b32.xlu0 %v272, 32
    %v275 = vpop.permute.xlu0 %274
    %v277 = vadd.f32 %v267, %v275
    %v278 = vtanh.pop %v277
    %280 = vrot.lane.b32.xlu0 %v278, 64
    %v281 = vpop.permute.xlu0 %280
    %v283 = vmul.f32 %v264, %v281
    %285 = vrot.lane.b32.xlu0 %v283, 32
    %v286 = vpop.permute.xlu0 %285
    %vm288 = vcmask 261120
    %v289 = vsel %vm288, %v286, 0.0
    %v291 = vsel %vm184, %v289, 0
    %293 = vmatprep.subr.mxu0 %v161
    %294 = vmatpush1.msra.mxu0 %v160
    %295 = vmatprep.subr.mxu0 %v164
    %296 = vmatpush1.msra.mxu0 %v163
    %297 = vmatprep.subr.mxu0 %v167
    %298 = vmatpush1.msra.mxu0 %v166
    %299 = vmatprep.subr.mxu0 %v170
    %300 = vmatpush1.msra.mxu0 %v169
    %301 = vmatprep.subr.mxu0 %v173
    %302 = vmatpush1.msra.mxu0 %v172
    %303 = vmatprep.subr.mxu0 %v176
    %304 = vmatpush1.msra.mxu0 %v175
    %305 = vmatprep.subr.mxu0 %v179
    %306 = vmatpush1.msra.mxu0 %v178
    %307 = vmatprep.subr.mxu0 %v182
    %308 = vmatpush1.msra.mxu0 %v181
    %309 = vmatprep.subr.mxu0 0.0
    %310 = vmatpush1.msra.mxu0 0.0
    %311 = vmatprep.subr.mxu0 0.0
    %312 = vmatpush1.msra.mxu0 0.0
    %313 = vmatprep.subr.mxu0 0.0
    %314 = vmatpush1.msra.mxu0 0.0
    %315 = vmatprep.subr.mxu0 0.0
    %316 = vmatpush1.msra.mxu0 0.0
    %317 = vmatprep.subr.mxu0 0.0
    %318 = vmatpush1.msra.mxu0 0.0
    %319 = vmatprep.subr.mxu0 0.0
    %320 = vmatpush1.msra.mxu0 0.0
    %321 = vmatprep.subr.mxu0 0.0
    %322 = vmatpush1.msra.mxu0 0.0
    %323 = vmatprep.subr.mxu0 0.0
    %324 = vmatpush1.msra.mxu0 0.0
    %325 = vmatprep.subr.mxu0 0.0
    %326 = vmatpush1.msra.mxu0 0.0
    %327 = vmatprep.subr.mxu0 0.0
    %328 = vmatpush1.msra.mxu0 0.0
    %329 = vmatprep.subr.mxu0 0.0
    %330 = vmatpush1.msra.mxu0 0.0
    %331 = vmatprep.subr.mxu0 0.0
    %332 = vmatpush1.msra.mxu0 0.0
    %333 = vmatprep.subr.mxu0 0.0
    %334 = vmatpush1.msra.mxu0 0.0
    %335 = vmatprep.subr.mxu0 0.0
    %336 = vmatpush1.msra.mxu0 0.0
    %337 = vmatprep.subr.mxu0 0.0
    %338 = vmatpush1.msra.mxu0 0.0
    %339 = vmatprep.subr.mxu0 0.0
    %340 = vmatpush1.msra.mxu0 0.0
    %341 = vmatprep.subr.mxu0 0.0
    %342 = vmatpush1.msra.mxu0 0.0
    %343 = vmatprep.subr.mxu0 0.0
    %344 = vmatpush1.msra.mxu0 0.0
    %345 = vmatprep.subr.mxu0 0.0
    %346 = vmatpush1.msra.mxu0 0.0
    %347 = vmatprep.subr.mxu0 0.0
    %348 = vmatpush1.msra.mxu0 0.0
    %349 = vmatprep.subr.mxu0 0.0
    %350 = vmatpush1.msra.mxu0 0.0
    %351 = vmatprep.subr.mxu0 0.0
    %352 = vmatpush1.msra.mxu0 0.0
    %353 = vmatprep.subr.mxu0 0.0
    %354 = vmatpush1.msra.mxu0 0.0
    %355 = vmatprep.subr.mxu0 0.0
    %356 = vmatpush1.msra.mxu0 0.0
    %357 = vmatprep.mubr.f32.mxu0 0.0
    %358 = vmatmul.mubr.f32.gmra.mrb[0].mxu0 %v291
    %v359 = vpop.f32.mrb[0].mxu0
    %v360 = vadd.f32 0.0, %v359
    %v361 = vpop.f32.mrb[0].mxu0
    %v362 = vadd.f32 0.0, %v361
    %363 = vdwg.mxu0
    %364 = vmatprep.subr.mxu0 0.0
    %365 = vmatpush1.msra.mxu0 %v162
    %366 = vmatprep.subr.mxu0 0.0
    %367 = vmatpush1.msra.mxu0 %v165
    %368 = vmatprep.subr.mxu0 0.0
    %369 = vmatpush1.msra.mxu0 %v168
    %370 = vmatprep.subr.mxu0 0.0
    %371 = vmatpush1.msra.mxu0 %v171
    %372 = vmatprep.subr.mxu0 0.0
    %373 = vmatpush1.msra.mxu0 %v174
    %374 = vmatprep.subr.mxu0 0.0
    %375 = vmatpush1.msra.mxu0 %v177
    %376 = vmatprep.subr.mxu0 0.0
    %377 = vmatpush1.msra.mxu0 %v180
    %378 = vmatprep.subr.mxu0 0.0
    %379 = vmatpush1.msra.mxu0 %v183
    %380 = vmatprep.subr.mxu0 0.0
    %381 = vmatpush1.msra.mxu0 0.0
    %382 = vmatprep.subr.mxu0 0.0
    %383 = vmatpush1.msra.mxu0 0.0
    %384 = vmatprep.subr.mxu0 0.0
    %385 = vmatpush1.msra.mxu0 0.0
    %386 = vmatprep.subr.mxu0 0.0
    %387 = vmatpush1.msra.mxu0 0.0
    %388 = vmatprep.subr.mxu0 0.0
    %389 = vmatpush1.msra.mxu0 0.0
    %390 = vmatprep.subr.mxu0 0.0
    %391 = vmatpush1.msra.mxu0 0.0
    %392 = vmatprep.subr.mxu0 0.0
    %393 = vmatpush1.msra.mxu0 0.0
    %394 = vmatprep.subr.mxu0 0.0
    %395 = vmatpush1.msra.mxu0 0.0
    %396 = vmatprep.subr.mxu0 0.0
    %397 = vmatpush1.msra.mxu0 0.0
    %398 = vmatprep.subr.mxu0 0.0
    %399 = vmatpush1.msra.mxu0 0.0
    %400 = vmatprep.subr.mxu0 0.0
    %401 = vmatpush1.msra.mxu0 0.0
    %402 = vmatprep.subr.mxu0 0.0
    %403 = vmatpush1.msra.mxu0 0.0
    %404 = vmatprep.subr.mxu0 0.0
    %405 = vmatpush1.msra.mxu0 0.0
    %406 = vmatprep.subr.mxu0 0.0
    %407 = vmatpush1.msra.mxu0 0.0
    %408 = vmatprep.subr.mxu0 0.0
    %409 = vmatpush1.msra.mxu0 0.0
    %410 = vmatprep.subr.mxu0 0.0
    %411 = vmatpush1.msra.mxu0 0.0
    %412 = vmatprep.subr.mxu0 0.0
    %413 = vmatpush1.msra.mxu0 0.0
    %414 = vmatprep.subr.mxu0 0.0
    %415 = vmatpush1.msra.mxu0 0.0
    %416 = vmatprep.subr.mxu0 0.0
    %417 = vmatpush1.msra.mxu0 0.0
    %418 = vmatprep.subr.mxu0 0.0
    %419 = vmatpush1.msra.mxu0 0.0
    %420 = vmatprep.subr.mxu0 0.0
    %421 = vmatpush1.msra.mxu0 0.0
    %422 = vmatprep.subr.mxu0 0.0
    %423 = vmatpush1.msra.mxu0 0.0
    %424 = vmatprep.subr.mxu0 0.0
    %425 = vmatpush1.msra.mxu0 0.0
    %426 = vmatprep.subr.mxu0 0.0
    %427 = vmatpush1.msra.mxu0 0.0
    %428 = vmatprep.mubr.f32.mxu0 0.0
    %429 = vmatmul.mubr.f32.gmra.mrb[0].mxu0 %v291
    %v430 = vpop.f32.mrb[0].mxu0
    %v431 = vadd.f32 0.0, %v430
    %v432 = vpop.f32.mrb[0].mxu0
    %433 = vdwg.mxu0
    %v434 = vadd.f32 %v362, %v431
    %v435 = vadd.f32 %v434, %v158
    %v436 = vsub.f32 0.0, %v435
    %v437 = vmul.f32 %v436, 1.442695
    %v438 = vpow.pop %v437
    %v439 = vadd.f32 %v438, 1.0
    %v440 = vrcp.pop %v439
    %v441 = vmul.f32 1.0, %v440
    %v442 = vmul.f32 %v441, 2.0
    %v443 = vsub.f32 %v442, 1.0
    %v444 = vmul.f32 %v441, 0.0
    %446 = vrot.lane.b32.xlu0 %v443, 64
    %v447 = vpop.permute.xlu0 %446
    %v449 = vmul.f32 %v441, %v447
    %451 = vrot.lane.b32.xlu0 %v449, 32
    %v452 = vpop.permute.xlu0 %451
    %v454 = vadd.f32 %v444, %v452
    %v455 = vtanh.pop %v454
    %457 = vrot.lane.b32.xlu0 %v455, 64
    %v458 = vpop.permute.xlu0 %457
    %v460 = vmul.f32 %v441, %v458
    %v461 = vadd.f32 %v146, %v360
    %v462 = vsub.f32 0.0, %v461
    %v463 = vmul.f32 %v462, 1.442695
    %v464 = vpow.pop %v463
    %v465 = vadd.f32 %v464, 1.0
    %v466 = vrcp.pop %v465
    %v467 = vmul.f32 1.0, %v466
    %v468 = vmul.f32 %v467, 2.0
    %v469 = vsub.f32 %v468, 1.0
    %v470 = vmul.f32 %v467, %v277
    %472 = vrot.lane.b32.xlu0 %v469, 64
    %v473 = vpop.permute.xlu0 %472
    %v475 = vmul.f32 %v467, %v473
    %477 = vrot.lane.b32.xlu0 %v475, 32
    %v478 = vpop.permute.xlu0 %477
    %v480 = vadd.f32 %v470, %v478
    %v481 = vtanh.pop %v480
    %483 = vrot.lane.b32.xlu0 %v481, 64
    %v484 = vpop.permute.xlu0 %483
    %v486 = vmul.f32 %v467, %v484
    %488 = vrot.lane.b32.xlu0 %v486, 32
    %v489 = vpop.permute.xlu0 %488
    %492 = vrot.lane.b32.xlu0 %v460, 64
    %v493 = vpop.permute.xlu0 %492
    %v495 = vsel %vm288, %v489, %v493
    %v497 = vsel %vm184, %v495, 0
    %499 = vmatprep.subr.mxu0 %v161
    %500 = vmatpush1.msra.mxu0 %v160
    %501 = vmatprep.subr.mxu0 %v164
    %502 = vmatpush1.msra.mxu0 %v163
    %503 = vmatprep.subr.mxu0 %v167
    %504 = vmatpush1.msra.mxu0 %v166
    %505 = vmatprep.subr.mxu0 %v170
    %506 = vmatpush1.msra.mxu0 %v169
    %507 = vmatprep.subr.mxu0 %v173
    %508 = vmatpush1.msra.mxu0 %v172
    %509 = vmatprep.subr.mxu0 %v176
    %510 = vmatpush1.msra.mxu0 %v175
    %511 = vmatprep.subr.mxu0 %v179
    %512 = vmatpush1.msra.mxu0 %v178
    %513 = vmatprep.subr.mxu0 %v182
    %514 = vmatpush1.msra.mxu0 %v181
    %515 = vmatprep.subr.mxu0 0.0
    %516 = vmatpush1.msra.mxu0 0.0
    %517 = vmatprep.subr.mxu0 0.0
    %518 = vmatpush1.msra.mxu0 0.0
    %519 = vmatprep.subr.mxu0 0.0
    %520 = vmatpush1.msra.mxu0 0.0
    %521 = vmatprep.subr.mxu0 0.0
    %522 = vmatpush1.msra.mxu0 0.0
    %523 = vmatprep.subr.mxu0 0.0
    %524 = vmatpush1.msra.mxu0 0.0
    %525 = vmatprep.subr.mxu0 0.0
    %526 = vmatpush1.msra.mxu0 0.0
    %527 = vmatprep.subr.mxu0 0.0
    %528 = vmatpush1.msra.mxu0 0.0
    %529 = vmatprep.subr.mxu0 0.0
    %530 = vmatpush1.msra.mxu0 0.0
    %531 = vmatprep.subr.mxu0 0.0
    %532 = vmatpush1.msra.mxu0 0.0
    %533 = vmatprep.subr.mxu0 0.0
    %534 = vmatpush1.msra.mxu0 0.0
    %535 = vmatprep.subr.mxu0 0.0
    %536 = vmatpush1.msra.mxu0 0.0
    %537 = vmatprep.subr.mxu0 0.0
    %538 = vmatpush1.msra.mxu0 0.0
    %539 = vmatprep.subr.mxu0 0.0
    %540 = vmatpush1.msra.mxu0 0.0
    %541 = vmatprep.subr.mxu0 0.0
    %542 = vmatpush1.msra.mxu0 0.0
    %543 = vmatprep.subr.mxu0 0.0
    %544 = vmatpush1.msra.mxu0 0.0
    %545 = vmatprep.subr.mxu0 0.0
    %546 = vmatpush1.msra.mxu0 0.0
    %547 = vmatprep.subr.mxu0 0.0
    %548 = vmatpush1.msra.mxu0 0.0
    %549 = vmatprep.subr.mxu0 0.0
    %550 = vmatpush1.msra.mxu0 0.0
    %551 = vmatprep.subr.mxu0 0.0
    %552 = vmatpush1.msra.mxu0 0.0
    %553 = vmatprep.subr.mxu0 0.0
    %554 = vmatpush1.msra.mxu0 0.0
    %555 = vmatprep.subr.mxu0 0.0
    %556 = vmatpush1.msra.mxu0 0.0
    %557 = vmatprep.subr.mxu0 0.0
    %558 = vmatpush1.msra.mxu0 0.0
    %559 = vmatprep.subr.mxu0 0.0
    %560 = vmatpush1.msra.mxu0 0.0
    %561 = vmatprep.subr.mxu0 0.0
    %562 = vmatpush1.msra.mxu0 0.0
    %563 = vmatprep.mubr.f32.mxu0 0.0
    %564 = vmatmul.mubr.f32.gmra.mrb[0].mxu0 %v497
    %v565 = vpop.f32.mrb[0].mxu0
    %v566 = vadd.f32 0.0, %v565
    %v567 = vpop.f32.mrb[0].mxu0
    %v568 = vadd.f32 0.0, %v567
    %569 = vdwg.mxu0
    %570 = vmatprep.subr.mxu0 0.0
    %571 = vmatpush1.msra.mxu0 %v162
    %572 = vmatprep.subr.mxu0 0.0
    %573 = vmatpush1.msra.mxu0 %v165
    %574 = vmatprep.subr.mxu0 0.0
    %575 = vmatpush1.msra.mxu0 %v168
    %576 = vmatprep.subr.mxu0 0.0
    %577 = vmatpush1.msra.mxu0 %v171
    %578 = vmatprep.subr.mxu0 0.0
    %579 = vmatpush1.msra.mxu0 %v174
    %580 = vmatprep.subr.mxu0 0.0
    %581 = vmatpush1.msra.mxu0 %v177
    %582 = vmatprep.subr.mxu0 0.0
    %583 = vmatpush1.msra.mxu0 %v180
    %584 = vmatprep.subr.mxu0 0.0
    %585 = vmatpush1.msra.mxu0 %v183
    %586 = vmatprep.subr.mxu0 0.0
    %587 = vmatpush1.msra.mxu0 0.0
    %588 = vmatprep.subr.mxu0 0.0
    %589 = vmatpush1.msra.mxu0 0.0
    %590 = vmatprep.subr.mxu0 0.0
    %591 = vmatpush1.msra.mxu0 0.0
    %592 = vmatprep.subr.mxu0 0.0
    %593 = vmatpush1.msra.mxu0 0.0
    %594 = vmatprep.subr.mxu0 0.0
    %595 = vmatpush1.msra.mxu0 0.0
    %596 = vmatprep.subr.mxu0 0.0
    %597 = vmatpush1.msra.mxu0 0.0
    %598 = vmatprep.subr.mxu0 0.0
    %599 = vmatpush1.msra.mxu0 0.0
    %600 = vmatprep.subr.mxu0 0.0
    %601 = vmatpush1.msra.mxu0 0.0
    %602 = vmatprep.subr.mxu0 0.0
    %603 = vmatpush1.msra.mxu0 0.0
    %604 = vmatprep.subr.mxu0 0.0
    %605 = vmatpush1.msra.mxu0 0.0
    %606 = vmatprep.subr.mxu0 0.0
    %607 = vmatpush1.msra.mxu0 0.0
    %608 = vmatprep.subr.mxu0 0.0
    %609 = vmatpush1.msra.mxu0 0.0
    %610 = vmatprep.subr.mxu0 0.0
    %611 = vmatpush1.msra.mxu0 0.0
    %612 = vmatprep.subr.mxu0 0.0
    %613 = vmatpush1.msra.mxu0 0.0
    %614 = vmatprep.subr.mxu0 0.0
    %615 = vmatpush1.msra.mxu0 0.0
    %616 = vmatprep.subr.mxu0 0.0
    %617 = vmatpush1.msra.mxu0 0.0
    %618 = vmatprep.subr.mxu0 0.0
    %619 = vmatpush1.msra.mxu0 0.0
    %620 = vmatprep.subr.mxu0 0.0
    %621 = vmatpush1.msra.mxu0 0.0
    %622 = vmatprep.subr.mxu0 0.0
    %623 = vmatpush1.msra.mxu0 0.0
    %624 = vmatprep.subr.mxu0 0.0
    %625 = vmatpush1.msra.mxu0 0.0
    %626 = vmatprep.subr.mxu0 0.0
    %627 = vmatpush1.msra.mxu0 0.0
    %628 = vmatprep.subr.mxu0 0.0
    %629 = vmatpush1.msra.mxu0 0.0
    %630 = vmatprep.subr.mxu0 0.0
    %631 = vmatpush1.msra.mxu0 0.0
    %632 = vmatprep.subr.mxu0 0.0
    %633 = vmatpush1.msra.mxu0 0.0
    %634 = vmatprep.mubr.f32.mxu0 0.0
    %635 = vmatmul.mubr.f32.gmra.mrb[0].mxu0 %v497
    %v636 = vpop.f32.mrb[0].mxu0
    %v637 = vadd.f32 0.0, %v636
    %v638 = vpop.f32.mrb[0].mxu0
    %639 = vdwg.mxu0
    %v640 = vadd.f32 %v568, %v637
    %v641 = vadd.f32 %v640, %v158
    %v642 = vsub.f32 0.0, %v641
    %v643 = vmul.f32 %v642, 1.442695
    %v644 = vpow.pop %v643
    %v645 = vadd.f32 %v644, 1.0
    %v646 = vrcp.pop %v645
    %v647 = vmul.f32 1.0, %v646
    %v648 = vmul.f32 %v647, 2.0
    %v649 = vsub.f32 %v648, 1.0
    %v650 = vmul.f32 %v647, %v454
    %652 = vrot.lane.b32.xlu0 %v649, 64
    %v653 = vpop.permute.xlu0 %652
    %v655 = vmul.f32 %v647, %v653
    %657 = vrot.lane.b32.xlu0 %v655, 32
    %v658 = vpop.permute.xlu0 %657
    %v660 = vadd.f32 %v650, %v658
    %v661 = vtanh.pop %v660
    %663 = vrot.lane.b32.xlu0 %v661, 64
    %v664 = vpop.permute.xlu0 %663
    %v666 = vmul.f32 %v647, %v664
    %v667 = vadd.f32 %v147, %v566
    %v668 = vsub.f32 0.0, %v667
    %v669 = vmul.f32 %v668, 1.442695
    %v670 = vpow.pop %v669
    %v671 = vadd.f32 %v670, 1.0
    %v672 = vrcp.pop %v671
    %v673 = vmul.f32 1.0, %v672
    %v674 = vmul.f32 %v673, 2.0
    %v675 = vsub.f32 %v674, 1.0
    %v676 = vmul.f32 %v673, %v480
    %678 = vrot.lane.b32.xlu0 %v675, 64
    %v679 = vpop.permute.xlu0 %678
    %v681 = vmul.f32 %v673, %v679
    %683 = vrot.lane.b32.xlu0 %v681, 32
    %v684 = vpop.permute.xlu0 %683
    %v686 = vadd.f32 %v676, %v684
    %v687 = vtanh.pop %v686
    %689 = vrot.lane.b32.xlu0 %v687, 64
    %v690 = vpop.permute.xlu0 %689
    %v692 = vmul.f32 %v673, %v690
    %694 = vrot.lane.b32.xlu0 %v692, 32
    %v695 = vpop.permute.xlu0 %694
    %698 = vrot.lane.b32.xlu0 %v666, 64
    %v699 = vpop.permute.xlu0 %698
    %v701 = vsel %vm288, %v695, %v699
    %v703 = vsel %vm184, %v701, 0
    %705 = vmatprep.subr.mxu0 %v161
    %706 = vmatpush1.msra.mxu0 %v160
    %707 = vmatprep.subr.mxu0 %v164
    %708 = vmatpush1.msra.mxu0 %v163
    %709 = vmatprep.subr.mxu0 %v167
    %710 = vmatpush1.msra.mxu0 %v166
    %711 = vmatprep.subr.mxu0 %v170
    %712 = vmatpush1.msra.mxu0 %v169
    %713 = vmatprep.subr.mxu0 %v173
    %714 = vmatpush1.msra.mxu0 %v172
    %715 = vmatprep.subr.mxu0 %v176
    %716 = vmatpush1.msra.mxu0 %v175
    %717 = vmatprep.subr.mxu0 %v179
    %718 = vmatpush1.msra.mxu0 %v178
    %719 = vmatprep.subr.mxu0 %v182
    %720 = vmatpush1.msra.mxu0 %v181
    %721 = vmatprep.subr.mxu0 0.0
    %722 = vmatpush1.msra.mxu0 0.0
    %723 = vmatprep.subr.mxu0 0.0
    %724 = vmatpush1.msra.mxu0 0.0
    %725 = vmatprep.subr.mxu0 0.0
    %726 = vmatpush1.msra.mxu0 0.0
    %727 = vmatprep.subr.mxu0 0.0
    %728 = vmatpush1.msra.mxu0 0.0
    %729 = vmatprep.subr.mxu0 0.0
    %730 = vmatpush1.msra.mxu0 0.0
    %731 = vmatprep.subr.mxu0 0.0
    %732 = vmatpush1.msra.mxu0 0.0
    %733 = vmatprep.subr.mxu0 0.0
    %734 = vmatpush1.msra.mxu0 0.0
    %735 = vmatprep.subr.mxu0 0.0
    %736 = vmatpush1.msra.mxu0 0.0
    %737 = vmatprep.subr.mxu0 0.0
    %738 = vmatpush1.msra.mxu0 0.0
    %739 = vmatprep.subr.mxu0 0.0
    %740 = vmatpush1.msra.mxu0 0.0
    %741 = vmatprep.subr.mxu0 0.0
    %742 = vmatpush1.msra.mxu0 0.0
    %743 = vmatprep.subr.mxu0 0.0
    %744 = vmatpush1.msra.mxu0 0.0
    %745 = vmatprep.subr.mxu0 0.0
    %746 = vmatpush1.msra.mxu0 0.0
    %747 = vmatprep.subr.mxu0 0.0
    %748 = vmatpush1.msra.mxu0 0.0
    %749 = vmatprep.subr.mxu0 0.0
    %750 = vmatpush1.msra.mxu0 0.0
    %751 = vmatprep.subr.mxu0 0.0
    %752 = vmatpush1.msra.mxu0 0.0
    %753 = vmatprep.subr.mxu0 0.0
    %754 = vmatpush1.msra.mxu0 0.0
    %755 = vmatprep.subr.mxu0 0.0
    %756 = vmatpush1.msra.mxu0 0.0
    %757 = vmatprep.subr.mxu0 0.0
    %758 = vmatpush1.msra.mxu0 0.0
    %759 = vmatprep.subr.mxu0 0.0
    %760 = vmatpush1.msra.mxu0 0.0
    %761 = vmatprep.subr.mxu0 0.0
    %762 = vmatpush1.msra.mxu0 0.0
    %763 = vmatprep.subr.mxu0 0.0
    %764 = vmatpush1.msra.mxu0 0.0
    %765 = vmatprep.subr.mxu0 0.0
    %766 = vmatpush1.msra.mxu0 0.0
    %767 = vmatprep.subr.mxu0 0.0
    %768 = vmatpush1.msra.mxu0 0.0
    %769 = vmatprep.mubr.f32.mxu0 0.0
    %770 = vmatmul.mubr.f32.gmra.mrb[0].mxu0 %v703
    %v771 = vpop.f32.mrb[0].mxu0
    %v772 = vadd.f32 0.0, %v771
    %v773 = vpop.f32.mrb[0].mxu0
    %v774 = vadd.f32 0.0, %v773
    %775 = vdwg.mxu0
    %776 = vmatprep.subr.mxu0 0.0
    %777 = vmatpush1.msra.mxu0 %v162
    %778 = vmatprep.subr.mxu0 0.0
    %779 = vmatpush1.msra.mxu0 %v165
    %780 = vmatprep.subr.mxu0 0.0
    %781 = vmatpush1.msra.mxu0 %v168
    %782 = vmatprep.subr.mxu0 0.0
    %783 = vmatpush1.msra.mxu0 %v171
    %784 = vmatprep.subr.mxu0 0.0
    %785 = vmatpush1.msra.mxu0 %v174
    %786 = vmatprep.subr.mxu0 0.0
    %787 = vmatpush1.msra.mxu0 %v177
    %788 = vmatprep.subr.mxu0 0.0
    %789 = vmatpush1.msra.mxu0 %v180
    %790 = vmatprep.subr.mxu0 0.0
    %791 = vmatpush1.msra.mxu0 %v183
    %792 = vmatprep.subr.mxu0 0.0
    %793 = vmatpush1.msra.mxu0 0.0
    %794 = vmatprep.subr.mxu0 0.0
    %795 = vmatpush1.msra.mxu0 0.0
    %796 = vmatprep.subr.mxu0 0.0
    %797 = vmatpush1.msra.mxu0 0.0
    %798 = vmatprep.subr.mxu0 0.0
    %799 = vmatpush1.msra.mxu0 0.0
    %800 = vmatprep.subr.mxu0 0.0
    %801 = vmatpush1.msra.mxu0 0.0
    %802 = vmatprep.subr.mxu0 0.0
    %803 = vmatpush1.msra.mxu0 0.0
    %804 = vmatprep.subr.mxu0 0.0
    %805 = vmatpush1.msra.mxu0 0.0
    %806 = vmatprep.subr.mxu0 0.0
    %807 = vmatpush1.msra.mxu0 0.0
    %808 = vmatprep.subr.mxu0 0.0
    %809 = vmatpush1.msra.mxu0 0.0
    %810 = vmatprep.subr.mxu0 0.0
    %811 = vmatpush1.msra.mxu0 0.0
    %812 = vmatprep.subr.mxu0 0.0
    %813 = vmatpush1.msra.mxu0 0.0
    %814 = vmatprep.subr.mxu0 0.0
    %815 = vmatpush1.msra.mxu0 0.0
    %816 = vmatprep.subr.mxu0 0.0
    %817 = vmatpush1.msra.mxu0 0.0
    %818 = vmatprep.subr.mxu0 0.0
    %819 = vmatpush1.msra.mxu0 0.0
    %820 = vmatprep.subr.mxu0 0.0
    %821 = vmatpush1.msra.mxu0 0.0
    %822 = vmatprep.subr.mxu0 0.0
    %823 = vmatpush1.msra.mxu0 0.0
    %824 = vmatprep.subr.mxu0 0.0
    %825 = vmatpush1.msra.mxu0 0.0
    %826 = vmatprep.subr.mxu0 0.0
    %827 = vmatpush1.msra.mxu0 0.0
    %828 = vmatprep.subr.mxu0 0.0
    %829 = vmatpush1.msra.mxu0 0.0
    %830 = vmatprep.subr.mxu0 0.0
    %831 = vmatpush1.msra.mxu0 0.0
    %832 = vmatprep.subr.mxu0 0.0
    %833 = vmatpush1.msra.mxu0 0.0
    %834 = vmatprep.subr.mxu0 0.0
    %835 = vmatpush1.msra.mxu0 0.0
    %836 = vmatprep.subr.mxu0 0.0
    %837 = vmatpush1.msra.mxu0 0.0
    %838 = vmatprep.subr.mxu0 0.0
    %839 = vmatpush1.msra.mxu0 0.0
    %840 = vmatprep.mubr.f32.mxu0 0.0
    %841 = vmatmul.mubr.f32.gmra.mrb[0].mxu0 %v703
    %v842 = vpop.f32.mrb[0].mxu0
    %v843 = vadd.f32 0.0, %v842
    %v844 = vpop.f32.mrb[0].mxu0
    %845 = vdwg.mxu0
    %v846 = vadd.f32 %v774, %v843
    %v847 = vadd.f32 %v846, %v158
    %v848 = vsub.f32 0.0, %v847
    %v849 = vmul.f32 %v848, 1.442695
    %v850 = vpow.pop %v849
    %v851 = vadd.f32 %v850, 1.0
    %v852 = vrcp.pop %v851
    %v853 = vmul.f32 1.0, %v852
    %v854 = vmul.f32 %v853, 2.0
    %v855 = vsub.f32 %v854, 1.0
    %v856 = vmul.f32 %v853, %v660
    %858 = vrot.lane.b32.xlu0 %v855, 64
    %v859 = vpop.permute.xlu0 %858
    %v861 = vmul.f32 %v853, %v859
    %863 = vrot.lane.b32.xlu0 %v861, 32
    %v864 = vpop.permute.xlu0 %863
    %v866 = vadd.f32 %v856, %v864
    %v867 = vtanh.pop %v866
    %869 = vrot.lane.b32.xlu0 %v867, 64
    %v870 = vpop.permute.xlu0 %869
    %v872 = vmul.f32 %v853, %v870
    %v873 = vadd.f32 %v148, %v772
    %v874 = vsub.f32 0.0, %v873
    %v875 = vmul.f32 %v874, 1.442695
    %v876 = vpow.pop %v875
    %v877 = vadd.f32 %v876, 1.0
    %v878 = vrcp.pop %v877
    %v879 = vmul.f32 1.0, %v878
    %v880 = vmul.f32 %v879, 2.0
    %v881 = vsub.f32 %v880, 1.0
    %v882 = vmul.f32 %v879, %v686
    %884 = vrot.lane.b32.xlu0 %v881, 64
    %v885 = vpop.permute.xlu0 %884
    %v887 = vmul.f32 %v879, %v885
    %889 = vrot.lane.b32.xlu0 %v887, 32
    %v890 = vpop.permute.xlu0 %889
    %v892 = vadd.f32 %v882, %v890
    %v893 = vtanh.pop %v892
    %895 = vrot.lane.b32.xlu0 %v893, 64
    %v896 = vpop.permute.xlu0 %895
    %v898 = vmul.f32 %v879, %v896
    %900 = vrot.lane.b32.xlu0 %v898, 32
    %v901 = vpop.permute.xlu0 %900
    %904 = vrot.lane.b32.xlu0 %v872, 64
    %v905 = vpop.permute.xlu0 %904
    %v907 = vsel %vm288, %v901, %v905
    %v909 = vsel %vm184, %v907, 0
    %911 = vmatprep.subr.mxu0 %v161
    %912 = vmatpush1.msra.mxu0 %v160
    %913 = vmatprep.subr.mxu0 %v164
    %914 = vmatpush1.msra.mxu0 %v163
    %915 = vmatprep.subr.mxu0 %v167
    %916 = vmatpush1.msra.mxu0 %v166
    %917 = vmatprep.subr.mxu0 %v170
    %918 = vmatpush1.msra.mxu0 %v169
    %919 = vmatprep.subr.mxu0 %v173
    %920 = vmatpush1.msra.mxu0 %v172
    %921 = vmatprep.subr.mxu0 %v176
    %922 = vmatpush1.msra.mxu0 %v175
    %923 = vmatprep.subr.mxu0 %v179
    %924 = vmatpush1.msra.mxu0 %v178
    %925 = vmatprep.subr.mxu0 %v182
    %926 = vmatpush1.msra.mxu0 %v181
    %927 = vmatprep.subr.mxu0 0.0
    %928 = vmatpush1.msra.mxu0 0.0
    %929 = vmatprep.subr.mxu0 0.0
    %930 = vmatpush1.msra.mxu0 0.0
    %931 = vmatprep.subr.mxu0 0.0
    %932 = vmatpush1.msra.mxu0 0.0
    %933 = vmatprep.subr.mxu0 0.0
    %934 = vmatpush1.msra.mxu0 0.0
    %935 = vmatprep.subr.mxu0 0.0
    %936 = vmatpush1.msra.mxu0 0.0
    %937 = vmatprep.subr.mxu0 0.0
    %938 = vmatpush1.msra.mxu0 0.0
    %939 = vmatprep.subr.mxu0 0.0
    %940 = vmatpush1.msra.mxu0 0.0
    %941 = vmatprep.subr.mxu0 0.0
    %942 = vmatpush1.msra.mxu0 0.0
    %943 = vmatprep.subr.mxu0 0.0
    %944 = vmatpush1.msra.mxu0 0.0
    %945 = vmatprep.subr.mxu0 0.0
    %946 = vmatpush1.msra.mxu0 0.0
    %947 = vmatprep.subr.mxu0 0.0
    %948 = vmatpush1.msra.mxu0 0.0
    %949 = vmatprep.subr.mxu0 0.0
    %950 = vmatpush1.msra.mxu0 0.0
    %951 = vmatprep.subr.mxu0 0.0
    %952 = vmatpush1.msra.mxu0 0.0
    %953 = vmatprep.subr.mxu0 0.0
    %954 = vmatpush1.msra.mxu0 0.0
    %955 = vmatprep.subr.mxu0 0.0
    %956 = vmatpush1.msra.mxu0 0.0
    %957 = vmatprep.subr.mxu0 0.0
    %958 = vmatpush1.msra.mxu0 0.0
    %959 = vmatprep.subr.mxu0 0.0
    %960 = vmatpush1.msra.mxu0 0.0
    %961 = vmatprep.subr.mxu0 0.0
    %962 = vmatpush1.msra.mxu0 0.0
    %963 = vmatprep.subr.mxu0 0.0
    %964 = vmatpush1.msra.mxu0 0.0
    %965 = vmatprep.subr.mxu0 0.0
    %966 = vmatpush1.msra.mxu0 0.0
    %967 = vmatprep.subr.mxu0 0.0
    %968 = vmatpush1.msra.mxu0 0.0
    %969 = vmatprep.subr.mxu0 0.0
    %970 = vmatpush1.msra.mxu0 0.0
    %971 = vmatprep.subr.mxu0 0.0
    %972 = vmatpush1.msra.mxu0 0.0
    %973 = vmatprep.subr.mxu0 0.0
    %974 = vmatpush1.msra.mxu0 0.0
    %975 = vmatprep.mubr.f32.mxu0 0.0
    %976 = vmatmul.mubr.f32.gmra.mrb[0].mxu0 %v909
    %v977 = vpop.f32.mrb[0].mxu0
    %v978 = vadd.f32 0.0, %v977
    %v979 = vpop.f32.mrb[0].mxu0
    %v980 = vadd.f32 0.0, %v979
    %981 = vdwg.mxu0
    %982 = vmatprep.subr.mxu0 0.0
    %983 = vmatpush1.msra.mxu0 %v162
    %984 = vmatprep.subr.mxu0 0.0
    %985 = vmatpush1.msra.mxu0 %v165
    %986 = vmatprep.subr.mxu0 0.0
    %987 = vmatpush1.msra.mxu0 %v168
    %988 = vmatprep.subr.mxu0 0.0
    %989 = vmatpush1.msra.mxu0 %v171
    %990 = vmatprep.subr.mxu0 0.0
    %991 = vmatpush1.msra.mxu0 %v174
    %992 = vmatprep.subr.mxu0 0.0
    %993 = vmatpush1.msra.mxu0 %v177
    %994 = vmatprep.subr.mxu0 0.0
    %995 = vmatpush1.msra.mxu0 %v180
    %996 = vmatprep.subr.mxu0 0.0
    %997 = vmatpush1.msra.mxu0 %v183
    %998 = vmatprep.subr.mxu0 0.0
    %999 = vmatpush1.msra.mxu0 0.0
    %1000 = vmatprep.subr.mxu0 0.0
    %1001 = vmatpush1.msra.mxu0 0.0
    %1002 = vmatprep.subr.mxu0 0.0
    %1003 = vmatpush1.msra.mxu0 0.0
    %1004 = vmatprep.subr.mxu0 0.0
    %1005 = vmatpush1.msra.mxu0 0.0
    %1006 = vmatprep.subr.mxu0 0.0
    %1007 = vmatpush1.msra.mxu0 0.0
    %1008 = vmatprep.subr.mxu0 0.0
    %1009 = vmatpush1.msra.mxu0 0.0
    %1010 = vmatprep.subr.mxu0 0.0
    %1011 = vmatpush1.msra.mxu0 0.0
    %1012 = vmatprep.subr.mxu0 0.0
    %1013 = vmatpush1.msra.mxu0 0.0
    %1014 = vmatprep.subr.mxu0 0.0
    %1015 = vmatpush1.msra.mxu0 0.0
    %1016 = vmatprep.subr.mxu0 0.0
    %1017 = vmatpush1.msra.mxu0 0.0
    %1018 = vmatprep.subr.mxu0 0.0
    %1019 = vmatpush1.msra.mxu0 0.0
    %1020 = vmatprep.subr.mxu0 0.0
    %1021 = vmatpush1.msra.mxu0 0.0
    %1022 = vmatprep.subr.mxu0 0.0
    %1023 = vmatpush1.msra.mxu0 0.0
    %1024 = vmatprep.subr.mxu0 0.0
    %1025 = vmatpush1.msra.mxu0 0.0
    %1026 = vmatprep.subr.mxu0 0.0
    %1027 = vmatpush1.msra.mxu0 0.0
    %1028 = vmatprep.subr.mxu0 0.0
    %1029 = vmatpush1.msra.mxu0 0.0
    %1030 = vmatprep.subr.mxu0 0.0
    %1031 = vmatpush1.msra.mxu0 0.0
    %1032 = vmatprep.subr.mxu0 0.0
    %1033 = vmatpush1.msra.mxu0 0.0
    %1034 = vmatprep.subr.mxu0 0.0
    %1035 = vmatpush1.msra.mxu0 0.0
    %1036 = vmatprep.subr.mxu0 0.0
    %1037 = vmatpush1.msra.mxu0 0.0
    %1038 = vmatprep.subr.mxu0 0.0
    %1039 = vmatpush1.msra.mxu0 0.0
    %1040 = vmatprep.subr.mxu0 0.0
    %1041 = vmatpush1.msra.mxu0 0.0
    %1042 = vmatprep.subr.mxu0 0.0
    %1043 = vmatpush1.msra.mxu0 0.0
    %1044 = vmatprep.subr.mxu0 0.0
    %1045 = vmatpush1.msra.mxu0 0.0
    %1046 = vmatprep.mubr.f32.mxu0 0.0
    %1047 = vmatmul.mubr.f32.gmra.mrb[0].mxu0 %v909
    %v1048 = vpop.f32.mrb[0].mxu0
    %v1049 = vadd.f32 0.0, %v1048
    %v1050 = vpop.f32.mrb[0].mxu0
    %1051 = vdwg.mxu0
    %v1052 = vadd.f32 %v980, %v1049
    %v1053 = vadd.f32 %v1052, %v158
    %v1054 = vsub.f32 0.0, %v1053
    %v1055 = vmul.f32 %v1054, 1.442695
    %v1056 = vpow.pop %v1055
    %v1057 = vadd.f32 %v1056, 1.0
    %v1058 = vrcp.pop %v1057
    %v1059 = vmul.f32 1.0, %v1058
    %v1060 = vmul.f32 %v1059, 2.0
    %v1061 = vsub.f32 %v1060, 1.0
    %v1062 = vmul.f32 %v1059, %v866
    %1064 = vrot.lane.b32.xlu0 %v1061, 64
    %v1065 = vpop.permute.xlu0 %1064
    %v1067 = vmul.f32 %v1059, %v1065
    %1069 = vrot.lane.b32.xlu0 %v1067, 32
    %v1070 = vpop.permute.xlu0 %1069
    %v1072 = vadd.f32 %v1062, %v1070
    %v1073 = vtanh.pop %v1072
    %1075 = vrot.lane.b32.xlu0 %v1073, 64
    %v1076 = vpop.permute.xlu0 %1075
    %v1078 = vmul.f32 %v1059, %v1076
    %v1079 = vadd.f32 %v149, %v978
    %v1080 = vsub.f32 0.0, %v1079
    %v1081 = vmul.f32 %v1080, 1.442695
    %v1082 = vpow.pop %v1081
    %v1083 = vadd.f32 %v1082, 1.0
    %v1084 = vrcp.pop %v1083
    %v1085 = vmul.f32 1.0, %v1084
    %v1086 = vmul.f32 %v1085, 2.0
    %v1087 = vsub.f32 %v1086, 1.0
    %v1088 = vmul.f32 %v1085, %v892
    %1090 = vrot.lane.b32.xlu0 %v1087, 64
    %v1091 = vpop.permute.xlu0 %1090
    %v1093 = vmul.f32 %v1085, %v1091
    %1095 = vrot.lane.b32.xlu0 %v1093, 32
    %v1096 = vpop.permute.xlu0 %1095
    %v1098 = vadd.f32 %v1088, %v1096
    %v1099 = vtanh.pop %v1098
    %1101 = vrot.lane.b32.xlu0 %v1099, 64
    %v1102 = vpop.permute.xlu0 %1101
    %v1104 = vmul.f32 %v1085, %v1102
    %1106 = vrot.lane.b32.xlu0 %v1104, 32
    %v1107 = vpop.permute.xlu0 %1106
    %1110 = vrot.lane.b32.xlu0 %v1078, 64
    %v1111 = vpop.permute.xlu0 %1110
    %v1113 = vsel %vm288, %v1107, %v1111
    %v1115 = vsel %vm184, %v1113, 0
    %1117 = vmatprep.subr.mxu0 %v161
    %1118 = vmatpush1.msra.mxu0 %v160
    %1119 = vmatprep.subr.mxu0 %v164
    %1120 = vmatpush1.msra.mxu0 %v163
    %1121 = vmatprep.subr.mxu0 %v167
    %1122 = vmatpush1.msra.mxu0 %v166
    %1123 = vmatprep.subr.mxu0 %v170
    %1124 = vmatpush1.msra.mxu0 %v169
    %1125 = vmatprep.subr.mxu0 %v173
    %1126 = vmatpush1.msra.mxu0 %v172
    %1127 = vmatprep.subr.mxu0 %v176
    %1128 = vmatpush1.msra.mxu0 %v175
    %1129 = vmatprep.subr.mxu0 %v179
    %1130 = vmatpush1.msra.mxu0 %v178
    %1131 = vmatprep.subr.mxu0 %v182
    %1132 = vmatpush1.msra.mxu0 %v181
    %1133 = vmatprep.subr.mxu0 0.0
    %1134 = vmatpush1.msra.mxu0 0.0
    %1135 = vmatprep.subr.mxu0 0.0
    %1136 = vmatpush1.msra.mxu0 0.0
    %1137 = vmatprep.subr.mxu0 0.0
    %1138 = vmatpush1.msra.mxu0 0.0
    %1139 = vmatprep.subr.mxu0 0.0
    %1140 = vmatpush1.msra.mxu0 0.0
    %1141 = vmatprep.subr.mxu0 0.0
    %1142 = vmatpush1.msra.mxu0 0.0
    %1143 = vmatprep.subr.mxu0 0.0
    %1144 = vmatpush1.msra.mxu0 0.0
    %1145 = vmatprep.subr.mxu0 0.0
    %1146 = vmatpush1.msra.mxu0 0.0
    %1147 = vmatprep.subr.mxu0 0.0
    %1148 = vmatpush1.msra.mxu0 0.0
    %1149 = vmatprep.subr.mxu0 0.0
    %1150 = vmatpush1.msra.mxu0 0.0
    %1151 = vmatprep.subr.mxu0 0.0
    %1152 = vmatpush1.msra.mxu0 0.0
    %1153 = vmatprep.subr.mxu0 0.0
    %1154 = vmatpush1.msra.mxu0 0.0
    %1155 = vmatprep.subr.mxu0 0.0
    %1156 = vmatpush1.msra.mxu0 0.0
    %1157 = vmatprep.subr.mxu0 0.0
    %1158 = vmatpush1.msra.mxu0 0.0
    %1159 = vmatprep.subr.mxu0 0.0
    %1160 = vmatpush1.msra.mxu0 0.0
    %1161 = vmatprep.subr.mxu0 0.0
    %1162 = vmatpush1.msra.mxu0 0.0
    %1163 = vmatprep.subr.mxu0 0.0
    %1164 = vmatpush1.msra.mxu0 0.0
    %1165 = vmatprep.subr.mxu0 0.0
    %1166 = vmatpush1.msra.mxu0 0.0
    %1167 = vmatprep.subr.mxu0 0.0
    %1168 = vmatpush1.msra.mxu0 0.0
    %1169 = vmatprep.subr.mxu0 0.0
    %1170 = vmatpush1.msra.mxu0 0.0
    %1171 = vmatprep.subr.mxu0 0.0
    %1172 = vmatpush1.msra.mxu0 0.0
    %1173 = vmatprep.subr.mxu0 0.0
    %1174 = vmatpush1.msra.mxu0 0.0
    %1175 = vmatprep.subr.mxu0 0.0
    %1176 = vmatpush1.msra.mxu0 0.0
    %1177 = vmatprep.subr.mxu0 0.0
    %1178 = vmatpush1.msra.mxu0 0.0
    %1179 = vmatprep.subr.mxu0 0.0
    %1180 = vmatpush1.msra.mxu0 0.0
    %1181 = vmatprep.mubr.f32.mxu0 0.0
    %1182 = vmatmul.mubr.f32.gmra.mrb[0].mxu0 %v1115
    %v1183 = vpop.f32.mrb[0].mxu0
    %v1184 = vadd.f32 0.0, %v1183
    %v1185 = vpop.f32.mrb[0].mxu0
    %v1186 = vadd.f32 0.0, %v1185
    %1187 = vdwg.mxu0
    %1188 = vmatprep.subr.mxu0 0.0
    %1189 = vmatpush1.msra.mxu0 %v162
    %1190 = vmatprep.subr.mxu0 0.0
    %1191 = vmatpush1.msra.mxu0 %v165
    %1192 = vmatprep.subr.mxu0 0.0
    %1193 = vmatpush1.msra.mxu0 %v168
    %1194 = vmatprep.subr.mxu0 0.0
    %1195 = vmatpush1.msra.mxu0 %v171
    %1196 = vmatprep.subr.mxu0 0.0
    %1197 = vmatpush1.msra.mxu0 %v174
    %1198 = vmatprep.subr.mxu0 0.0
    %1199 = vmatpush1.msra.mxu0 %v177
    %1200 = vmatprep.subr.mxu0 0.0
    %1201 = vmatpush1.msra.mxu0 %v180
    %1202 = vmatprep.subr.mxu0 0.0
    %1203 = vmatpush1.msra.mxu0 %v183
    %1204 = vmatprep.subr.mxu0 0.0
    %1205 = vmatpush1.msra.mxu0 0.0
    %1206 = vmatprep.subr.mxu0 0.0
    %1207 = vmatpush1.msra.mxu0 0.0
    %1208 = vmatprep.subr.mxu0 0.0
    %1209 = vmatpush1.msra.mxu0 0.0
    %1210 = vmatprep.subr.mxu0 0.0
    %1211 = vmatpush1.msra.mxu0 0.0
    %1212 = vmatprep.subr.mxu0 0.0
    %1213 = vmatpush1.msra.mxu0 0.0
    %1214 = vmatprep.subr.mxu0 0.0
    %1215 = vmatpush1.msra.mxu0 0.0
    %1216 = vmatprep.subr.mxu0 0.0
    %1217 = vmatpush1.msra.mxu0 0.0
    %1218 = vmatprep.subr.mxu0 0.0
    %1219 = vmatpush1.msra.mxu0 0.0
    %1220 = vmatprep.subr.mxu0 0.0
    %1221 = vmatpush1.msra.mxu0 0.0
    %1222 = vmatprep.subr.mxu0 0.0
    %1223 = vmatpush1.msra.mxu0 0.0
    %1224 = vmatprep.subr.mxu0 0.0
    %1225 = vmatpush1.msra.mxu0 0.0
    %1226 = vmatprep.subr.mxu0 0.0
    %1227 = vmatpush1.msra.mxu0 0.0
    %1228 = vmatprep.subr.mxu0 0.0
    %1229 = vmatpush1.msra.mxu0 0.0
    %1230 = vmatprep.subr.mxu0 0.0
    %1231 = vmatpush1.msra.mxu0 0.0
    %1232 = vmatprep.subr.mxu0 0.0
    %1233 = vmatpush1.msra.mxu0 0.0
    %1234 = vmatprep.subr.mxu0 0.0
    %1235 = vmatpush1.msra.mxu0 0.0
    %1236 = vmatprep.subr.mxu0 0.0
    %1237 = vmatpush1.msra.mxu0 0.0
    %1238 = vmatprep.subr.mxu0 0.0
    %1239 = vmatpush1.msra.mxu0 0.0
    %1240 = vmatprep.subr.mxu0 0.0
    %1241 = vmatpush1.msra.mxu0 0.0
    %1242 = vmatprep.subr.mxu0 0.0
    %1243 = vmatpush1.msra.mxu0 0.0
    %1244 = vmatprep.subr.mxu0 0.0
    %1245 = vmatpush1.msra.mxu0 0.0
    %1246 = vmatprep.subr.mxu0 0.0
    %1247 = vmatpush1.msra.mxu0 0.0
    %1248 = vmatprep.subr.mxu0 0.0
    %1249 = vmatpush1.msra.mxu0 0.0
    %1250 = vmatprep.subr.mxu0 0.0
    %1251 = vmatpush1.msra.mxu0 0.0
    %1252 = vmatprep.mubr.f32.mxu0 0.0
    %1253 = vmatmul.mubr.f32.gmra.mrb[0].mxu0 %v1115
    %v1254 = vpop.f32.mrb[0].mxu0
    %v1255 = vadd.f32 0.0, %v1254
    %v1256 = vpop.f32.mrb[0].mxu0
    %1257 = vdwg.mxu0
    %v1258 = vadd.f32 %v1186, %v1255
    %v1259 = vadd.f32 %v1258, %v158
    %v1260 = vsub.f32 0.0, %v1259
    %v1261 = vmul.f32 %v1260, 1.442695
    %v1262 = vpow.pop %v1261
    %v1263 = vadd.f32 %v1262, 1.0
    %v1264 = vrcp.pop %v1263
    %v1265 = vmul.f32 1.0, %v1264
    %v1266 = vmul.f32 %v1265, 2.0
    %v1267 = vsub.f32 %v1266, 1.0
    %v1268 = vmul.f32 %v1265, %v1072
    %1270 = vrot.lane.b32.xlu0 %v1267, 64
    %v1271 = vpop.permute.xlu0 %1270
    %v1273 = vmul.f32 %v1265, %v1271
    %1275 = vrot.lane.b32.xlu0 %v1273, 32
    %v1276 = vpop.permute.xlu0 %1275
    %v1278 = vadd.f32 %v1268, %v1276
    %v1279 = vtanh.pop %v1278
    %1281 = vrot.lane.b32.xlu0 %v1279, 64
    %v1282 = vpop.permute.xlu0 %1281
    %v1284 = vmul.f32 %v1265, %v1282
    %v1285 = vadd.f32 %v150, %v1184
    %v1286 = vsub.f32 0.0, %v1285
    %v1287 = vmul.f32 %v1286, 1.442695
    %v1288 = vpow.pop %v1287
    %v1289 = vadd.f32 %v1288, 1.0
    %v1290 = vrcp.pop %v1289
    %v1291 = vmul.f32 1.0, %v1290
    %v1292 = vmul.f32 %v1291, 2.0
    %v1293 = vsub.f32 %v1292, 1.0
    %v1294 = vmul.f32 %v1291, %v1098
    %1296 = vrot.lane.b32.xlu0 %v1293, 64
    %v1297 = vpop.permute.xlu0 %1296
    %v1299 = vmul.f32 %v1291, %v1297
    %1301 = vrot.lane.b32.xlu0 %v1299, 32
    %v1302 = vpop.permute.xlu0 %1301
    %v1304 = vadd.f32 %v1294, %v1302
    %v1305 = vtanh.pop %v1304
    %1307 = vrot.lane.b32.xlu0 %v1305, 64
    %v1308 = vpop.permute.xlu0 %1307
    %v1310 = vmul.f32 %v1291, %v1308
    %1312 = vrot.lane.b32.xlu0 %v1310, 32
    %v1313 = vpop.permute.xlu0 %1312
    %1316 = vrot.lane.b32.xlu0 %v1284, 64
    %v1317 = vpop.permute.xlu0 %1316
    %v1319 = vsel %vm288, %v1313, %v1317
    %v1321 = vsel %vm184, %v1319, 0
    %1323 = vmatprep.subr.mxu0 %v161
    %1324 = vmatpush1.msra.mxu0 %v160
    %1325 = vmatprep.subr.mxu0 %v164
    %1326 = vmatpush1.msra.mxu0 %v163
    %1327 = vmatprep.subr.mxu0 %v167
    %1328 = vmatpush1.msra.mxu0 %v166
    %1329 = vmatprep.subr.mxu0 %v170
    %1330 = vmatpush1.msra.mxu0 %v169
    %1331 = vmatprep.subr.mxu0 %v173
    %1332 = vmatpush1.msra.mxu0 %v172
    %1333 = vmatprep.subr.mxu0 %v176
    %1334 = vmatpush1.msra.mxu0 %v175
    %1335 = vmatprep.subr.mxu0 %v179
    %1336 = vmatpush1.msra.mxu0 %v178
    %1337 = vmatprep.subr.mxu0 %v182
    %1338 = vmatpush1.msra.mxu0 %v181
    %1339 = vmatprep.subr.mxu0 0.0
    %1340 = vmatpush1.msra.mxu0 0.0
    %1341 = vmatprep.subr.mxu0 0.0
    %1342 = vmatpush1.msra.mxu0 0.0
    %1343 = vmatprep.subr.mxu0 0.0
    %1344 = vmatpush1.msra.mxu0 0.0
    %1345 = vmatprep.subr.mxu0 0.0
    %1346 = vmatpush1.msra.mxu0 0.0
    %1347 = vmatprep.subr.mxu0 0.0
    %1348 = vmatpush1.msra.mxu0 0.0
    %1349 = vmatprep.subr.mxu0 0.0
    %1350 = vmatpush1.msra.mxu0 0.0
    %1351 = vmatprep.subr.mxu0 0.0
    %1352 = vmatpush1.msra.mxu0 0.0
    %1353 = vmatprep.subr.mxu0 0.0
    %1354 = vmatpush1.msra.mxu0 0.0
    %1355 = vmatprep.subr.mxu0 0.0
    %1356 = vmatpush1.msra.mxu0 0.0
    %1357 = vmatprep.subr.mxu0 0.0
    %1358 = vmatpush1.msra.mxu0 0.0
    %1359 = vmatprep.subr.mxu0 0.0
    %1360 = vmatpush1.msra.mxu0 0.0
    %1361 = vmatprep.subr.mxu0 0.0
    %1362 = vmatpush1.msra.mxu0 0.0
    %1363 = vmatprep.subr.mxu0 0.0
    %1364 = vmatpush1.msra.mxu0 0.0
    %1365 = vmatprep.subr.mxu0 0.0
    %1366 = vmatpush1.msra.mxu0 0.0
    %1367 = vmatprep.subr.mxu0 0.0
    %1368 = vmatpush1.msra.mxu0 0.0
    %1369 = vmatprep.subr.mxu0 0.0
    %1370 = vmatpush1.msra.mxu0 0.0
    %1371 = vmatprep.subr.mxu0 0.0
    %1372 = vmatpush1.msra.mxu0 0.0
    %1373 = vmatprep.subr.mxu0 0.0
    %1374 = vmatpush1.msra.mxu0 0.0
    %1375 = vmatprep.subr.mxu0 0.0
    %1376 = vmatpush1.msra.mxu0 0.0
    %1377 = vmatprep.subr.mxu0 0.0
    %1378 = vmatpush1.msra.mxu0 0.0
    %1379 = vmatprep.subr.mxu0 0.0
    %1380 = vmatpush1.msra.mxu0 0.0
    %1381 = vmatprep.subr.mxu0 0.0
    %1382 = vmatpush1.msra.mxu0 0.0
    %1383 = vmatprep.subr.mxu0 0.0
    %1384 = vmatpush1.msra.mxu0 0.0
    %1385 = vmatprep.subr.mxu0 0.0
    %1386 = vmatpush1.msra.mxu0 0.0
    %1387 = vmatprep.mubr.f32.mxu0 0.0
    %1388 = vmatmul.mubr.f32.gmra.mrb[0].mxu0 %v1321
    %v1389 = vpop.f32.mrb[0].mxu0
    %v1390 = vadd.f32 0.0, %v1389
    %v1391 = vpop.f32.mrb[0].mxu0
    %v1392 = vadd.f32 0.0, %v1391
    %1393 = vdwg.mxu0
    %1394 = vmatprep.subr.mxu0 0.0
    %1395 = vmatpush1.msra.mxu0 %v162
    %1396 = vmatprep.subr.mxu0 0.0
    %1397 = vmatpush1.msra.mxu0 %v165
    %1398 = vmatprep.subr.mxu0 0.0
    %1399 = vmatpush1.msra.mxu0 %v168
    %1400 = vmatprep.subr.mxu0 0.0
    %1401 = vmatpush1.msra.mxu0 %v171
    %1402 = vmatprep.subr.mxu0 0.0
    %1403 = vmatpush1.msra.mxu0 %v174
    %1404 = vmatprep.subr.mxu0 0.0
    %1405 = vmatpush1.msra.mxu0 %v177
    %1406 = vmatprep.subr.mxu0 0.0
    %1407 = vmatpush1.msra.mxu0 %v180
    %1408 = vmatprep.subr.mxu0 0.0
    %1409 = vmatpush1.msra.mxu0 %v183
    %1410 = vmatprep.subr.mxu0 0.0
    %1411 = vmatpush1.msra.mxu0 0.0
    %1412 = vmatprep.subr.mxu0 0.0
    %1413 = vmatpush1.msra.mxu0 0.0
    %1414 = vmatprep.subr.mxu0 0.0
    %1415 = vmatpush1.msra.mxu0 0.0
    %1416 = vmatprep.subr.mxu0 0.0
    %1417 = vmatpush1.msra.mxu0 0.0
    %1418 = vmatprep.subr.mxu0 0.0
    %1419 = vmatpush1.msra.mxu0 0.0
    %1420 = vmatprep.subr.mxu0 0.0
    %1421 = vmatpush1.msra.mxu0 0.0
    %1422 = vmatprep.subr.mxu0 0.0
    %1423 = vmatpush1.msra.mxu0 0.0
    %1424 = vmatprep.subr.mxu0 0.0
    %1425 = vmatpush1.msra.mxu0 0.0
    %1426 = vmatprep.subr.mxu0 0.0
    %1427 = vmatpush1.msra.mxu0 0.0
    %1428 = vmatprep.subr.mxu0 0.0
    %1429 = vmatpush1.msra.mxu0 0.0
    %1430 = vmatprep.subr.mxu0 0.0
    %1431 = vmatpush1.msra.mxu0 0.0
    %1432 = vmatprep.subr.mxu0 0.0
    %1433 = vmatpush1.msra.mxu0 0.0
    %1434 = vmatprep.subr.mxu0 0.0
    %1435 = vmatpush1.msra.mxu0 0.0
    %1436 = vmatprep.subr.mxu0 0.0
    %1437 = vmatpush1.msra.mxu0 0.0
    %1438 = vmatprep.subr.mxu0 0.0
    %1439 = vmatpush1.msra.mxu0 0.0
    %1440 = vmatprep.subr.mxu0 0.0
    %1441 = vmatpush1.msra.mxu0 0.0
    %1442 = vmatprep.subr.mxu0 0.0
    %1443 = vmatpush1.msra.mxu0 0.0
    %1444 = vmatprep.subr.mxu0 0.0
    %1445 = vmatpush1.msra.mxu0 0.0
    %1446 = vmatprep.subr.mxu0 0.0
    %1447 = vmatpush1.msra.mxu0 0.0
    %1448 = vmatprep.subr.mxu0 0.0
    %1449 = vmatpush1.msra.mxu0 0.0
    %1450 = vmatprep.subr.mxu0 0.0
    %1451 = vmatpush1.msra.mxu0 0.0
    %1452 = vmatprep.subr.mxu0 0.0
    %1453 = vmatpush1.msra.mxu0 0.0
    %1454 = vmatprep.subr.mxu0 0.0
    %1455 = vmatpush1.msra.mxu0 0.0
    %1456 = vmatprep.subr.mxu0 0.0
    %1457 = vmatpush1.msra.mxu0 0.0
    %1458 = vmatprep.mubr.f32.mxu0 0.0
    %1459 = vmatmul.mubr.f32.gmra.mrb[0].mxu0 %v1321
    %v1460 = vpop.f32.mrb[0].mxu0
    %v1461 = vadd.f32 0.0, %v1460
    %v1462 = vpop.f32.mrb[0].mxu0
    %1463 = vdwg.mxu0
    %v1464 = vadd.f32 %v1392, %v1461
    %v1465 = vadd.f32 %v1464, %v158
    %v1466 = vsub.f32 0.0, %v1465
    %v1467 = vmul.f32 %v1466, 1.442695
    %v1468 = vpow.pop %v1467
    %v1469 = vadd.f32 %v1468, 1.0
    %v1470 = vrcp.pop %v1469
    %v1471 = vmul.f32 1.0, %v1470
    %v1472 = vmul.f32 %v1471, 2.0
    %v1473 = vsub.f32 %v1472, 1.0
    %v1474 = vmul.f32 %v1471, %v1278
    %1476 = vrot.lane.b32.xlu0 %v1473, 64
    %v1477 = vpop.permute.xlu0 %1476
    %v1479 = vmul.f32 %v1471, %v1477
    %1481 = vrot.lane.b32.xlu0 %v1479, 32
    %v1482 = vpop.permute.xlu0 %1481
    %v1484 = vadd.f32 %v1474, %v1482
    %v1485 = vtanh.pop %v1484
    %1487 = vrot.lane.b32.xlu0 %v1485, 64
    %v1488 = vpop.permute.xlu0 %1487
    %v1490 = vmul.f32 %v1471, %v1488
    %v1491 = vadd.f32 %v151, %v1390
    %v1492 = vsub.f32 0.0, %v1491
    %v1493 = vmul.f32 %v1492, 1.442695
    %v1494 = vpow.pop %v1493
    %v1495 = vadd.f32 %v1494, 1.0
    %v1496 = vrcp.pop %v1495
    %v1497 = vmul.f32 1.0, %v1496
    %v1498 = vmul.f32 %v1497, 2.0
    %v1499 = vsub.f32 %v1498, 1.0
    %v1500 = vmul.f32 %v1497, %v1304
    %1502 = vrot.lane.b32.xlu0 %v1499, 64
    %v1503 = vpop.permute.xlu0 %1502
    %v1505 = vmul.f32 %v1497, %v1503
    %1507 = vrot.lane.b32.xlu0 %v1505, 32
    %v1508 = vpop.permute.xlu0 %1507
    %v1510 = vadd.f32 %v1500, %v1508
    %v1511 = vtanh.pop %v1510
    %1513 = vrot.lane.b32.xlu0 %v1511, 64
    %v1514 = vpop.permute.xlu0 %1513
    %v1516 = vmul.f32 %v1497, %v1514
    %1518 = vrot.lane.b32.xlu0 %v1516, 32
    %v1519 = vpop.permute.xlu0 %1518
    %1522 = vrot.lane.b32.xlu0 %v1490, 64
    %v1523 = vpop.permute.xlu0 %1522
    %v1525 = vsel %vm288, %v1519, %v1523
    %v1527 = vsel %vm184, %v1525, 0
    %1529 = vmatprep.subr.mxu0 %v161
    %1530 = vmatpush1.msra.mxu0 %v160
    %1531 = vmatprep.subr.mxu0 %v164
    %1532 = vmatpush1.msra.mxu0 %v163
    %1533 = vmatprep.subr.mxu0 %v167
    %1534 = vmatpush1.msra.mxu0 %v166
    %1535 = vmatprep.subr.mxu0 %v170
    %1536 = vmatpush1.msra.mxu0 %v169
    %1537 = vmatprep.subr.mxu0 %v173
    %1538 = vmatpush1.msra.mxu0 %v172
    %1539 = vmatprep.subr.mxu0 %v176
    %1540 = vmatpush1.msra.mxu0 %v175
    %1541 = vmatprep.subr.mxu0 %v179
    %1542 = vmatpush1.msra.mxu0 %v178
    %1543 = vmatprep.subr.mxu0 %v182
    %1544 = vmatpush1.msra.mxu0 %v181
    %1545 = vmatprep.subr.mxu0 0.0
    %1546 = vmatpush1.msra.mxu0 0.0
    %1547 = vmatprep.subr.mxu0 0.0
    %1548 = vmatpush1.msra.mxu0 0.0
    %1549 = vmatprep.subr.mxu0 0.0
    %1550 = vmatpush1.msra.mxu0 0.0
    %1551 = vmatprep.subr.mxu0 0.0
    %1552 = vmatpush1.msra.mxu0 0.0
    %1553 = vmatprep.subr.mxu0 0.0
    %1554 = vmatpush1.msra.mxu0 0.0
    %1555 = vmatprep.subr.mxu0 0.0
    %1556 = vmatpush1.msra.mxu0 0.0
    %1557 = vmatprep.subr.mxu0 0.0
    %1558 = vmatpush1.msra.mxu0 0.0
    %1559 = vmatprep.subr.mxu0 0.0
    %1560 = vmatpush1.msra.mxu0 0.0
    %1561 = vmatprep.subr.mxu0 0.0
    %1562 = vmatpush1.msra.mxu0 0.0
    %1563 = vmatprep.subr.mxu0 0.0
    %1564 = vmatpush1.msra.mxu0 0.0
    %1565 = vmatprep.subr.mxu0 0.0
    %1566 = vmatpush1.msra.mxu0 0.0
    %1567 = vmatprep.subr.mxu0 0.0
    %1568 = vmatpush1.msra.mxu0 0.0
    %1569 = vmatprep.subr.mxu0 0.0
    %1570 = vmatpush1.msra.mxu0 0.0
    %1571 = vmatprep.subr.mxu0 0.0
    %1572 = vmatpush1.msra.mxu0 0.0
    %1573 = vmatprep.subr.mxu0 0.0
    %1574 = vmatpush1.msra.mxu0 0.0
    %1575 = vmatprep.subr.mxu0 0.0
    %1576 = vmatpush1.msra.mxu0 0.0
    %1577 = vmatprep.subr.mxu0 0.0
    %1578 = vmatpush1.msra.mxu0 0.0
    %1579 = vmatprep.subr.mxu0 0.0
    %1580 = vmatpush1.msra.mxu0 0.0
    %1581 = vmatprep.subr.mxu0 0.0
    %1582 = vmatpush1.msra.mxu0 0.0
    %1583 = vmatprep.subr.mxu0 0.0
    %1584 = vmatpush1.msra.mxu0 0.0
    %1585 = vmatprep.subr.mxu0 0.0
    %1586 = vmatpush1.msra.mxu0 0.0
    %1587 = vmatprep.subr.mxu0 0.0
    %1588 = vmatpush1.msra.mxu0 0.0
    %1589 = vmatprep.subr.mxu0 0.0
    %1590 = vmatpush1.msra.mxu0 0.0
    %1591 = vmatprep.subr.mxu0 0.0
    %1592 = vmatpush1.msra.mxu0 0.0
    %1593 = vmatprep.mubr.f32.mxu0 0.0
    %1594 = vmatmul.mubr.f32.gmra.mrb[0].mxu0 %v1527
    %v1595 = vpop.f32.mrb[0].mxu0
    %v1596 = vadd.f32 0.0, %v1595
    %v1597 = vpop.f32.mrb[0].mxu0
    %v1598 = vadd.f32 0.0, %v1597
    %1599 = vdwg.mxu0
    %1600 = vmatprep.subr.mxu0 0.0
    %1601 = vmatpush1.msra.mxu0 %v162
    %1602 = vmatprep.subr.mxu0 0.0
    %1603 = vmatpush1.msra.mxu0 %v165
    %1604 = vmatprep.subr.mxu0 0.0
    %1605 = vmatpush1.msra.mxu0 %v168
    %1606 = vmatprep.subr.mxu0 0.0
    %1607 = vmatpush1.msra.mxu0 %v171
    %1608 = vmatprep.subr.mxu0 0.0
    %1609 = vmatpush1.msra.mxu0 %v174
    %1610 = vmatprep.subr.mxu0 0.0
    %1611 = vmatpush1.msra.mxu0 %v177
    %1612 = vmatprep.subr.mxu0 0.0
    %1613 = vmatpush1.msra.mxu0 %v180
    %1614 = vmatprep.subr.mxu0 0.0
    %1615 = vmatpush1.msra.mxu0 %v183
    %1616 = vmatprep.subr.mxu0 0.0
    %1617 = vmatpush1.msra.mxu0 0.0
    %1618 = vmatprep.subr.mxu0 0.0
    %1619 = vmatpush1.msra.mxu0 0.0
    %1620 = vmatprep.subr.mxu0 0.0
    %1621 = vmatpush1.msra.mxu0 0.0
    %1622 = vmatprep.subr.mxu0 0.0
    %1623 = vmatpush1.msra.mxu0 0.0
    %1624 = vmatprep.subr.mxu0 0.0
    %1625 = vmatpush1.msra.mxu0 0.0
    %1626 = vmatprep.subr.mxu0 0.0
    %1627 = vmatpush1.msra.mxu0 0.0
    %1628 = vmatprep.subr.mxu0 0.0
    %1629 = vmatpush1.msra.mxu0 0.0
    %1630 = vmatprep.subr.mxu0 0.0
    %1631 = vmatpush1.msra.mxu0 0.0
    %1632 = vmatprep.subr.mxu0 0.0
    %1633 = vmatpush1.msra.mxu0 0.0
    %1634 = vmatprep.subr.mxu0 0.0
    %1635 = vmatpush1.msra.mxu0 0.0
    %1636 = vmatprep.subr.mxu0 0.0
    %1637 = vmatpush1.msra.mxu0 0.0
    %1638 = vmatprep.subr.mxu0 0.0
    %1639 = vmatpush1.msra.mxu0 0.0
    %1640 = vmatprep.subr.mxu0 0.0
    %1641 = vmatpush1.msra.mxu0 0.0
    %1642 = vmatprep.subr.mxu0 0.0
    %1643 = vmatpush1.msra.mxu0 0.0
    %1644 = vmatprep.subr.mxu0 0.0
    %1645 = vmatpush1.msra.mxu0 0.0
    %1646 = vmatprep.subr.mxu0 0.0
    %1647 = vmatpush1.msra.mxu0 0.0
    %1648 = vmatprep.subr.mxu0 0.0
    %1649 = vmatpush1.msra.mxu0 0.0
    %1650 = vmatprep.subr.mxu0 0.0
    %1651 = vmatpush1.msra.mxu0 0.0
    %1652 = vmatprep.subr.mxu0 0.0
    %1653 = vmatpush1.msra.mxu0 0.0
    %1654 = vmatprep.subr.mxu0 0.0
    %1655 = vmatpush1.msra.mxu0 0.0
    %1656 = vmatprep.subr.mxu0 0.0
    %1657 = vmatpush1.msra.mxu0 0.0
    %1658 = vmatprep.subr.mxu0 0.0
    %1659 = vmatpush1.msra.mxu0 0.0
    %1660 = vmatprep.subr.mxu0 0.0
    %1661 = vmatpush1.msra.mxu0 0.0
    %1662 = vmatprep.subr.mxu0 0.0
    %1663 = vmatpush1.msra.mxu0 0.0
    %1664 = vmatprep.mubr.f32.mxu0 0.0
    %1665 = vmatmul.mubr.f32.gmra.mrb[0].mxu0 %v1527
    %v1666 = vpop.f32.mrb[0].mxu0
    %v1667 = vadd.f32 0.0, %v1666
    %v1668 = vpop.f32.mrb[0].mxu0
    %1669 = vdwg.mxu0
    %v1670 = vadd.f32 %v1598, %v1667
    %v1671 = vadd.f32 %v1670, %v158
    %v1672 = vsub.f32 0.0, %v1671
    %v1673 = vmul.f32 %v1672, 1.442695
    %v1674 = vpow.pop %v1673
    %v1675 = vadd.f32 %v1674, 1.0
    %v1676 = vrcp.pop %v1675
    %v1677 = vmul.f32 1.0, %v1676
    %v1678 = vmul.f32 %v1677, 2.0
    %v1679 = vsub.f32 %v1678, 1.0
    %v1680 = vmul.f32 %v1677, %v1484
    %1682 = vrot.lane.b32.xlu0 %v1679, 64
    %v1683 = vpop.permute.xlu0 %1682
    %v1685 = vmul.f32 %v1677, %v1683
    %1687 = vrot.lane.b32.xlu0 %v1685, 32
    %v1688 = vpop.permute.xlu0 %1687
    %v1690 = vadd.f32 %v1680, %v1688
    %v1691 = vtanh.pop %v1690
    %1693 = vrot.lane.b32.xlu0 %v1691, 64
    %v1694 = vpop.permute.xlu0 %1693
    %v1696 = vmul.f32 %v1677, %v1694
    %v1697 = vadd.f32 %v152, %v1596
    %v1698 = vsub.f32 0.0, %v1697
    %v1699 = vmul.f32 %v1698, 1.442695
    %v1700 = vpow.pop %v1699
    %v1701 = vadd.f32 %v1700, 1.0
    %v1702 = vrcp.pop %v1701
    %v1703 = vmul.f32 1.0, %v1702
    %v1704 = vmul.f32 %v1703, 2.0
    %v1705 = vsub.f32 %v1704, 1.0
    %v1706 = vmul.f32 %v1703, %v1510
    %1708 = vrot.lane.b32.xlu0 %v1705, 64
    %v1709 = vpop.permute.xlu0 %1708
    %v1711 = vmul.f32 %v1703, %v1709
    %1713 = vrot.lane.b32.xlu0 %v1711, 32
    %v1714 = vpop.permute.xlu0 %1713
    %v1716 = vadd.f32 %v1706, %v1714
    %v1717 = vtanh.pop %v1716
    %1719 = vrot.lane.b32.xlu0 %v1717, 64
    %v1720 = vpop.permute.xlu0 %1719
    %v1722 = vmul.f32 %v1703, %v1720
    %1724 = vrot.lane.b32.xlu0 %v1722, 32
    %v1725 = vpop.permute.xlu0 %1724
    %1728 = vrot.lane.b32.xlu0 %v1696, 64
    %v1729 = vpop.permute.xlu0 %1728
    %v1731 = vsel %vm288, %v1725, %v1729
    %v1733 = vsel %vm184, %v1731, 0
    %1735 = vmatprep.subr.mxu0 %v161
    %1736 = vmatpush1.msra.mxu0 %v160
    %1737 = vmatprep.subr.mxu0 %v164
    %1738 = vmatpush1.msra.mxu0 %v163
    %1739 = vmatprep.subr.mxu0 %v167
    %1740 = vmatpush1.msra.mxu0 %v166
    %1741 = vmatprep.subr.mxu0 %v170
    %1742 = vmatpush1.msra.mxu0 %v169
    %1743 = vmatprep.subr.mxu0 %v173
    %1744 = vmatpush1.msra.mxu0 %v172
    %1745 = vmatprep.subr.mxu0 %v176
    %1746 = vmatpush1.msra.mxu0 %v175
    %1747 = vmatprep.subr.mxu0 %v179
    %1748 = vmatpush1.msra.mxu0 %v178
    %1749 = vmatprep.subr.mxu0 %v182
    %1750 = vmatpush1.msra.mxu0 %v181
    %1751 = vmatprep.subr.mxu0 0.0
    %1752 = vmatpush1.msra.mxu0 0.0
    %1753 = vmatprep.subr.mxu0 0.0
    %1754 = vmatpush1.msra.mxu0 0.0
    %1755 = vmatprep.subr.mxu0 0.0
    %1756 = vmatpush1.msra.mxu0 0.0
    %1757 = vmatprep.subr.mxu0 0.0
    %1758 = vmatpush1.msra.mxu0 0.0
    %1759 = vmatprep.subr.mxu0 0.0
    %1760 = vmatpush1.msra.mxu0 0.0
    %1761 = vmatprep.subr.mxu0 0.0
    %1762 = vmatpush1.msra.mxu0 0.0
    %1763 = vmatprep.subr.mxu0 0.0
    %1764 = vmatpush1.msra.mxu0 0.0
    %1765 = vmatprep.subr.mxu0 0.0
    %1766 = vmatpush1.msra.mxu0 0.0
    %1767 = vmatprep.subr.mxu0 0.0
    %1768 = vmatpush1.msra.mxu0 0.0
    %1769 = vmatprep.subr.mxu0 0.0
    %1770 = vmatpush1.msra.mxu0 0.0
    %1771 = vmatprep.subr.mxu0 0.0
    %1772 = vmatpush1.msra.mxu0 0.0
    %1773 = vmatprep.subr.mxu0 0.0
    %1774 = vmatpush1.msra.mxu0 0.0
    %1775 = vmatprep.subr.mxu0 0.0
    %1776 = vmatpush1.msra.mxu0 0.0
    %1777 = vmatprep.subr.mxu0 0.0
    %1778 = vmatpush1.msra.mxu0 0.0
    %1779 = vmatprep.subr.mxu0 0.0
    %1780 = vmatpush1.msra.mxu0 0.0
    %1781 = vmatprep.subr.mxu0 0.0
    %1782 = vmatpush1.msra.mxu0 0.0
    %1783 = vmatprep.subr.mxu0 0.0
    %1784 = vmatpush1.msra.mxu0 0.0
    %1785 = vmatprep.subr.mxu0 0.0
    %1786 = vmatpush1.msra.mxu0 0.0
    %1787 = vmatprep.subr.mxu0 0.0
    %1788 = vmatpush1.msra.mxu0 0.0
    %1789 = vmatprep.subr.mxu0 0.0
    %1790 = vmatpush1.msra.mxu0 0.0
    %1791 = vmatprep.subr.mxu0 0.0
    %1792 = vmatpush1.msra.mxu0 0.0
    %1793 = vmatprep.subr.mxu0 0.0
    %1794 = vmatpush1.msra.mxu0 0.0
    %1795 = vmatprep.subr.mxu0 0.0
    %1796 = vmatpush1.msra.mxu0 0.0
    %1797 = vmatprep.subr.mxu0 0.0
    %1798 = vmatpush1.msra.mxu0 0.0
    %1799 = vmatprep.mubr.f32.mxu0 0.0
    %1800 = vmatmul.mubr.f32.gmra.mrb[0].mxu0 %v1733
    %v1801 = vpop.f32.mrb[0].mxu0
    %v1802 = vpop.f32.mrb[0].mxu0
    %v1803 = vadd.f32 0.0, %v1802
    %1804 = vdwg.mxu0
    %1805 = vmatprep.subr.mxu0 0.0
    %1806 = vmatpush1.msra.mxu0 %v162
    %1807 = vmatprep.subr.mxu0 0.0
    %1808 = vmatpush1.msra.mxu0 %v165
    %1809 = vmatprep.subr.mxu0 0.0
    %1810 = vmatpush1.msra.mxu0 %v168
    %1811 = vmatprep.subr.mxu0 0.0
    %1812 = vmatpush1.msra.mxu0 %v171
    %1813 = vmatprep.subr.mxu0 0.0
    %1814 = vmatpush1.msra.mxu0 %v174
    %1815 = vmatprep.subr.mxu0 0.0
    %1816 = vmatpush1.msra.mxu0 %v177
    %1817 = vmatprep.subr.mxu0 0.0
    %1818 = vmatpush1.msra.mxu0 %v180
    %1819 = vmatprep.subr.mxu0 0.0
    %1820 = vmatpush1.msra.mxu0 %v183
    %1821 = vmatprep.subr.mxu0 0.0
    %1822 = vmatpush1.msra.mxu0 0.0
    %1823 = vmatprep.subr.mxu0 0.0
    %1824 = vmatpush1.msra.mxu0 0.0
    %1825 = vmatprep.subr.mxu0 0.0
    %1826 = vmatpush1.msra.mxu0 0.0
    %1827 = vmatprep.subr.mxu0 0.0
    %1828 = vmatpush1.msra.mxu0 0.0
    %1829 = vmatprep.subr.mxu0 0.0
    %1830 = vmatpush1.msra.mxu0 0.0
    %1831 = vmatprep.subr.mxu0 0.0
    %1832 = vmatpush1.msra.mxu0 0.0
    %1833 = vmatprep.subr.mxu0 0.0
    %1834 = vmatpush1.msra.mxu0 0.0
    %1835 = vmatprep.subr.mxu0 0.0
    %1836 = vmatpush1.msra.mxu0 0.0
    %1837 = vmatprep.subr.mxu0 0.0
    %1838 = vmatpush1.msra.mxu0 0.0
    %1839 = vmatprep.subr.mxu0 0.0
    %1840 = vmatpush1.msra.mxu0 0.0
    %1841 = vmatprep.subr.mxu0 0.0
    %1842 = vmatpush1.msra.mxu0 0.0
    %1843 = vmatprep.subr.mxu0 0.0
    %1844 = vmatpush1.msra.mxu0 0.0
    %1845 = vmatprep.subr.mxu0 0.0
    %1846 = vmatpush1.msra.mxu0 0.0
    %1847 = vmatprep.subr.mxu0 0.0
    %1848 = vmatpush1.msra.mxu0 0.0
    %1849 = vmatprep.subr.mxu0 0.0
    %1850 = vmatpush1.msra.mxu0 0.0
    %1851 = vmatprep.subr.mxu0 0.0
    %1852 = vmatpush1.msra.mxu0 0.0
    %1853 = vmatprep.subr.mxu0 0.0
    %1854 = vmatpush1.msra.mxu0 0.0
    %1855 = vmatprep.subr.mxu0 0.0
    %1856 = vmatpush1.msra.mxu0 0.0
    %1857 = vmatprep.subr.mxu0 0.0
    %1858 = vmatpush1.msra.mxu0 0.0
    %1859 = vmatprep.subr.mxu0 0.0
    %1860 = vmatpush1.msra.mxu0 0.0
    %1861 = vmatprep.subr.mxu0 0.0
    %1862 = vmatpush1.msra.mxu0 0.0
    %1863 = vmatprep.subr.mxu0 0.0
    %1864 = vmatpush1.msra.mxu0 0.0
    %1865 = vmatprep.subr.mxu0 0.0
    %1866 = vmatpush1.msra.mxu0 0.0
    %1867 = vmatprep.subr.mxu0 0.0
    %1868 = vmatpush1.msra.mxu0 0.0
    %1869 = vmatprep.mubr.f32.mxu0 0.0
    %1870 = vmatmul.mubr.f32.gmra.mrb[0].mxu0 %v1733
    %v1871 = vpop.f32.mrb[0].mxu0
    %v1872 = vadd.f32 0.0, %v1871
    %v1873 = vpop.f32.mrb[0].mxu0
    %1874 = vdwg.mxu0
    %v1875 = vadd.f32 %v1803, %v1872
    %v1876 = vadd.f32 %v1875, %v158
    %v1877 = vsub.f32 0.0, %v1876
    %v1878 = vmul.f32 %v1877, 1.442695
    %v1879 = vpow.pop %v1878
    %v1880 = vadd.f32 %v1879, 1.0
    %v1881 = vrcp.pop %v1880
    %v1882 = vmul.f32 1.0, %v1881
    %v1883 = vmul.f32 %v1882, 2.0
    %v1884 = vsub.f32 %v1883, 1.0
    %v1885 = vmul.f32 %v1882, %v1690
    %1887 = vrot.lane.b32.xlu0 %v1884, 64
    %v1888 = vpop.permute.xlu0 %1887
    %v1890 = vmul.f32 %v1882, %v1888
    %1892 = vrot.lane.b32.xlu0 %v1890, 32
    %v1893 = vpop.permute.xlu0 %1892
    %v1895 = vadd.f32 %v1885, %v1893
    %v1896 = vtanh.pop %v1895
    %1898 = vrot.lane.b32.xlu0 %v1896, 64
    %v1899 = vpop.permute.xlu0 %1898
    %v1901 = vmul.f32 %v1882, %v1899
    %v1902 = vld [vmem:[%s8] sm:$0xff]
    %v1903 = vld [vmem:[%s8 + $0x8] sm:$0xff]
    %v1904 = vld [vmem:[%s8 + $0x10] sm:$0xff]
    %v1905 = vld [vmem:[%s8 + $0x18] sm:$0xff]
    %v1906 = vld [vmem:[%s8 + $0x20] sm:$0xff]
    %v1907 = vld [vmem:[%s8 + $0x28] sm:$0xff]
    %v1908 = vld [vmem:[%s8 + $0x30] sm:$0xff]
    %v1909 = vld [vmem:[%s8 + $0x38] sm:$0xff]
    %v1910 = vld [vmem:[#allocation6] sm:$0xff]
    %v1911 = vld [vmem:[#allocation6 + $0x8] sm:$0xff]
    %v1912 = vld [vmem:[#allocation6 + $0x10] sm:$0xff]
    %v1913 = vld [vmem:[#allocation6 + $0x18] sm:$0xff]
    %v1914 = vld [vmem:[#allocation6 + $0x20] sm:$0xff]
    %v1915 = vld [vmem:[#allocation6 + $0x28] sm:$0xff]
    %v1916 = vld [vmem:[#allocation6 + $0x30] sm:$0xff]
    %v1917 = vld [vmem:[#allocation6 + $0x38] sm:$0xff]
    %v1918 = vld [vmem:[%s10] sm:$0x1]
    %v1920 = vlaneseq
    %v1921 = vshrl.u32 %v1920, 7
    %v1922 = vsub.s32 0, %v1921
    %v1923 = vrot.slane %v1918, %v1922
    %v1925 = vld [vmem:[%s7] sm:$0x1]
    %v1927 = vlaneseq
    %v1928 = vshrl.u32 %v1927, 7
    %v1929 = vsub.s32 0, %v1928
    %v1930 = vrot.slane %v1925, %v1929
    %v1932 = vsel %vm288, %v1725, 0
    %1934 = vmatprep.subr.mxu0 %v1903
    %1935 = vmatpush1.msra.mxu0 %v1902
    %1936 = vmatprep.subr.mxu0 %v1905
    %1937 = vmatpush1.msra.mxu0 %v1904
    %1938 = vmatprep.subr.mxu0 %v1907
    %1939 = vmatpush1.msra.mxu0 %v1906
    %1940 = vmatprep.subr.mxu0 %v1909
    %1941 = vmatpush1.msra.mxu0 %v1908
    %1942 = vmatprep.subr.mxu0 0.0
    %1943 = vmatpush1.msra.mxu0 0.0
    %1944 = vmatprep.subr.mxu0 0.0
    %1945 = vmatpush1.msra.mxu0 0.0
    %1946 = vmatprep.subr.mxu0 0.0
    %1947 = vmatpush1.msra.mxu0 0.0
    %1948 = vmatprep.subr.mxu0 0.0
    %1949 = vmatpush1.msra.mxu0 0.0
    %1950 = vmatprep.subr.mxu0 0.0
    %1951 = vmatpush1.msra.mxu0 0.0
    %1952 = vmatprep.subr.mxu0 0.0
    %1953 = vmatpush1.msra.mxu0 0.0
    %1954 = vmatprep.subr.mxu0 0.0
    %1955 = vmatpush1.msra.mxu0 0.0
    %1956 = vmatprep.subr.mxu0 0.0
    %1957 = vmatpush1.msra.mxu0 0.0
    %1958 = vmatprep.subr.mxu0 0.0
    %1959 = vmatpush1.msra.mxu0 0.0
    %1960 = vmatprep.subr.mxu0 0.0
    %1961 = vmatpush1.msra.mxu0 0.0
    %1962 = vmatprep.subr.mxu0 0.0
    %1963 = vmatpush1.msra.mxu0 0.0
    %1964 = vmatprep.subr.mxu0 0.0
    %1965 = vmatpush1.msra.mxu0 0.0
    %1966 = vmatprep.subr.mxu0 0.0
    %1967 = vmatpush1.msra.mxu0 0.0
    %1968 = vmatprep.subr.mxu0 0.0
    %1969 = vmatpush1.msra.mxu0 0.0
    %1970 = vmatprep.subr.mxu0 0.0
    %1971 = vmatpush1.msra.mxu0 0.0
    %1972 = vmatprep.subr.mxu0 0.0
    %1973 = vmatpush1.msra.mxu0 0.0
    %1974 = vmatprep.subr.mxu0 0.0
    %1975 = vmatpush1.msra.mxu0 0.0
    %1976 = vmatprep.subr.mxu0 0.0
    %1977 = vmatpush1.msra.mxu0 0.0
    %1978 = vmatprep.subr.mxu0 0.0
    %1979 = vmatpush1.msra.mxu0 0.0
    %1980 = vmatprep.subr.mxu0 0.0
    %1981 = vmatpush1.msra.mxu0 0.0
    %1982 = vmatprep.subr.mxu0 0.0
    %1983 = vmatpush1.msra.mxu0 0.0
    %1984 = vmatprep.subr.mxu0 0.0
    %1985 = vmatpush1.msra.mxu0 0.0
    %1986 = vmatprep.subr.mxu0 0.0
    %1987 = vmatpush1.msra.mxu0 0.0
    %1988 = vmatprep.subr.mxu0 0.0
    %1989 = vmatpush1.msra.mxu0 0.0
    %1990 = vmatprep.subr.mxu0 0.0
    %1991 = vmatpush1.msra.mxu0 0.0
    %1992 = vmatprep.subr.mxu0 0.0
    %1993 = vmatpush1.msra.mxu0 0.0
    %1994 = vmatprep.subr.mxu0 0.0
    %1995 = vmatpush1.msra.mxu0 0.0
    %1996 = vmatprep.subr.mxu0 0.0
    %1997 = vmatpush1.msra.mxu0 0.0
    %1998 = vmatprep.mubr.f32.mxu0 0.0
    %1999 = vmatmul.mubr.f32.gmra.mrb[0].mxu0 %v1932
    %v2000 = vpop.f32.mrb[0].mxu0
    %v2001 = vadd.f32 0.0, %v2000
    %v2002 = vpop.f32.mrb[0].mxu0
    %2003 = vdwg.mxu0
    %2005 = vrot.lane.b32.xlu0 %v1901, 32
    %v2006 = vpop.permute.xlu0 %2005
    %v2007 = vsel %vm288, %v2006, 0
    %2009 = vmatprep.subr.mxu0 %v1911
    %2010 = vmatpush1.msra.mxu0 %v1910
    %2011 = vmatprep.subr.mxu0 %v1913
    %2012 = vmatpush1.msra.mxu0 %v1912
    %2013 = vmatprep.subr.mxu0 %v1915
    %2014 = vmatpush1.msra.mxu0 %v1914
    %2015 = vmatprep.subr.mxu0 %v1917
    %2016 = vmatpush1.msra.mxu0 %v1916
    %2017 = vmatprep.subr.mxu0 0.0
    %2018 = vmatpush1.msra.mxu0 0.0
    %2019 = vmatprep.subr.mxu0 0.0
    %2020 = vmatpush1.msra.mxu0 0.0
    %2021 = vmatprep.subr.mxu0 0.0
    %2022 = vmatpush1.msra.mxu0 0.0
    %2023 = vmatprep.subr.mxu0 0.0
    %2024 = vmatpush1.msra.mxu0 0.0
    %2025 = vmatprep.subr.mxu0 0.0
    %2026 = vmatpush1.msra.mxu0 0.0
    %2027 = vmatprep.subr.mxu0 0.0
    %2028 = vmatpush1.msra.mxu0 0.0
    %2029 = vmatprep.subr.mxu0 0.0
    %2030 = vmatpush1.msra.mxu0 0.0
    %2031 = vmatprep.subr.mxu0 0.0
    %2032 = vmatpush1.msra.mxu0 0.0
    %2033 = vmatprep.subr.mxu0 0.0
    %2034 = vmatpush1.msra.mxu0 0.0
    %2035 = vmatprep.subr.mxu0 0.0
    %2036 = vmatpush1.msra.mxu0 0.0
    %2037 = vmatprep.subr.mxu0 0.0
    %2038 = vmatpush1.msra.mxu0 0.0
    %2039 = vmatprep.subr.mxu0 0.0
    %2040 = vmatpush1.msra.mxu0 0.0
    %2041 = vmatprep.subr.mxu0 0.0
    %2042 = vmatpush1.msra.mxu0 0.0
    %2043 = vmatprep.subr.mxu0 0.0
    %2044 = vmatpush1.msra.mxu0 0.0
    %2045 = vmatprep.subr.mxu0 0.0
    %2046 = vmatpush1.msra.mxu0 0.0
    %2047 = vmatprep.subr.mxu0 0.0
    %2048 = vmatpush1.msra.mxu0 0.0
    %2049 = vmatprep.subr.mxu0 0.0
    %2050 = vmatpush1.msra.mxu0 0.0
    %2051 = vmatprep.subr.mxu0 0.0
    %2052 = vmatpush1.msra.mxu0 0.0
    %2053 = vmatprep.subr.mxu0 0.0
    %2054 = vmatpush1.msra.mxu0 0.0
    %2055 = vmatprep.subr.mxu0 0.0
    %2056 = vmatpush1.msra.mxu0 0.0
    %2057 = vmatprep.subr.mxu0 0.0
    %2058 = vmatpush1.msra.mxu0 0.0
    %2059 = vmatprep.subr.mxu0 0.0
    %2060 = vmatpush1.msra.mxu0 0.0
    %2061 = vmatprep.subr.mxu0 0.0
    %2062 = vmatpush1.msra.mxu0 0.0
    %2063 = vmatprep.subr.mxu0 0.0
    %2064 = vmatpush1.msra.mxu0 0.0
    %2065 = vmatprep.subr.mxu0 0.0
    %2066 = vmatpush1.msra.mxu0 0.0
    %2067 = vmatprep.subr.mxu0 0.0
    %2068 = vmatpush1.msra.mxu0 0.0
    %2069 = vmatprep.subr.mxu0 0.0
    %2070 = vmatpush1.msra.mxu0 0.0
    %2071 = vmatprep.subr.mxu0 0.0
    %2072 = vmatpush1.msra.mxu0 0.0
    %2073 = vmatprep.mubr.f32.mxu0 0.0
    %2074 = vmatmul.mubr.f32.gmra.mrb[0].mxu0 %v2007
    %v2075 = vpop.f32.mrb[0].mxu0
    %v2076 = vpop.f32.mrb[0].mxu0
    %v2077 = vadd.f32 0.0, %v2076
    %2078 = vdwg.mxu0
    %v2079 = vld [vmem:[%s5] sm:$0x1]
    %v2081 = vlaneseq
    %v2082 = vshrl.u32 %v2081, 7
    %v2083 = vsub.s32 0, %v2082
    %v2084 = vrot.slane %v2079, %v2083
    %v2086 = vmul.f32 %v87, %v2084
    %v2087 = vld [vmem:[%s6] sm:$0x1]
    %v2089 = vlaneseq
    %v2090 = vshrl.u32 %v2089, 7
    %v2091 = vsub.s32 0, %v2090
    %v2092 = vrot.slane %v2087, %v2091
    %v2094 = vadd.f32 %v2086, %v2092
    %v2095 = vadd.f32 %v2094, %v2001
    %v2096 = vsub.f32 0.0, %v2095
    %v2097 = vmul.f32 %v2096, 1.442695
    %v2098 = vpow.pop %v2097
    %v2099 = vadd.f32 %v2098, 1.0
    %v2100 = vrcp.pop %v2099
    %v2101 = vmul.f32 1.0, %v2100
    %v2102 = vmul.f32 %v2101, 2.0
    %v2103 = vsub.f32 %v2102, 1.0
    %v2104 = vmul.f32 %v2101, %v1716
    %2106 = vrot.lane.b32.xlu0 %v2103, 64
    %v2107 = vpop.permute.xlu0 %2106
    %v2109 = vmul.f32 %v2101, %v2107
    %2111 = vrot.lane.b32.xlu0 %v2109, 32
    %v2112 = vpop.permute.xlu0 %2111
    %v2114 = vadd.f32 %v2104, %v2112
    %v2115 = vtanh.pop %v2114
    %2117 = vrot.lane.b32.xlu0 %v2115, 64
    %v2118 = vpop.permute.xlu0 %2117
    %v2120 = vmul.f32 %v2101, %v2118
    %2122 = vrot.lane.b32.xlu0 %v2120, 32
    %v2123 = vpop.permute.xlu0 %2122
    %v2124 = vsel %vm288, %v2123, 0
    %2126 = vmatprep.subr.mxu0 %v1903
    %2127 = vmatpush1.msra.mxu0 %v1902
    %2128 = vmatprep.subr.mxu0 %v1905
    %2129 = vmatpush1.msra.mxu0 %v1904
    %2130 = vmatprep.subr.mxu0 %v1907
    %2131 = vmatpush1.msra.mxu0 %v1906
    %2132 = vmatprep.subr.mxu0 %v1909
    %2133 = vmatpush1.msra.mxu0 %v1908
    %2134 = vmatprep.subr.mxu0 0.0
    %2135 = vmatpush1.msra.mxu0 0.0
    %2136 = vmatprep.subr.mxu0 0.0
    %2137 = vmatpush1.msra.mxu0 0.0
    %2138 = vmatprep.subr.mxu0 0.0
    %2139 = vmatpush1.msra.mxu0 0.0
    %2140 = vmatprep.subr.mxu0 0.0
    %2141 = vmatpush1.msra.mxu0 0.0
    %2142 = vmatprep.subr.mxu0 0.0
    %2143 = vmatpush1.msra.mxu0 0.0
    %2144 = vmatprep.subr.mxu0 0.0
    %2145 = vmatpush1.msra.mxu0 0.0
    %2146 = vmatprep.subr.mxu0 0.0
    %2147 = vmatpush1.msra.mxu0 0.0
    %2148 = vmatprep.subr.mxu0 0.0
    %2149 = vmatpush1.msra.mxu0 0.0
    %2150 = vmatprep.subr.mxu0 0.0
    %2151 = vmatpush1.msra.mxu0 0.0
    %2152 = vmatprep.subr.mxu0 0.0
    %2153 = vmatpush1.msra.mxu0 0.0
    %2154 = vmatprep.subr.mxu0 0.0
    %2155 = vmatpush1.msra.mxu0 0.0
    %2156 = vmatprep.subr.mxu0 0.0
    %2157 = vmatpush1.msra.mxu0 0.0
    %2158 = vmatprep.subr.mxu0 0.0
    %2159 = vmatpush1.msra.mxu0 0.0
    %2160 = vmatprep.subr.mxu0 0.0
    %2161 = vmatpush1.msra.mxu0 0.0
    %2162 = vmatprep.subr.mxu0 0.0
    %2163 = vmatpush1.msra.mxu0 0.0
    %2164 = vmatprep.subr.mxu0 0.0
    %2165 = vmatpush1.msra.mxu0 0.0
    %2166 = vmatprep.subr.mxu0 0.0
    %2167 = vmatpush1.msra.mxu0 0.0
    %2168 = vmatprep.subr.mxu0 0.0
    %2169 = vmatpush1.msra.mxu0 0.0
    %2170 = vmatprep.subr.mxu0 0.0
    %2171 = vmatpush1.msra.mxu0 0.0
    %2172 = vmatprep.subr.mxu0 0.0
    %2173 = vmatpush1.msra.mxu0 0.0
    %2174 = vmatprep.subr.mxu0 0.0
    %2175 = vmatpush1.msra.mxu0 0.0
    %2176 = vmatprep.subr.mxu0 0.0
    %2177 = vmatpush1.msra.mxu0 0.0
    %2178 = vmatprep.subr.mxu0 0.0
    %2179 = vmatpush1.msra.mxu0 0.0
    %2180 = vmatprep.subr.mxu0 0.0
    %2181 = vmatpush1.msra.mxu0 0.0
    %2182 = vmatprep.subr.mxu0 0.0
    %2183 = vmatpush1.msra.mxu0 0.0
    %2184 = vmatprep.subr.mxu0 0.0
    %2185 = vmatpush1.msra.mxu0 0.0
    %2186 = vmatprep.subr.mxu0 0.0
    %2187 = vmatpush1.msra.mxu0 0.0
    %2188 = vmatprep.subr.mxu0 0.0
    %2189 = vmatpush1.msra.mxu0 0.0
    %2190 = vmatprep.mubr.f32.mxu0 0.0
    %2191 = vmatmul.mubr.f32.gmra.mrb[0].mxu0 %v2124
    %v2192 = vpop.f32.mrb[0].mxu0
    %v2193 = vadd.f32 0.0, %v2192
    %v2194 = vpop.f32.mrb[0].mxu0
    %v2195 = vadd.f32 0.0, %v2194
    %2196 = vdwg.mxu0
    %v2197 = vadd.f32 %v2195, %v2077
    %v2198 = vadd.f32 %v2197, %v1923
    %v2199 = vsub.f32 0.0, %v2198
    %v2200 = vmul.f32 %v2199, 1.442695
    %v2201 = vpow.pop %v2200
    %v2202 = vadd.f32 %v2201, 1.0
    %v2203 = vrcp.pop %v2202
    %v2204 = vmul.f32 1.0, %v2203
    %v2205 = vmul.f32 %v2204, 2.0
    %v2206 = vsub.f32 %v2205, 1.0
    %v2207 = vmul.f32 %v2204, %v1895
    %2209 = vrot.lane.b32.xlu0 %v2206, 64
    %v2210 = vpop.permute.xlu0 %2209
    %v2212 = vmul.f32 %v2204, %v2210
    %2214 = vrot.lane.b32.xlu0 %v2212, 32
    %v2215 = vpop.permute.xlu0 %2214
    %v2217 = vadd.f32 %v2207, %v2215
    %v2218 = vtanh.pop %v2217
    %2220 = vrot.lane.b32.xlu0 %v2218, 64
    %v2221 = vpop.permute.xlu0 %2220
    %v2223 = vmul.f32 %v2204, %v2221
    %2225 = vrot.lane.b32.xlu0 %v2223, 32
    %v2226 = vpop.permute.xlu0 %2225
    %v2227 = vsel %vm288, %v2226, 0
    %2229 = vmatprep.subr.mxu0 %v1911
    %2230 = vmatpush1.msra.mxu0 %v1910
    %2231 = vmatprep.subr.mxu0 %v1913
    %2232 = vmatpush1.msra.mxu0 %v1912
    %2233 = vmatprep.subr.mxu0 %v1915
    %2234 = vmatpush1.msra.mxu0 %v1914
    %2235 = vmatprep.subr.mxu0 %v1917
    %2236 = vmatpush1.msra.mxu0 %v1916
    %2237 = vmatprep.subr.mxu0 0.0
    %2238 = vmatpush1.msra.mxu0 0.0
    %2239 = vmatprep.subr.mxu0 0.0
    %2240 = vmatpush1.msra.mxu0 0.0
    %2241 = vmatprep.subr.mxu0 0.0
    %2242 = vmatpush1.msra.mxu0 0.0
    %2243 = vmatprep.subr.mxu0 0.0
    %2244 = vmatpush1.msra.mxu0 0.0
    %2245 = vmatprep.subr.mxu0 0.0
    %2246 = vmatpush1.msra.mxu0 0.0
    %2247 = vmatprep.subr.mxu0 0.0
    %2248 = vmatpush1.msra.mxu0 0.0
    %2249 = vmatprep.subr.mxu0 0.0
    %2250 = vmatpush1.msra.mxu0 0.0
    %2251 = vmatprep.subr.mxu0 0.0
    %2252 = vmatpush1.msra.mxu0 0.0
    %2253 = vmatprep.subr.mxu0 0.0
    %2254 = vmatpush1.msra.mxu0 0.0
    %2255 = vmatprep.subr.mxu0 0.0
    %2256 = vmatpush1.msra.mxu0 0.0
    %2257 = vmatprep.subr.mxu0 0.0
    %2258 = vmatpush1.msra.mxu0 0.0
    %2259 = vmatprep.subr.mxu0 0.0
    %2260 = vmatpush1.msra.mxu0 0.0
    %2261 = vmatprep.subr.mxu0 0.0
    %2262 = vmatpush1.msra.mxu0 0.0
    %2263 = vmatprep.subr.mxu0 0.0
    %2264 = vmatpush1.msra.mxu0 0.0
    %2265 = vmatprep.subr.mxu0 0.0
    %2266 = vmatpush1.msra.mxu0 0.0
    %2267 = vmatprep.subr.mxu0 0.0
    %2268 = vmatpush1.msra.mxu0 0.0
    %2269 = vmatprep.subr.mxu0 0.0
    %2270 = vmatpush1.msra.mxu0 0.0
    %2271 = vmatprep.subr.mxu0 0.0
    %2272 = vmatpush1.msra.mxu0 0.0
    %2273 = vmatprep.subr.mxu0 0.0
    %2274 = vmatpush1.msra.mxu0 0.0
    %2275 = vmatprep.subr.mxu0 0.0
    %2276 = vmatpush1.msra.mxu0 0.0
    %2277 = vmatprep.subr.mxu0 0.0
    %2278 = vmatpush1.msra.mxu0 0.0
    %2279 = vmatprep.subr.mxu0 0.0
    %2280 = vmatpush1.msra.mxu0 0.0
    %2281 = vmatprep.subr.mxu0 0.0
    %2282 = vmatpush1.msra.mxu0 0.0
    %2283 = vmatprep.subr.mxu0 0.0
    %2284 = vmatpush1.msra.mxu0 0.0
    %2285 = vmatprep.subr.mxu0 0.0
    %2286 = vmatpush1.msra.mxu0 0.0
    %2287 = vmatprep.subr.mxu0 0.0
    %2288 = vmatpush1.msra.mxu0 0.0
    %2289 = vmatprep.subr.mxu0 0.0
    %2290 = vmatpush1.msra.mxu0 0.0
    %2291 = vmatprep.subr.mxu0 0.0
    %2292 = vmatpush1.msra.mxu0 0.0
    %2293 = vmatprep.mubr.f32.mxu0 0.0
    %2294 = vmatmul.mubr.f32.gmra.mrb[0].mxu0 %v2227
    %v2295 = vpop.f32.mrb[0].mxu0
    %v2296 = vadd.f32 0.0, %v2295
    %v2297 = vpop.f32.mrb[0].mxu0
    %v2298 = vadd.f32 0.0, %v2297
    %2299 = vdwg.mxu0
    %v2300 = vadd.f32 %v2193, %v2296
    %v2301 = vadd.f32 %v2300, %v1930
    %v2302 = vsub.f32 0.0, %v2301
    %v2303 = vmul.f32 %v2302, 1.442695
    %v2304 = vpow.pop %v2303
    %v2305 = vadd.f32 %v2304, 1.0
    %v2306 = vrcp.pop %v2305
    %v2307 = vmul.f32 1.0, %v2306
    %v2308 = vmul.f32 %v2307, 2.0
    %v2309 = vsub.f32 %v2308, 1.0
    %v2310 = vmul.f32 %v2307, %v2114
    %2312 = vrot.lane.b32.xlu0 %v2309, 64
    %v2313 = vpop.permute.xlu0 %2312
    %v2315 = vmul.f32 %v2307, %v2313
    %2317 = vrot.lane.b32.xlu0 %v2315, 32
    %v2318 = vpop.permute.xlu0 %2317
    %v2320 = vadd.f32 %v2310, %v2318
    %v2321 = vtanh.pop %v2320
    %2323 = vrot.lane.b32.xlu0 %v2321, 64
    %v2324 = vpop.permute.xlu0 %2323
    %v2326 = vmul.f32 %v2307, %v2324
    %2328 = vrot.lane.b32.xlu0 %v2326, 32
    %v2329 = vpop.permute.xlu0 %2328
    %v2330 = vsel %vm288, %v2329, 0
    %2332 = vmatprep.subr.mxu0 %v1903
    %2333 = vmatpush1.msra.mxu0 %v1902
    %2334 = vmatprep.subr.mxu0 %v1905
    %2335 = vmatpush1.msra.mxu0 %v1904
    %2336 = vmatprep.subr.mxu0 %v1907
    %2337 = vmatpush1.msra.mxu0 %v1906
    %2338 = vmatprep.subr.mxu0 %v1909
    %2339 = vmatpush1.msra.mxu0 %v1908
    %2340 = vmatprep.subr.mxu0 0.0
    %2341 = vmatpush1.msra.mxu0 0.0
    %2342 = vmatprep.subr.mxu0 0.0
    %2343 = vmatpush1.msra.mxu0 0.0
    %2344 = vmatprep.subr.mxu0 0.0
    %2345 = vmatpush1.msra.mxu0 0.0
    %2346 = vmatprep.subr.mxu0 0.0
    %2347 = vmatpush1.msra.mxu0 0.0
    %2348 = vmatprep.subr.mxu0 0.0
    %2349 = vmatpush1.msra.mxu0 0.0
    %2350 = vmatprep.subr.mxu0 0.0
    %2351 = vmatpush1.msra.mxu0 0.0
    %2352 = vmatprep.subr.mxu0 0.0
    %2353 = vmatpush1.msra.mxu0 0.0
    %2354 = vmatprep.subr.mxu0 0.0
    %2355 = vmatpush1.msra.mxu0 0.0
    %2356 = vmatprep.subr.mxu0 0.0
    %2357 = vmatpush1.msra.mxu0 0.0
    %2358 = vmatprep.subr.mxu0 0.0
    %2359 = vmatpush1.msra.mxu0 0.0
    %2360 = vmatprep.subr.mxu0 0.0
    %2361 = vmatpush1.msra.mxu0 0.0
    %2362 = vmatprep.subr.mxu0 0.0
    %2363 = vmatpush1.msra.mxu0 0.0
    %2364 = vmatprep.subr.mxu0 0.0
    %2365 = vmatpush1.msra.mxu0 0.0
    %2366 = vmatprep.subr.mxu0 0.0
    %2367 = vmatpush1.msra.mxu0 0.0
    %2368 = vmatprep.subr.mxu0 0.0
    %2369 = vmatpush1.msra.mxu0 0.0
    %2370 = vmatprep.subr.mxu0 0.0
    %2371 = vmatpush1.msra.mxu0 0.0
    %2372 = vmatprep.subr.mxu0 0.0
    %2373 = vmatpush1.msra.mxu0 0.0
    %2374 = vmatprep.subr.mxu0 0.0
    %2375 = vmatpush1.msra.mxu0 0.0
    %2376 = vmatprep.subr.mxu0 0.0
    %2377 = vmatpush1.msra.mxu0 0.0
    %2378 = vmatprep.subr.mxu0 0.0
    %2379 = vmatpush1.msra.mxu0 0.0
    %2380 = vmatprep.subr.mxu0 0.0
    %2381 = vmatpush1.msra.mxu0 0.0
    %2382 = vmatprep.subr.mxu0 0.0
    %2383 = vmatpush1.msra.mxu0 0.0
    %2384 = vmatprep.subr.mxu0 0.0
    %2385 = vmatpush1.msra.mxu0 0.0
    %2386 = vmatprep.subr.mxu0 0.0
    %2387 = vmatpush1.msra.mxu0 0.0
    %2388 = vmatprep.subr.mxu0 0.0
    %2389 = vmatpush1.msra.mxu0 0.0
    %2390 = vmatprep.subr.mxu0 0.0
    %2391 = vmatpush1.msra.mxu0 0.0
    %2392 = vmatprep.subr.mxu0 0.0
    %2393 = vmatpush1.msra.mxu0 0.0
    %2394 = vmatprep.subr.mxu0 0.0
    %2395 = vmatpush1.msra.mxu0 0.0
    %2396 = vmatprep.mubr.f32.mxu0 0.0
    %2397 = vmatmul.mubr.f32.gmra.mrb[0].mxu0 %v2330
    %v2398 = vpop.f32.mrb[0].mxu0
    %v2399 = vadd.f32 0.0, %v2398
    %v2400 = vpop.f32.mrb[0].mxu0
    %v2401 = vadd.f32 0.0, %v2400
    %2402 = vdwg.mxu0
    %v2403 = vadd.f32 %v2401, %v2298
    %v2404 = vadd.f32 %v2403, %v1923
    %v2405 = vsub.f32 0.0, %v2404
    %v2406 = vmul.f32 %v2405, 1.442695
    %v2407 = vpow.pop %v2406
    %v2408 = vadd.f32 %v2407, 1.0
    %v2409 = vrcp.pop %v2408
    %v2410 = vmul.f32 1.0, %v2409
    %v2411 = vmul.f32 %v2410, 2.0
    %v2412 = vsub.f32 %v2411, 1.0
    %v2413 = vmul.f32 %v2410, %v2217
    %2415 = vrot.lane.b32.xlu0 %v2412, 64
    %v2416 = vpop.permute.xlu0 %2415
    %v2418 = vmul.f32 %v2410, %v2416
    %2420 = vrot.lane.b32.xlu0 %v2418, 32
    %v2421 = vpop.permute.xlu0 %2420
    %v2423 = vadd.f32 %v2413, %v2421
    %v2424 = vtanh.pop %v2423
    %2426 = vrot.lane.b32.xlu0 %v2424, 64
    %v2427 = vpop.permute.xlu0 %2426
    %v2429 = vmul.f32 %v2410, %v2427
    %2431 = vrot.lane.b32.xlu0 %v2429, 32
    %v2432 = vpop.permute.xlu0 %2431
    %v2433 = vsel %vm288, %v2432, 0
    %2435 = vmatprep.subr.mxu0 %v1911
    %2436 = vmatpush1.msra.mxu0 %v1910
    %2437 = vmatprep.subr.mxu0 %v1913
    %2438 = vmatpush1.msra.mxu0 %v1912
    %2439 = vmatprep.subr.mxu0 %v1915
    %2440 = vmatpush1.msra.mxu0 %v1914
    %2441 = vmatprep.subr.mxu0 %v1917
    %2442 = vmatpush1.msra.mxu0 %v1916
    %2443 = vmatprep.subr.mxu0 0.0
    %2444 = vmatpush1.msra.mxu0 0.0
    %2445 = vmatprep.subr.mxu0 0.0
    %2446 = vmatpush1.msra.mxu0 0.0
    %2447 = vmatprep.subr.mxu0 0.0
    %2448 = vmatpush1.msra.mxu0 0.0
    %2449 = vmatprep.subr.mxu0 0.0
    %2450 = vmatpush1.msra.mxu0 0.0
    %2451 = vmatprep.subr.mxu0 0.0
    %2452 = vmatpush1.msra.mxu0 0.0
    %2453 = vmatprep.subr.mxu0 0.0
    %2454 = vmatpush1.msra.mxu0 0.0
    %2455 = vmatprep.subr.mxu0 0.0
    %2456 = vmatpush1.msra.mxu0 0.0
    %2457 = vmatprep.subr.mxu0 0.0
    %2458 = vmatpush1.msra.mxu0 0.0
    %2459 = vmatprep.subr.mxu0 0.0
    %2460 = vmatpush1.msra.mxu0 0.0
    %2461 = vmatprep.subr.mxu0 0.0
    %2462 = vmatpush1.msra.mxu0 0.0
    %2463 = vmatprep.subr.mxu0 0.0
    %2464 = vmatpush1.msra.mxu0 0.0
    %2465 = vmatprep.subr.mxu0 0.0
    %2466 = vmatpush1.msra.mxu0 0.0
    %2467 = vmatprep.subr.mxu0 0.0
    %2468 = vmatpush1.msra.mxu0 0.0
    %2469 = vmatprep.subr.mxu0 0.0
    %2470 = vmatpush1.msra.mxu0 0.0
    %2471 = vmatprep.subr.mxu0 0.0
    %2472 = vmatpush1.msra.mxu0 0.0
    %2473 = vmatprep.subr.mxu0 0.0
    %2474 = vmatpush1.msra.mxu0 0.0
    %2475 = vmatprep.subr.mxu0 0.0
    %2476 = vmatpush1.msra.mxu0 0.0
    %2477 = vmatprep.subr.mxu0 0.0
    %2478 = vmatpush1.msra.mxu0 0.0
    %2479 = vmatprep.subr.mxu0 0.0
    %2480 = vmatpush1.msra.mxu0 0.0
    %2481 = vmatprep.subr.mxu0 0.0
    %2482 = vmatpush1.msra.mxu0 0.0
    %2483 = vmatprep.subr.mxu0 0.0
    %2484 = vmatpush1.msra.mxu0 0.0
    %2485 = vmatprep.subr.mxu0 0.0
    %2486 = vmatpush1.msra.mxu0 0.0
    %2487 = vmatprep.subr.mxu0 0.0
    %2488 = vmatpush1.msra.mxu0 0.0
    %2489 = vmatprep.subr.mxu0 0.0
    %2490 = vmatpush1.msra.mxu0 0.0
    %2491 = vmatprep.subr.mxu0 0.0
    %2492 = vmatpush1.msra.mxu0 0.0
    %2493 = vmatprep.subr.mxu0 0.0
    %2494 = vmatpush1.msra.mxu0 0.0
    %2495 = vmatprep.subr.mxu0 0.0
    %2496 = vmatpush1.msra.mxu0 0.0
    %2497 = vmatprep.subr.mxu0 0.0
    %2498 = vmatpush1.msra.mxu0 0.0
    %2499 = vmatprep.mubr.f32.mxu0 0.0
    %2500 = vmatmul.mubr.f32.gmra.mrb[0].mxu0 %v2433
    %v2501 = vpop.f32.mrb[0].mxu0
    %v2502 = vadd.f32 0.0, %v2501
    %v2503 = vpop.f32.mrb[0].mxu0
    %v2504 = vadd.f32 0.0, %v2503
    %2505 = vdwg.mxu0
    %v2506 = vadd.f32 %v2399, %v2502
    %v2507 = vadd.f32 %v2506, %v1930
    %v2508 = vsub.f32 0.0, %v2507
    %v2509 = vmul.f32 %v2508, 1.442695
    %v2510 = vpow.pop %v2509
    %v2511 = vadd.f32 %v2510, 1.0
    %v2512 = vrcp.pop %v2511
    %v2513 = vmul.f32 1.0, %v2512
    %v2514 = vmul.f32 %v2513, 2.0
    %v2515 = vsub.f32 %v2514, 1.0
    %v2516 = vmul.f32 %v2513, %v2320
    %2518 = vrot.lane.b32.xlu0 %v2515, 64
    %v2519 = vpop.permute.xlu0 %2518
    %v2521 = vmul.f32 %v2513, %v2519
    %2523 = vrot.lane.b32.xlu0 %v2521, 32
    %v2524 = vpop.permute.xlu0 %2523
    %v2526 = vadd.f32 %v2516, %v2524
    %v2527 = vtanh.pop %v2526
    %2529 = vrot.lane.b32.xlu0 %v2527, 64
    %v2530 = vpop.permute.xlu0 %2529
    %v2532 = vmul.f32 %v2513, %v2530
    %2534 = vrot.lane.b32.xlu0 %v2532, 32
    %v2535 = vpop.permute.xlu0 %2534
    %v2536 = vsel %vm288, %v2535, 0
    %2538 = vmatprep.subr.mxu0 %v1903
    %2539 = vmatpush1.msra.mxu0 %v1902
    %2540 = vmatprep.subr.mxu0 %v1905
    %2541 = vmatpush1.msra.mxu0 %v1904
    %2542 = vmatprep.subr.mxu0 %v1907
    %2543 = vmatpush1.msra.mxu0 %v1906
    %2544 = vmatprep.subr.mxu0 %v1909
    %2545 = vmatpush1.msra.mxu0 %v1908
    %2546 = vmatprep.subr.mxu0 0.0
    %2547 = vmatpush1.msra.mxu0 0.0
    %2548 = vmatprep.subr.mxu0 0.0
    %2549 = vmatpush1.msra.mxu0 0.0
    %2550 = vmatprep.subr.mxu0 0.0
    %2551 = vmatpush1.msra.mxu0 0.0
    %2552 = vmatprep.subr.mxu0 0.0
    %2553 = vmatpush1.msra.mxu0 0.0
    %2554 = vmatprep.subr.mxu0 0.0
    %2555 = vmatpush1.msra.mxu0 0.0
    %2556 = vmatprep.subr.mxu0 0.0
    %2557 = vmatpush1.msra.mxu0 0.0
    %2558 = vmatprep.subr.mxu0 0.0
    %2559 = vmatpush1.msra.mxu0 0.0
    %2560 = vmatprep.subr.mxu0 0.0
    %2561 = vmatpush1.msra.mxu0 0.0
    %2562 = vmatprep.subr.mxu0 0.0
    %2563 = vmatpush1.msra.mxu0 0.0
    %2564 = vmatprep.subr.mxu0 0.0
    %2565 = vmatpush1.msra.mxu0 0.0
    %2566 = vmatprep.subr.mxu0 0.0
    %2567 = vmatpush1.msra.mxu0 0.0
    %2568 = vmatprep.subr.mxu0 0.0
    %2569 = vmatpush1.msra.mxu0 0.0
    %2570 = vmatprep.subr.mxu0 0.0
    %2571 = vmatpush1.msra.mxu0 0.0
    %2572 = vmatprep.subr.mxu0 0.0
    %2573 = vmatpush1.msra.mxu0 0.0
    %2574 = vmatprep.subr.mxu0 0.0
    %2575 = vmatpush1.msra.mxu0 0.0
    %2576 = vmatprep.subr.mxu0 0.0
    %2577 = vmatpush1.msra.mxu0 0.0
    %2578 = vmatprep.subr.mxu0 0.0
    %2579 = vmatpush1.msra.mxu0 0.0
    %2580 = vmatprep.subr.mxu0 0.0
    %2581 = vmatpush1.msra.mxu0 0.0
    %2582 = vmatprep.subr.mxu0 0.0
    %2583 = vmatpush1.msra.mxu0 0.0
    %2584 = vmatprep.subr.mxu0 0.0
    %2585 = vmatpush1.msra.mxu0 0.0
    %2586 = vmatprep.subr.mxu0 0.0
    %2587 = vmatpush1.msra.mxu0 0.0
    %2588 = vmatprep.subr.mxu0 0.0
    %2589 = vmatpush1.msra.mxu0 0.0
    %2590 = vmatprep.subr.mxu0 0.0
    %2591 = vmatpush1.msra.mxu0 0.0
    %2592 = vmatprep.subr.mxu0 0.0
    %2593 = vmatpush1.msra.mxu0 0.0
    %2594 = vmatprep.subr.mxu0 0.0
    %2595 = vmatpush1.msra.mxu0 0.0
    %2596 = vmatprep.subr.mxu0 0.0
    %2597 = vmatpush1.msra.mxu0 0.0
    %2598 = vmatprep.subr.mxu0 0.0
    %2599 = vmatpush1.msra.mxu0 0.0
    %2600 = vmatprep.subr.mxu0 0.0
    %2601 = vmatpush1.msra.mxu0 0.0
    %2602 = vmatprep.mubr.f32.mxu0 0.0
    %2603 = vmatmul.mubr.f32.gmra.mrb[0].mxu0 %v2536
    %v2604 = vpop.f32.mrb[0].mxu0
    %v2605 = vadd.f32 0.0, %v2604
    %v2606 = vpop.f32.mrb[0].mxu0
    %v2607 = vadd.f32 0.0, %v2606
    %2608 = vdwg.mxu0
    %v2609 = vadd.f32 %v2607, %v2504
    %v2610 = vadd.f32 %v2609, %v1923
    %v2611 = vsub.f32 0.0, %v2610
    %v2612 = vmul.f32 %v2611, 1.442695
    %v2613 = vpow.pop %v2612
    %v2614 = vadd.f32 %v2613, 1.0
    %v2615 = vrcp.pop %v2614
    %v2616 = vmul.f32 1.0, %v2615
    %v2617 = vmul.f32 %v2616, 2.0
    %v2618 = vsub.f32 %v2617, 1.0
    %v2619 = vmul.f32 %v2616, %v2423
    %2621 = vrot.lane.b32.xlu0 %v2618, 64
    %v2622 = vpop.permute.xlu0 %2621
    %v2624 = vmul.f32 %v2616, %v2622
    %2626 = vrot.lane.b32.xlu0 %v2624, 32
    %v2627 = vpop.permute.xlu0 %2626
    %v2629 = vadd.f32 %v2619, %v2627
    %v2630 = vtanh.pop %v2629
    %2632 = vrot.lane.b32.xlu0 %v2630, 64
    %v2633 = vpop.permute.xlu0 %2632
    %v2635 = vmul.f32 %v2616, %v2633
    %2637 = vrot.lane.b32.xlu0 %v2635, 32
    %v2638 = vpop.permute.xlu0 %2637
    %v2639 = vsel %vm288, %v2638, 0
    %2641 = vmatprep.subr.mxu0 %v1911
    %2642 = vmatpush1.msra.mxu0 %v1910
    %2643 = vmatprep.subr.mxu0 %v1913
    %2644 = vmatpush1.msra.mxu0 %v1912
    %2645 = vmatprep.subr.mxu0 %v1915
    %2646 = vmatpush1.msra.mxu0 %v1914
    %2647 = vmatprep.subr.mxu0 %v1917
    %2648 = vmatpush1.msra.mxu0 %v1916
    %2649 = vmatprep.subr.mxu0 0.0
    %2650 = vmatpush1.msra.mxu0 0.0
    %2651 = vmatprep.subr.mxu0 0.0
    %2652 = vmatpush1.msra.mxu0 0.0
    %2653 = vmatprep.subr.mxu0 0.0
    %2654 = vmatpush1.msra.mxu0 0.0
    %2655 = vmatprep.subr.mxu0 0.0
    %2656 = vmatpush1.msra.mxu0 0.0
    %2657 = vmatprep.subr.mxu0 0.0
    %2658 = vmatpush1.msra.mxu0 0.0
    %2659 = vmatprep.subr.mxu0 0.0
    %2660 = vmatpush1.msra.mxu0 0.0
    %2661 = vmatprep.subr.mxu0 0.0
    %2662 = vmatpush1.msra.mxu0 0.0
    %2663 = vmatprep.subr.mxu0 0.0
    %2664 = vmatpush1.msra.mxu0 0.0
    %2665 = vmatprep.subr.mxu0 0.0
    %2666 = vmatpush1.msra.mxu0 0.0
    %2667 = vmatprep.subr.mxu0 0.0
    %2668 = vmatpush1.msra.mxu0 0.0
    %2669 = vmatprep.subr.mxu0 0.0
    %2670 = vmatpush1.msra.mxu0 0.0
    %2671 = vmatprep.subr.mxu0 0.0
    %2672 = vmatpush1.msra.mxu0 0.0
    %2673 = vmatprep.subr.mxu0 0.0
    %2674 = vmatpush1.msra.mxu0 0.0
    %2675 = vmatprep.subr.mxu0 0.0
    %2676 = vmatpush1.msra.mxu0 0.0
    %2677 = vmatprep.subr.mxu0 0.0
    %2678 = vmatpush1.msra.mxu0 0.0
    %2679 = vmatprep.subr.mxu0 0.0
    %2680 = vmatpush1.msra.mxu0 0.0
    %2681 = vmatprep.subr.mxu0 0.0
    %2682 = vmatpush1.msra.mxu0 0.0
    %2683 = vmatprep.subr.mxu0 0.0
    %2684 = vmatpush1.msra.mxu0 0.0
    %2685 = vmatprep.subr.mxu0 0.0
    %2686 = vmatpush1.msra.mxu0 0.0
    %2687 = vmatprep.subr.mxu0 0.0
    %2688 = vmatpush1.msra.mxu0 0.0
    %2689 = vmatprep.subr.mxu0 0.0
    %2690 = vmatpush1.msra.mxu0 0.0
    %2691 = vmatprep.subr.mxu0 0.0
    %2692 = vmatpush1.msra.mxu0 0.0
    %2693 = vmatprep.subr.mxu0 0.0
    %2694 = vmatpush1.msra.mxu0 0.0
    %2695 = vmatprep.subr.mxu0 0.0
    %2696 = vmatpush1.msra.mxu0 0.0
    %2697 = vmatprep.subr.mxu0 0.0
    %2698 = vmatpush1.msra.mxu0 0.0
    %2699 = vmatprep.subr.mxu0 0.0
    %2700 = vmatpush1.msra.mxu0 0.0
    %2701 = vmatprep.subr.mxu0 0.0
    %2702 = vmatpush1.msra.mxu0 0.0
    %2703 = vmatprep.subr.mxu0 0.0
    %2704 = vmatpush1.msra.mxu0 0.0
    %2705 = vmatprep.mubr.f32.mxu0 0.0
    %2706 = vmatmul.mubr.f32.gmra.mrb[0].mxu0 %v2639
    %v2707 = vpop.f32.mrb[0].mxu0
    %v2708 = vadd.f32 0.0, %v2707
    %v2709 = vpop.f32.mrb[0].mxu0
    %v2710 = vadd.f32 0.0, %v2709
    %2711 = vdwg.mxu0
    %v2712 = vadd.f32 %v2605, %v2708
    %v2713 = vadd.f32 %v2712, %v1930
    %v2714 = vsub.f32 0.0, %v2713
    %v2715 = vmul.f32 %v2714, 1.442695
    %v2716 = vpow.pop %v2715
    %v2717 = vadd.f32 %v2716, 1.0
    %v2718 = vrcp.pop %v2717
    %v2719 = vmul.f32 1.0, %v2718
    %v2720 = vmul.f32 %v2719, 2.0
    %v2721 = vsub.f32 %v2720, 1.0
    %v2722 = vmul.f32 %v2719, %v2526
    %2724 = vrot.lane.b32.xlu0 %v2721, 64
    %v2725 = vpop.permute.xlu0 %2724
    %v2727 = vmul.f32 %v2719, %v2725
    %2729 = vrot.lane.b32.xlu0 %v2727, 32
    %v2730 = vpop.permute.xlu0 %2729
    %v2732 = vadd.f32 %v2722, %v2730
    %v2733 = vtanh.pop %v2732
    %2735 = vrot.lane.b32.xlu0 %v2733, 64
    %v2736 = vpop.permute.xlu0 %2735
    %v2738 = vmul.f32 %v2719, %v2736
    %2740 = vrot.lane.b32.xlu0 %v2738, 32
    %v2741 = vpop.permute.xlu0 %2740
    %v2742 = vsel %vm288, %v2741, 0
    %2744 = vmatprep.subr.mxu0 %v1903
    %2745 = vmatpush1.msra.mxu0 %v1902
    %2746 = vmatprep.subr.mxu0 %v1905
    %2747 = vmatpush1.msra.mxu0 %v1904
    %2748 = vmatprep.subr.mxu0 %v1907
    %2749 = vmatpush1.msra.mxu0 %v1906
    %2750 = vmatprep.subr.mxu0 %v1909
    %2751 = vmatpush1.msra.mxu0 %v1908
    %2752 = vmatprep.subr.mxu0 0.0
    %2753 = vmatpush1.msra.mxu0 0.0
    %2754 = vmatprep.subr.mxu0 0.0
    %2755 = vmatpush1.msra.mxu0 0.0
    %2756 = vmatprep.subr.mxu0 0.0
    %2757 = vmatpush1.msra.mxu0 0.0
    %2758 = vmatprep.subr.mxu0 0.0
    %2759 = vmatpush1.msra.mxu0 0.0
    %2760 = vmatprep.subr.mxu0 0.0
    %2761 = vmatpush1.msra.mxu0 0.0
    %2762 = vmatprep.subr.mxu0 0.0
    %2763 = vmatpush1.msra.mxu0 0.0
    %2764 = vmatprep.subr.mxu0 0.0
    %2765 = vmatpush1.msra.mxu0 0.0
    %2766 = vmatprep.subr.mxu0 0.0
    %2767 = vmatpush1.msra.mxu0 0.0
    %2768 = vmatprep.subr.mxu0 0.0
    %2769 = vmatpush1.msra.mxu0 0.0
    %2770 = vmatprep.subr.mxu0 0.0
    %2771 = vmatpush1.msra.mxu0 0.0
    %2772 = vmatprep.subr.mxu0 0.0
    %2773 = vmatpush1.msra.mxu0 0.0
    %2774 = vmatprep.subr.mxu0 0.0
    %2775 = vmatpush1.msra.mxu0 0.0
    %2776 = vmatprep.subr.mxu0 0.0
    %2777 = vmatpush1.msra.mxu0 0.0
    %2778 = vmatprep.subr.mxu0 0.0
    %2779 = vmatpush1.msra.mxu0 0.0
    %2780 = vmatprep.subr.mxu0 0.0
    %2781 = vmatpush1.msra.mxu0 0.0
    %2782 = vmatprep.subr.mxu0 0.0
    %2783 = vmatpush1.msra.mxu0 0.0
    %2784 = vmatprep.subr.mxu0 0.0
    %2785 = vmatpush1.msra.mxu0 0.0
    %2786 = vmatprep.subr.mxu0 0.0
    %2787 = vmatpush1.msra.mxu0 0.0
    %2788 = vmatprep.subr.mxu0 0.0
    %2789 = vmatpush1.msra.mxu0 0.0
    %2790 = vmatprep.subr.mxu0 0.0
    %2791 = vmatpush1.msra.mxu0 0.0
    %2792 = vmatprep.subr.mxu0 0.0
    %2793 = vmatpush1.msra.mxu0 0.0
    %2794 = vmatprep.subr.mxu0 0.0
    %2795 = vmatpush1.msra.mxu0 0.0
    %2796 = vmatprep.subr.mxu0 0.0
    %2797 = vmatpush1.msra.mxu0 0.0
    %2798 = vmatprep.subr.mxu0 0.0
    %2799 = vmatpush1.msra.mxu0 0.0
    %2800 = vmatprep.subr.mxu0 0.0
    %2801 = vmatpush1.msra.mxu0 0.0
    %2802 = vmatprep.subr.mxu0 0.0
    %2803 = vmatpush1.msra.mxu0 0.0
    %2804 = vmatprep.subr.mxu0 0.0
    %2805 = vmatpush1.msra.mxu0 0.0
    %2806 = vmatprep.subr.mxu0 0.0
    %2807 = vmatpush1.msra.mxu0 0.0
    %2808 = vmatprep.mubr.f32.mxu0 0.0
    %2809 = vmatmul.mubr.f32.gmra.mrb[0].mxu0 %v2742
    %v2810 = vpop.f32.mrb[0].mxu0
    %v2811 = vadd.f32 0.0, %v2810
    %v2812 = vpop.f32.mrb[0].mxu0
    %v2813 = vadd.f32 0.0, %v2812
    %2814 = vdwg.mxu0
    %v2815 = vadd.f32 %v2813, %v2710
    %v2816 = vadd.f32 %v2815, %v1923
    %v2817 = vsub.f32 0.0, %v2816
    %v2818 = vmul.f32 %v2817, 1.442695
    %v2819 = vpow.pop %v2818
    %v2820 = vadd.f32 %v2819, 1.0
    %v2821 = vrcp.pop %v2820
    %v2822 = vmul.f32 1.0, %v2821
    %v2823 = vmul.f32 %v2822, 2.0
    %v2824 = vsub.f32 %v2823, 1.0
    %v2825 = vmul.f32 %v2822, %v2629
    %2827 = vrot.lane.b32.xlu0 %v2824, 64
    %v2828 = vpop.permute.xlu0 %2827
    %v2830 = vmul.f32 %v2822, %v2828
    %2832 = vrot.lane.b32.xlu0 %v2830, 32
    %v2833 = vpop.permute.xlu0 %2832
    %v2835 = vadd.f32 %v2825, %v2833
    %v2836 = vtanh.pop %v2835
    %2838 = vrot.lane.b32.xlu0 %v2836, 64
    %v2839 = vpop.permute.xlu0 %2838
    %v2841 = vmul.f32 %v2822, %v2839
    %2843 = vrot.lane.b32.xlu0 %v2841, 32
    %v2844 = vpop.permute.xlu0 %2843
    %v2845 = vsel %vm288, %v2844, 0
    %2847 = vmatprep.subr.mxu0 %v1911
    %2848 = vmatpush1.msra.mxu0 %v1910
    %2849 = vmatprep.subr.mxu0 %v1913
    %2850 = vmatpush1.msra.mxu0 %v1912
    %2851 = vmatprep.subr.mxu0 %v1915
    %2852 = vmatpush1.msra.mxu0 %v1914
    %2853 = vmatprep.subr.mxu0 %v1917
    %2854 = vmatpush1.msra.mxu0 %v1916
    %2855 = vmatprep.subr.mxu0 0.0
    %2856 = vmatpush1.msra.mxu0 0.0
    %2857 = vmatprep.subr.mxu0 0.0
    %2858 = vmatpush1.msra.mxu0 0.0
    %2859 = vmatprep.subr.mxu0 0.0
    %2860 = vmatpush1.msra.mxu0 0.0
    %2861 = vmatprep.subr.mxu0 0.0
    %2862 = vmatpush1.msra.mxu0 0.0
    %2863 = vmatprep.subr.mxu0 0.0
    %2864 = vmatpush1.msra.mxu0 0.0
    %2865 = vmatprep.subr.mxu0 0.0
    %2866 = vmatpush1.msra.mxu0 0.0
    %2867 = vmatprep.subr.mxu0 0.0
    %2868 = vmatpush1.msra.mxu0 0.0
    %2869 = vmatprep.subr.mxu0 0.0
    %2870 = vmatpush1.msra.mxu0 0.0
    %2871 = vmatprep.subr.mxu0 0.0
    %2872 = vmatpush1.msra.mxu0 0.0
    %2873 = vmatprep.subr.mxu0 0.0
    %2874 = vmatpush1.msra.mxu0 0.0
    %2875 = vmatprep.subr.mxu0 0.0
    %2876 = vmatpush1.msra.mxu0 0.0
    %2877 = vmatprep.subr.mxu0 0.0
    %2878 = vmatpush1.msra.mxu0 0.0
    %2879 = vmatprep.subr.mxu0 0.0
    %2880 = vmatpush1.msra.mxu0 0.0
    %2881 = vmatprep.subr.mxu0 0.0
    %2882 = vmatpush1.msra.mxu0 0.0
    %2883 = vmatprep.subr.mxu0 0.0
    %2884 = vmatpush1.msra.mxu0 0.0
    %2885 = vmatprep.subr.mxu0 0.0
    %2886 = vmatpush1.msra.mxu0 0.0
    %2887 = vmatprep.subr.mxu0 0.0
    %2888 = vmatpush1.msra.mxu0 0.0
    %2889 = vmatprep.subr.mxu0 0.0
    %2890 = vmatpush1.msra.mxu0 0.0
    %2891 = vmatprep.subr.mxu0 0.0
    %2892 = vmatpush1.msra.mxu0 0.0
    %2893 = vmatprep.subr.mxu0 0.0
    %2894 = vmatpush1.msra.mxu0 0.0
    %2895 = vmatprep.subr.mxu0 0.0
    %2896 = vmatpush1.msra.mxu0 0.0
    %2897 = vmatprep.subr.mxu0 0.0
    %2898 = vmatpush1.msra.mxu0 0.0
    %2899 = vmatprep.subr.mxu0 0.0
    %2900 = vmatpush1.msra.mxu0 0.0
    %2901 = vmatprep.subr.mxu0 0.0
    %2902 = vmatpush1.msra.mxu0 0.0
    %2903 = vmatprep.subr.mxu0 0.0
    %2904 = vmatpush1.msra.mxu0 0.0
    %2905 = vmatprep.subr.mxu0 0.0
    %2906 = vmatpush1.msra.mxu0 0.0
    %2907 = vmatprep.subr.mxu0 0.0
    %2908 = vmatpush1.msra.mxu0 0.0
    %2909 = vmatprep.subr.mxu0 0.0
    %2910 = vmatpush1.msra.mxu0 0.0
    %2911 = vmatprep.mubr.f32.mxu0 0.0
    %2912 = vmatmul.mubr.f32.gmra.mrb[0].mxu0 %v2845
    %v2913 = vpop.f32.mrb[0].mxu0
    %v2914 = vadd.f32 0.0, %v2913
    %v2915 = vpop.f32.mrb[0].mxu0
    %v2916 = vadd.f32 0.0, %v2915
    %2917 = vdwg.mxu0
    %v2918 = vadd.f32 %v2811, %v2914
    %v2919 = vadd.f32 %v2918, %v1930
    %v2920 = vsub.f32 0.0, %v2919
    %v2921 = vmul.f32 %v2920, 1.442695
    %v2922 = vpow.pop %v2921
    %v2923 = vadd.f32 %v2922, 1.0
    %v2924 = vrcp.pop %v2923
    %v2925 = vmul.f32 1.0, %v2924
    %v2926 = vmul.f32 %v2925, 2.0
    %v2927 = vsub.f32 %v2926, 1.0
    %v2928 = vmul.f32 %v2925, %v2732
    %2930 = vrot.lane.b32.xlu0 %v2927, 64
    %v2931 = vpop.permute.xlu0 %2930
    %v2933 = vmul.f32 %v2925, %v2931
    %2935 = vrot.lane.b32.xlu0 %v2933, 32
    %v2936 = vpop.permute.xlu0 %2935
    %v2938 = vadd.f32 %v2928, %v2936
    %v2939 = vtanh.pop %v2938
    %2941 = vrot.lane.b32.xlu0 %v2939, 64
    %v2942 = vpop.permute.xlu0 %2941
    %v2944 = vmul.f32 %v2925, %v2942
    %2946 = vrot.lane.b32.xlu0 %v2944, 32
    %v2947 = vpop.permute.xlu0 %2946
    %v2948 = vsel %vm288, %v2947, 0
    %2950 = vmatprep.subr.mxu0 %v1903
    %2951 = vmatpush1.msra.mxu0 %v1902
    %2952 = vmatprep.subr.mxu0 %v1905
    %2953 = vmatpush1.msra.mxu0 %v1904
    %2954 = vmatprep.subr.mxu0 %v1907
    %2955 = vmatpush1.msra.mxu0 %v1906
    %2956 = vmatprep.subr.mxu0 %v1909
    %2957 = vmatpush1.msra.mxu0 %v1908
    %2958 = vmatprep.subr.mxu0 0.0
    %2959 = vmatpush1.msra.mxu0 0.0
    %2960 = vmatprep.subr.mxu0 0.0
    %2961 = vmatpush1.msra.mxu0 0.0
    %2962 = vmatprep.subr.mxu0 0.0
    %2963 = vmatpush1.msra.mxu0 0.0
    %2964 = vmatprep.subr.mxu0 0.0
    %2965 = vmatpush1.msra.mxu0 0.0
    %2966 = vmatprep.subr.mxu0 0.0
    %2967 = vmatpush1.msra.mxu0 0.0
    %2968 = vmatprep.subr.mxu0 0.0
    %2969 = vmatpush1.msra.mxu0 0.0
    %2970 = vmatprep.subr.mxu0 0.0
    %2971 = vmatpush1.msra.mxu0 0.0
    %2972 = vmatprep.subr.mxu0 0.0
    %2973 = vmatpush1.msra.mxu0 0.0
    %2974 = vmatprep.subr.mxu0 0.0
    %2975 = vmatpush1.msra.mxu0 0.0
    %2976 = vmatprep.subr.mxu0 0.0
    %2977 = vmatpush1.msra.mxu0 0.0
    %2978 = vmatprep.subr.mxu0 0.0
    %2979 = vmatpush1.msra.mxu0 0.0
    %2980 = vmatprep.subr.mxu0 0.0
    %2981 = vmatpush1.msra.mxu0 0.0
    %2982 = vmatprep.subr.mxu0 0.0
    %2983 = vmatpush1.msra.mxu0 0.0
    %2984 = vmatprep.subr.mxu0 0.0
    %2985 = vmatpush1.msra.mxu0 0.0
    %2986 = vmatprep.subr.mxu0 0.0
    %2987 = vmatpush1.msra.mxu0 0.0
    %2988 = vmatprep.subr.mxu0 0.0
    %2989 = vmatpush1.msra.mxu0 0.0
    %2990 = vmatprep.subr.mxu0 0.0
    %2991 = vmatpush1.msra.mxu0 0.0
    %2992 = vmatprep.subr.mxu0 0.0
    %2993 = vmatpush1.msra.mxu0 0.0
    %2994 = vmatprep.subr.mxu0 0.0
    %2995 = vmatpush1.msra.mxu0 0.0
    %2996 = vmatprep.subr.mxu0 0.0
    %2997 = vmatpush1.msra.mxu0 0.0
    %2998 = vmatprep.subr.mxu0 0.0
    %2999 = vmatpush1.msra.mxu0 0.0
    %3000 = vmatprep.subr.mxu0 0.0
    %3001 = vmatpush1.msra.mxu0 0.0
    %3002 = vmatprep.subr.mxu0 0.0
    %3003 = vmatpush1.msra.mxu0 0.0
    %3004 = vmatprep.subr.mxu0 0.0
    %3005 = vmatpush1.msra.mxu0 0.0
    %3006 = vmatprep.subr.mxu0 0.0
    %3007 = vmatpush1.msra.mxu0 0.0
    %3008 = vmatprep.subr.mxu0 0.0
    %3009 = vmatpush1.msra.mxu0 0.0
    %3010 = vmatprep.subr.mxu0 0.0
    %3011 = vmatpush1.msra.mxu0 0.0
    %3012 = vmatprep.subr.mxu0 0.0
    %3013 = vmatpush1.msra.mxu0 0.0
    %3014 = vmatprep.mubr.f32.mxu0 0.0
    %3015 = vmatmul.mubr.f32.gmra.mrb[0].mxu0 %v2948
    %v3016 = vpop.f32.mrb[0].mxu0
    %v3017 = vadd.f32 0.0, %v3016
    %v3018 = vpop.f32.mrb[0].mxu0
    %v3019 = vadd.f32 0.0, %v3018
    %3020 = vdwg.mxu0
    %v3021 = vadd.f32 %v3019, %v2916
    %v3022 = vadd.f32 %v3021, %v1923
    %v3023 = vsub.f32 0.0, %v3022
    %v3024 = vmul.f32 %v3023, 1.442695
    %v3025 = vpow.pop %v3024
    %v3026 = vadd.f32 %v3025, 1.0
    %v3027 = vrcp.pop %v3026
    %v3028 = vmul.f32 1.0, %v3027
    %v3029 = vmul.f32 %v3028, 2.0
    %v3030 = vsub.f32 %v3029, 1.0
    %v3031 = vmul.f32 %v3028, %v2835
    %3033 = vrot.lane.b32.xlu0 %v3030, 64
    %v3034 = vpop.permute.xlu0 %3033
    %v3036 = vmul.f32 %v3028, %v3034
    %3038 = vrot.lane.b32.xlu0 %v3036, 32
    %v3039 = vpop.permute.xlu0 %3038
    %v3041 = vadd.f32 %v3031, %v3039
    %v3042 = vtanh.pop %v3041
    %3044 = vrot.lane.b32.xlu0 %v3042, 64
    %v3045 = vpop.permute.xlu0 %3044
    %v3047 = vmul.f32 %v3028, %v3045
    %3049 = vrot.lane.b32.xlu0 %v3047, 32
    %v3050 = vpop.permute.xlu0 %3049
    %v3051 = vsel %vm288, %v3050, 0
    %3053 = vmatprep.subr.mxu0 %v1911
    %3054 = vmatpush1.msra.mxu0 %v1910
    %3055 = vmatprep.subr.mxu0 %v1913
    %3056 = vmatpush1.msra.mxu0 %v1912
    %3057 = vmatprep.subr.mxu0 %v1915
    %3058 = vmatpush1.msra.mxu0 %v1914
    %3059 = vmatprep.subr.mxu0 %v1917
    %3060 = vmatpush1.msra.mxu0 %v1916
    %3061 = vmatprep.subr.mxu0 0.0
    %3062 = vmatpush1.msra.mxu0 0.0
    %3063 = vmatprep.subr.mxu0 0.0
    %3064 = vmatpush1.msra.mxu0 0.0
    %3065 = vmatprep.subr.mxu0 0.0
    %3066 = vmatpush1.msra.mxu0 0.0
    %3067 = vmatprep.subr.mxu0 0.0
    %3068 = vmatpush1.msra.mxu0 0.0
    %3069 = vmatprep.subr.mxu0 0.0
    %3070 = vmatpush1.msra.mxu0 0.0
    %3071 = vmatprep.subr.mxu0 0.0
    %3072 = vmatpush1.msra.mxu0 0.0
    %3073 = vmatprep.subr.mxu0 0.0
    %3074 = vmatpush1.msra.mxu0 0.0
    %3075 = vmatprep.subr.mxu0 0.0
    %3076 = vmatpush1.msra.mxu0 0.0
    %3077 = vmatprep.subr.mxu0 0.0
    %3078 = vmatpush1.msra.mxu0 0.0
    %3079 = vmatprep.subr.mxu0 0.0
    %3080 = vmatpush1.msra.mxu0 0.0
    %3081 = vmatprep.subr.mxu0 0.0
    %3082 = vmatpush1.msra.mxu0 0.0
    %3083 = vmatprep.subr.mxu0 0.0
    %3084 = vmatpush1.msra.mxu0 0.0
    %3085 = vmatprep.subr.mxu0 0.0
    %3086 = vmatpush1.msra.mxu0 0.0
    %3087 = vmatprep.subr.mxu0 0.0
    %3088 = vmatpush1.msra.mxu0 0.0
    %3089 = vmatprep.subr.mxu0 0.0
    %3090 = vmatpush1.msra.mxu0 0.0
    %3091 = vmatprep.subr.mxu0 0.0
    %3092 = vmatpush1.msra.mxu0 0.0
    %3093 = vmatprep.subr.mxu0 0.0
    %3094 = vmatpush1.msra.mxu0 0.0
    %3095 = vmatprep.subr.mxu0 0.0
    %3096 = vmatpush1.msra.mxu0 0.0
    %3097 = vmatprep.subr.mxu0 0.0
    %3098 = vmatpush1.msra.mxu0 0.0
    %3099 = vmatprep.subr.mxu0 0.0
    %3100 = vmatpush1.msra.mxu0 0.0
    %3101 = vmatprep.subr.mxu0 0.0
    %3102 = vmatpush1.msra.mxu0 0.0
    %3103 = vmatprep.subr.mxu0 0.0
    %3104 = vmatpush1.msra.mxu0 0.0
    %3105 = vmatprep.subr.mxu0 0.0
    %3106 = vmatpush1.msra.mxu0 0.0
    %3107 = vmatprep.subr.mxu0 0.0
    %3108 = vmatpush1.msra.mxu0 0.0
    %3109 = vmatprep.subr.mxu0 0.0
    %3110 = vmatpush1.msra.mxu0 0.0
    %3111 = vmatprep.subr.mxu0 0.0
    %3112 = vmatpush1.msra.mxu0 0.0
    %3113 = vmatprep.subr.mxu0 0.0
    %3114 = vmatpush1.msra.mxu0 0.0
    %3115 = vmatprep.subr.mxu0 0.0
    %3116 = vmatpush1.msra.mxu0 0.0
    %3117 = vmatprep.mubr.f32.mxu0 0.0
    %3118 = vmatmul.mubr.f32.gmra.mrb[0].mxu0 %v3051
    %v3119 = vpop.f32.mrb[0].mxu0
    %v3120 = vadd.f32 0.0, %v3119
    %v3121 = vpop.f32.mrb[0].mxu0
    %v3122 = vadd.f32 0.0, %v3121
    %3123 = vdwg.mxu0
    %v3124 = vadd.f32 %v3017, %v3120
    %v3125 = vadd.f32 %v3124, %v1930
    %v3126 = vsub.f32 0.0, %v3125
    %v3127 = vmul.f32 %v3126, 1.442695
    %v3128 = vpow.pop %v3127
    %v3129 = vadd.f32 %v3128, 1.0
    %v3130 = vrcp.pop %v3129
    %v3131 = vmul.f32 1.0, %v3130
    %v3132 = vmul.f32 %v3131, 2.0
    %v3133 = vsub.f32 %v3132, 1.0
    %v3134 = vmul.f32 %v3131, %v2938
    %3136 = vrot.lane.b32.xlu0 %v3133, 64
    %v3137 = vpop.permute.xlu0 %3136
    %v3139 = vmul.f32 %v3131, %v3137
    %3141 = vrot.lane.b32.xlu0 %v3139, 32
    %v3142 = vpop.permute.xlu0 %3141
    %v3144 = vadd.f32 %v3134, %v3142
    %v3145 = vtanh.pop %v3144
    %3147 = vrot.lane.b32.xlu0 %v3145, 64
    %v3148 = vpop.permute.xlu0 %3147
    %v3150 = vmul.f32 %v3131, %v3148
    %3152 = vrot.lane.b32.xlu0 %v3150, 32
    %v3153 = vpop.permute.xlu0 %3152
    %v3154 = vsel %vm288, %v3153, 0
    %3156 = vmatprep.subr.mxu0 %v1903
    %3157 = vmatpush1.msra.mxu0 %v1902
    %3158 = vmatprep.subr.mxu0 %v1905
    %3159 = vmatpush1.msra.mxu0 %v1904
    %3160 = vmatprep.subr.mxu0 %v1907
    %3161 = vmatpush1.msra.mxu0 %v1906
    %3162 = vmatprep.subr.mxu0 %v1909
    %3163 = vmatpush1.msra.mxu0 %v1908
    %3164 = vmatprep.subr.mxu0 0.0
    %3165 = vmatpush1.msra.mxu0 0.0
    %3166 = vmatprep.subr.mxu0 0.0
    %3167 = vmatpush1.msra.mxu0 0.0
    %3168 = vmatprep.subr.mxu0 0.0
    %3169 = vmatpush1.msra.mxu0 0.0
    %3170 = vmatprep.subr.mxu0 0.0
    %3171 = vmatpush1.msra.mxu0 0.0
    %3172 = vmatprep.subr.mxu0 0.0
    %3173 = vmatpush1.msra.mxu0 0.0
    %3174 = vmatprep.subr.mxu0 0.0
    %3175 = vmatpush1.msra.mxu0 0.0
    %3176 = vmatprep.subr.mxu0 0.0
    %3177 = vmatpush1.msra.mxu0 0.0
    %3178 = vmatprep.subr.mxu0 0.0
    %3179 = vmatpush1.msra.mxu0 0.0
    %3180 = vmatprep.subr.mxu0 0.0
    %3181 = vmatpush1.msra.mxu0 0.0
    %3182 = vmatprep.subr.mxu0 0.0
    %3183 = vmatpush1.msra.mxu0 0.0
    %3184 = vmatprep.subr.mxu0 0.0
    %3185 = vmatpush1.msra.mxu0 0.0
    %3186 = vmatprep.subr.mxu0 0.0
    %3187 = vmatpush1.msra.mxu0 0.0
    %3188 = vmatprep.subr.mxu0 0.0
    %3189 = vmatpush1.msra.mxu0 0.0
    %3190 = vmatprep.subr.mxu0 0.0
    %3191 = vmatpush1.msra.mxu0 0.0
    %3192 = vmatprep.subr.mxu0 0.0
    %3193 = vmatpush1.msra.mxu0 0.0
    %3194 = vmatprep.subr.mxu0 0.0
    %3195 = vmatpush1.msra.mxu0 0.0
    %3196 = vmatprep.subr.mxu0 0.0
    %3197 = vmatpush1.msra.mxu0 0.0
    %3198 = vmatprep.subr.mxu0 0.0
    %3199 = vmatpush1.msra.mxu0 0.0
    %3200 = vmatprep.subr.mxu0 0.0
    %3201 = vmatpush1.msra.mxu0 0.0
    %3202 = vmatprep.subr.mxu0 0.0
    %3203 = vmatpush1.msra.mxu0 0.0
    %3204 = vmatprep.subr.mxu0 0.0
    %3205 = vmatpush1.msra.mxu0 0.0
    %3206 = vmatprep.subr.mxu0 0.0
    %3207 = vmatpush1.msra.mxu0 0.0
    %3208 = vmatprep.subr.mxu0 0.0
    %3209 = vmatpush1.msra.mxu0 0.0
    %3210 = vmatprep.subr.mxu0 0.0
    %3211 = vmatpush1.msra.mxu0 0.0
    %3212 = vmatprep.subr.mxu0 0.0
    %3213 = vmatpush1.msra.mxu0 0.0
    %3214 = vmatprep.subr.mxu0 0.0
    %3215 = vmatpush1.msra.mxu0 0.0
    %3216 = vmatprep.subr.mxu0 0.0
    %3217 = vmatpush1.msra.mxu0 0.0
    %3218 = vmatprep.subr.mxu0 0.0
    %3219 = vmatpush1.msra.mxu0 0.0
    %3220 = vmatprep.mubr.f32.mxu0 0.0
    %3221 = vmatmul.mubr.f32.gmra.mrb[0].mxu0 %v3154
    %v3222 = vpop.f32.mrb[0].mxu0
    %v3223 = vadd.f32 0.0, %v3222
    %v3224 = vpop.f32.mrb[0].mxu0
    %v3225 = vadd.f32 0.0, %v3224
    %3226 = vdwg.mxu0
    %v3227 = vadd.f32 %v3225, %v3122
    %v3228 = vadd.f32 %v3227, %v1923
    %v3229 = vsub.f32 0.0, %v3228
    %v3230 = vmul.f32 %v3229, 1.442695
    %v3231 = vpow.pop %v3230
    %v3232 = vadd.f32 %v3231, 1.0
    %v3233 = vrcp.pop %v3232
    %v3234 = vmul.f32 1.0, %v3233
    %v3235 = vmul.f32 %v3234, 2.0
    %v3236 = vsub.f32 %v3235, 1.0
    %v3237 = vmul.f32 %v3234, %v3041
    %3239 = vrot.lane.b32.xlu0 %v3236, 64
    %v3240 = vpop.permute.xlu0 %3239
    %v3242 = vmul.f32 %v3234, %v3240
    %3244 = vrot.lane.b32.xlu0 %v3242, 32
    %v3245 = vpop.permute.xlu0 %3244
    %v3247 = vadd.f32 %v3237, %v3245
    %v3248 = vtanh.pop %v3247
    %3250 = vrot.lane.b32.xlu0 %v3248, 64
    %v3251 = vpop.permute.xlu0 %3250
    %v3253 = vmul.f32 %v3234, %v3251
    %3255 = vrot.lane.b32.xlu0 %v3253, 32
    %v3256 = vpop.permute.xlu0 %3255
    %v3257 = vsel %vm288, %v3256, 0
    %3259 = vmatprep.subr.mxu0 %v1911
    %3260 = vmatpush1.msra.mxu0 %v1910
    %3261 = vmatprep.subr.mxu0 %v1913
    %3262 = vmatpush1.msra.mxu0 %v1912
    %3263 = vmatprep.subr.mxu0 %v1915
    %3264 = vmatpush1.msra.mxu0 %v1914
    %3265 = vmatprep.subr.mxu0 %v1917
    %3266 = vmatpush1.msra.mxu0 %v1916
    %3267 = vmatprep.subr.mxu0 0.0
    %3268 = vmatpush1.msra.mxu0 0.0
    %3269 = vmatprep.subr.mxu0 0.0
    %3270 = vmatpush1.msra.mxu0 0.0
    %3271 = vmatprep.subr.mxu0 0.0
    %3272 = vmatpush1.msra.mxu0 0.0
    %3273 = vmatprep.subr.mxu0 0.0
    %3274 = vmatpush1.msra.mxu0 0.0
    %3275 = vmatprep.subr.mxu0 0.0
    %3276 = vmatpush1.msra.mxu0 0.0
    %3277 = vmatprep.subr.mxu0 0.0
    %3278 = vmatpush1.msra.mxu0 0.0
    %3279 = vmatprep.subr.mxu0 0.0
    %3280 = vmatpush1.msra.mxu0 0.0
    %3281 = vmatprep.subr.mxu0 0.0
    %3282 = vmatpush1.msra.mxu0 0.0
    %3283 = vmatprep.subr.mxu0 0.0
    %3284 = vmatpush1.msra.mxu0 0.0
    %3285 = vmatprep.subr.mxu0 0.0
    %3286 = vmatpush1.msra.mxu0 0.0
    %3287 = vmatprep.subr.mxu0 0.0
    %3288 = vmatpush1.msra.mxu0 0.0
    %3289 = vmatprep.subr.mxu0 0.0
    %3290 = vmatpush1.msra.mxu0 0.0
    %3291 = vmatprep.subr.mxu0 0.0
    %3292 = vmatpush1.msra.mxu0 0.0
    %3293 = vmatprep.subr.mxu0 0.0
    %3294 = vmatpush1.msra.mxu0 0.0
    %3295 = vmatprep.subr.mxu0 0.0
    %3296 = vmatpush1.msra.mxu0 0.0
    %3297 = vmatprep.subr.mxu0 0.0
    %3298 = vmatpush1.msra.mxu0 0.0
    %3299 = vmatprep.subr.mxu0 0.0
    %3300 = vmatpush1.msra.mxu0 0.0
    %3301 = vmatprep.subr.mxu0 0.0
    %3302 = vmatpush1.msra.mxu0 0.0
    %3303 = vmatprep.subr.mxu0 0.0
    %3304 = vmatpush1.msra.mxu0 0.0
    %3305 = vmatprep.subr.mxu0 0.0
    %3306 = vmatpush1.msra.mxu0 0.0
    %3307 = vmatprep.subr.mxu0 0.0
    %3308 = vmatpush1.msra.mxu0 0.0
    %3309 = vmatprep.subr.mxu0 0.0
    %3310 = vmatpush1.msra.mxu0 0.0
    %3311 = vmatprep.subr.mxu0 0.0
    %3312 = vmatpush1.msra.mxu0 0.0
    %3313 = vmatprep.subr.mxu0 0.0
    %3314 = vmatpush1.msra.mxu0 0.0
    %3315 = vmatprep.subr.mxu0 0.0
    %3316 = vmatpush1.msra.mxu0 0.0
    %3317 = vmatprep.subr.mxu0 0.0
    %3318 = vmatpush1.msra.mxu0 0.0
    %3319 = vmatprep.subr.mxu0 0.0
    %3320 = vmatpush1.msra.mxu0 0.0
    %3321 = vmatprep.subr.mxu0 0.0
    %3322 = vmatpush1.msra.mxu0 0.0
    %3323 = vmatprep.mubr.f32.mxu0 0.0
    %3324 = vmatmul.mubr.f32.gmra.mrb[0].mxu0 %v3257
    %v3325 = vpop.f32.mrb[0].mxu0
    %v3326 = vadd.f32 0.0, %v3325
    %v3327 = vpop.f32.mrb[0].mxu0
    %v3328 = vadd.f32 0.0, %v3327
    %3329 = vdwg.mxu0
    %v3330 = vadd.f32 %v3223, %v3326
    %v3331 = vadd.f32 %v3330, %v1930
    %v3332 = vsub.f32 0.0, %v3331
    %v3333 = vmul.f32 %v3332, 1.442695
    %v3334 = vpow.pop %v3333
    %v3335 = vadd.f32 %v3334, 1.0
    %v3336 = vrcp.pop %v3335
    %v3337 = vmul.f32 1.0, %v3336
    %v3338 = vmul.f32 %v3337, 2.0
    %v3339 = vsub.f32 %v3338, 1.0
    %v3340 = vmul.f32 %v3337, %v3144
    %3342 = vrot.lane.b32.xlu0 %v3339, 64
    %v3343 = vpop.permute.xlu0 %3342
    %v3345 = vmul.f32 %v3337, %v3343
    %3347 = vrot.lane.b32.xlu0 %v3345, 32
    %v3348 = vpop.permute.xlu0 %3347
    %v3350 = vadd.f32 %v3340, %v3348
    %v3351 = vtanh.pop %v3350
    %3353 = vrot.lane.b32.xlu0 %v3351, 64
    %v3354 = vpop.permute.xlu0 %3353
    %v3356 = vmul.f32 %v3337, %v3354
    %3358 = vrot.lane.b32.xlu0 %v3356, 32
    %v3359 = vpop.permute.xlu0 %3358
    %v3360 = vsel %vm288, %v3359, 0
    %3362 = vmatprep.subr.mxu0 %v1903
    %3363 = vmatpush1.msra.mxu0 %v1902
    %3364 = vmatprep.subr.mxu0 %v1905
    %3365 = vmatpush1.msra.mxu0 %v1904
    %3366 = vmatprep.subr.mxu0 %v1907
    %3367 = vmatpush1.msra.mxu0 %v1906
    %3368 = vmatprep.subr.mxu0 %v1909
    %3369 = vmatpush1.msra.mxu0 %v1908
    %3370 = vmatprep.subr.mxu0 0.0
    %3371 = vmatpush1.msra.mxu0 0.0
    %3372 = vmatprep.subr.mxu0 0.0
    %3373 = vmatpush1.msra.mxu0 0.0
    %3374 = vmatprep.subr.mxu0 0.0
    %3375 = vmatpush1.msra.mxu0 0.0
    %3376 = vmatprep.subr.mxu0 0.0
    %3377 = vmatpush1.msra.mxu0 0.0
    %3378 = vmatprep.subr.mxu0 0.0
    %3379 = vmatpush1.msra.mxu0 0.0
    %3380 = vmatprep.subr.mxu0 0.0
    %3381 = vmatpush1.msra.mxu0 0.0
    %3382 = vmatprep.subr.mxu0 0.0
    %3383 = vmatpush1.msra.mxu0 0.0
    %3384 = vmatprep.subr.mxu0 0.0
    %3385 = vmatpush1.msra.mxu0 0.0
    %3386 = vmatprep.subr.mxu0 0.0
    %3387 = vmatpush1.msra.mxu0 0.0
    %3388 = vmatprep.subr.mxu0 0.0
    %3389 = vmatpush1.msra.mxu0 0.0
    %3390 = vmatprep.subr.mxu0 0.0
    %3391 = vmatpush1.msra.mxu0 0.0
    %3392 = vmatprep.subr.mxu0 0.0
    %3393 = vmatpush1.msra.mxu0 0.0
    %3394 = vmatprep.subr.mxu0 0.0
    %3395 = vmatpush1.msra.mxu0 0.0
    %3396 = vmatprep.subr.mxu0 0.0
    %3397 = vmatpush1.msra.mxu0 0.0
    %3398 = vmatprep.subr.mxu0 0.0
    %3399 = vmatpush1.msra.mxu0 0.0
    %3400 = vmatprep.subr.mxu0 0.0
    %3401 = vmatpush1.msra.mxu0 0.0
    %3402 = vmatprep.subr.mxu0 0.0
    %3403 = vmatpush1.msra.mxu0 0.0
    %3404 = vmatprep.subr.mxu0 0.0
    %3405 = vmatpush1.msra.mxu0 0.0
    %3406 = vmatprep.subr.mxu0 0.0
    %3407 = vmatpush1.msra.mxu0 0.0
    %3408 = vmatprep.subr.mxu0 0.0
    %3409 = vmatpush1.msra.mxu0 0.0
    %3410 = vmatprep.subr.mxu0 0.0
    %3411 = vmatpush1.msra.mxu0 0.0
    %3412 = vmatprep.subr.mxu0 0.0
    %3413 = vmatpush1.msra.mxu0 0.0
    %3414 = vmatprep.subr.mxu0 0.0
    %3415 = vmatpush1.msra.mxu0 0.0
    %3416 = vmatprep.subr.mxu0 0.0
    %3417 = vmatpush1.msra.mxu0 0.0
    %3418 = vmatprep.subr.mxu0 0.0
    %3419 = vmatpush1.msra.mxu0 0.0
    %3420 = vmatprep.subr.mxu0 0.0
    %3421 = vmatpush1.msra.mxu0 0.0
    %3422 = vmatprep.subr.mxu0 0.0
    %3423 = vmatpush1.msra.mxu0 0.0
    %3424 = vmatprep.subr.mxu0 0.0
    %3425 = vmatpush1.msra.mxu0 0.0
    %3426 = vmatprep.mubr.f32.mxu0 0.0
    %3427 = vmatmul.mubr.f32.gmra.mrb[0].mxu0 %v3360
    %v3428 = vpop.f32.mrb[0].mxu0
    %v3429 = vadd.f32 0.0, %v3428
    %v3430 = vpop.f32.mrb[0].mxu0
    %v3431 = vadd.f32 0.0, %v3430
    %3432 = vdwg.mxu0
    %v3433 = vadd.f32 %v3431, %v3328
    %v3434 = vadd.f32 %v3433, %v1923
    %v3435 = vsub.f32 0.0, %v3434
    %v3436 = vmul.f32 %v3435, 1.442695
    %v3437 = vpow.pop %v3436
    %v3438 = vadd.f32 %v3437, 1.0
    %v3439 = vrcp.pop %v3438
    %v3440 = vmul.f32 1.0, %v3439
    %v3441 = vmul.f32 %v3440, 2.0
    %v3442 = vsub.f32 %v3441, 1.0
    %v3443 = vmul.f32 %v3440, %v3247
    %3445 = vrot.lane.b32.xlu0 %v3442, 64
    %v3446 = vpop.permute.xlu0 %3445
    %v3448 = vmul.f32 %v3440, %v3446
    %3450 = vrot.lane.b32.xlu0 %v3448, 32
    %v3451 = vpop.permute.xlu0 %3450
    %v3453 = vadd.f32 %v3443, %v3451
    %v3454 = vtanh.pop %v3453
    %3456 = vrot.lane.b32.xlu0 %v3454, 64
    %v3457 = vpop.permute.xlu0 %3456
    %v3459 = vmul.f32 %v3440, %v3457
    %3461 = vrot.lane.b32.xlu0 %v3459, 32
    %v3462 = vpop.permute.xlu0 %3461
    %v3463 = vsel %vm288, %v3462, 0
    %3465 = vmatprep.subr.mxu0 %v1911
    %3466 = vmatpush1.msra.mxu0 %v1910
    %3467 = vmatprep.subr.mxu0 %v1913
    %3468 = vmatpush1.msra.mxu0 %v1912
    %3469 = vmatprep.subr.mxu0 %v1915
    %3470 = vmatpush1.msra.mxu0 %v1914
    %3471 = vmatprep.subr.mxu0 %v1917
    %3472 = vmatpush1.msra.mxu0 %v1916
    %3473 = vmatprep.subr.mxu0 0.0
    %3474 = vmatpush1.msra.mxu0 0.0
    %3475 = vmatprep.subr.mxu0 0.0
    %3476 = vmatpush1.msra.mxu0 0.0
    %3477 = vmatprep.subr.mxu0 0.0
    %3478 = vmatpush1.msra.mxu0 0.0
    %3479 = vmatprep.subr.mxu0 0.0
    %3480 = vmatpush1.msra.mxu0 0.0
    %3481 = vmatprep.subr.mxu0 0.0
    %3482 = vmatpush1.msra.mxu0 0.0
    %3483 = vmatprep.subr.mxu0 0.0
    %3484 = vmatpush1.msra.mxu0 0.0
    %3485 = vmatprep.subr.mxu0 0.0
    %3486 = vmatpush1.msra.mxu0 0.0
    %3487 = vmatprep.subr.mxu0 0.0
    %3488 = vmatpush1.msra.mxu0 0.0
    %3489 = vmatprep.subr.mxu0 0.0
    %3490 = vmatpush1.msra.mxu0 0.0
    %3491 = vmatprep.subr.mxu0 0.0
    %3492 = vmatpush1.msra.mxu0 0.0
    %3493 = vmatprep.subr.mxu0 0.0
    %3494 = vmatpush1.msra.mxu0 0.0
    %3495 = vmatprep.subr.mxu0 0.0
    %3496 = vmatpush1.msra.mxu0 0.0
    %3497 = vmatprep.subr.mxu0 0.0
    %3498 = vmatpush1.msra.mxu0 0.0
    %3499 = vmatprep.subr.mxu0 0.0
    %3500 = vmatpush1.msra.mxu0 0.0
    %3501 = vmatprep.subr.mxu0 0.0
    %3502 = vmatpush1.msra.mxu0 0.0
    %3503 = vmatprep.subr.mxu0 0.0
    %3504 = vmatpush1.msra.mxu0 0.0
    %3505 = vmatprep.subr.mxu0 0.0
    %3506 = vmatpush1.msra.mxu0 0.0
    %3507 = vmatprep.subr.mxu0 0.0
    %3508 = vmatpush1.msra.mxu0 0.0
    %3509 = vmatprep.subr.mxu0 0.0
    %3510 = vmatpush1.msra.mxu0 0.0
    %3511 = vmatprep.subr.mxu0 0.0
    %3512 = vmatpush1.msra.mxu0 0.0
    %3513 = vmatprep.subr.mxu0 0.0
    %3514 = vmatpush1.msra.mxu0 0.0
    %3515 = vmatprep.subr.mxu0 0.0
    %3516 = vmatpush1.msra.mxu0 0.0
    %3517 = vmatprep.subr.mxu0 0.0
    %3518 = vmatpush1.msra.mxu0 0.0
    %3519 = vmatprep.subr.mxu0 0.0
    %3520 = vmatpush1.msra.mxu0 0.0
    %3521 = vmatprep.subr.mxu0 0.0
    %3522 = vmatpush1.msra.mxu0 0.0
    %3523 = vmatprep.subr.mxu0 0.0
    %3524 = vmatpush1.msra.mxu0 0.0
    %3525 = vmatprep.subr.mxu0 0.0
    %3526 = vmatpush1.msra.mxu0 0.0
    %3527 = vmatprep.subr.mxu0 0.0
    %3528 = vmatpush1.msra.mxu0 0.0
    %3529 = vmatprep.mubr.f32.mxu0 0.0
    %3530 = vmatmul.mubr.f32.gmra.mrb[0].mxu0 %v3463
    %v3531 = vpop.f32.mrb[0].mxu0
    %v3532 = vadd.f32 0.0, %v3531
    %v3533 = vpop.f32.mrb[0].mxu0
    %v3534 = vadd.f32 0.0, %v3533
    %3535 = vdwg.mxu0
    %v3536 = vadd.f32 %v3429, %v3532
    %v3537 = vadd.f32 %v3536, %v1930
    %v3538 = vsub.f32 0.0, %v3537
    %v3539 = vmul.f32 %v3538, 1.442695
    %v3540 = vpow.pop %v3539
    %v3541 = vadd.f32 %v3540, 1.0
    %v3542 = vrcp.pop %v3541
    %v3543 = vmul.f32 1.0, %v3542
    %v3544 = vmul.f32 %v3543, 2.0
    %v3545 = vsub.f32 %v3544, 1.0
    %v3546 = vmul.f32 %v3543, %v3350
    %3548 = vrot.lane.b32.xlu0 %v3545, 64
    %v3549 = vpop.permute.xlu0 %3548
    %v3551 = vmul.f32 %v3543, %v3549
    %3553 = vrot.lane.b32.xlu0 %v3551, 32
    %v3554 = vpop.permute.xlu0 %3553
    %v3556 = vadd.f32 %v3546, %v3554
    %v3557 = vtanh.pop %v3556
    %3559 = vrot.lane.b32.xlu0 %v3557, 64
    %v3560 = vpop.permute.xlu0 %3559
    %v3562 = vmul.f32 %v3543, %v3560
    %3564 = vrot.lane.b32.xlu0 %v3562, 32
    %v3565 = vpop.permute.xlu0 %3564
    %v3566 = vsel %vm288, %v3565, 0
    %3568 = vmatprep.subr.mxu0 %v1903
    %3569 = vmatpush1.msra.mxu0 %v1902
    %3570 = vmatprep.subr.mxu0 %v1905
    %3571 = vmatpush1.msra.mxu0 %v1904
    %3572 = vmatprep.subr.mxu0 %v1907
    %3573 = vmatpush1.msra.mxu0 %v1906
    %3574 = vmatprep.subr.mxu0 %v1909
    %3575 = vmatpush1.msra.mxu0 %v1908
    %3576 = vmatprep.subr.mxu0 0.0
    %3577 = vmatpush1.msra.mxu0 0.0
    %3578 = vmatprep.subr.mxu0 0.0
    %3579 = vmatpush1.msra.mxu0 0.0
    %3580 = vmatprep.subr.mxu0 0.0
    %3581 = vmatpush1.msra.mxu0 0.0
    %3582 = vmatprep.subr.mxu0 0.0
    %3583 = vmatpush1.msra.mxu0 0.0
    %3584 = vmatprep.subr.mxu0 0.0
    %3585 = vmatpush1.msra.mxu0 0.0
    %3586 = vmatprep.subr.mxu0 0.0
    %3587 = vmatpush1.msra.mxu0 0.0
    %3588 = vmatprep.subr.mxu0 0.0
    %3589 = vmatpush1.msra.mxu0 0.0
    %3590 = vmatprep.subr.mxu0 0.0
    %3591 = vmatpush1.msra.mxu0 0.0
    %3592 = vmatprep.subr.mxu0 0.0
    %3593 = vmatpush1.msra.mxu0 0.0
    %3594 = vmatprep.subr.mxu0 0.0
    %3595 = vmatpush1.msra.mxu0 0.0
    %3596 = vmatprep.subr.mxu0 0.0
    %3597 = vmatpush1.msra.mxu0 0.0
    %3598 = vmatprep.subr.mxu0 0.0
    %3599 = vmatpush1.msra.mxu0 0.0
    %3600 = vmatprep.subr.mxu0 0.0
    %3601 = vmatpush1.msra.mxu0 0.0
    %3602 = vmatprep.subr.mxu0 0.0
    %3603 = vmatpush1.msra.mxu0 0.0
    %3604 = vmatprep.subr.mxu0 0.0
    %3605 = vmatpush1.msra.mxu0 0.0
    %3606 = vmatprep.subr.mxu0 0.0
    %3607 = vmatpush1.msra.mxu0 0.0
    %3608 = vmatprep.subr.mxu0 0.0
    %3609 = vmatpush1.msra.mxu0 0.0
    %3610 = vmatprep.subr.mxu0 0.0
    %3611 = vmatpush1.msra.mxu0 0.0
    %3612 = vmatprep.subr.mxu0 0.0
    %3613 = vmatpush1.msra.mxu0 0.0
    %3614 = vmatprep.subr.mxu0 0.0
    %3615 = vmatpush1.msra.mxu0 0.0
    %3616 = vmatprep.subr.mxu0 0.0
    %3617 = vmatpush1.msra.mxu0 0.0
    %3618 = vmatprep.subr.mxu0 0.0
    %3619 = vmatpush1.msra.mxu0 0.0
    %3620 = vmatprep.subr.mxu0 0.0
    %3621 = vmatpush1.msra.mxu0 0.0
    %3622 = vmatprep.subr.mxu0 0.0
    %3623 = vmatpush1.msra.mxu0 0.0
    %3624 = vmatprep.subr.mxu0 0.0
    %3625 = vmatpush1.msra.mxu0 0.0
    %3626 = vmatprep.subr.mxu0 0.0
    %3627 = vmatpush1.msra.mxu0 0.0
    %3628 = vmatprep.subr.mxu0 0.0
    %3629 = vmatpush1.msra.mxu0 0.0
    %3630 = vmatprep.subr.mxu0 0.0
    %3631 = vmatpush1.msra.mxu0 0.0
    %3632 = vmatprep.mubr.f32.mxu0 0.0
    %3633 = vmatmul.mubr.f32.gmra.mrb[0].mxu0 %v3566
    %v3634 = vpop.f32.mrb[0].mxu0
    %v3635 = vpop.f32.mrb[0].mxu0
    %v3636 = vadd.f32 0.0, %v3635
    %3637 = vdwg.mxu0
    %v3638 = vadd.f32 %v3636, %v3534
    %v3639 = vadd.f32 %v3638, %v1923
    %v3640 = vsub.f32 0.0, %v3639
    %v3641 = vmul.f32 %v3640, 1.442695
    %v3642 = vpow.pop %v3641
    %v3643 = vadd.f32 %v3642, 1.0
    %v3644 = vrcp.pop %v3643
    %v3645 = vmul.f32 1.0, %v3644
    %v3646 = vmul.f32 %v3645, 2.0
    %v3647 = vsub.f32 %v3646, 1.0
    %v3648 = vmul.f32 %v3645, %v3453
    %3650 = vrot.lane.b32.xlu0 %v3647, 64
    %v3651 = vpop.permute.xlu0 %3650
    %v3653 = vmul.f32 %v3645, %v3651
    %3655 = vrot.lane.b32.xlu0 %v3653, 32
    %v3656 = vpop.permute.xlu0 %3655
    %v3658 = vadd.f32 %v3648, %v3656
    %v3659 = vtanh.pop %v3658
    %3661 = vrot.lane.b32.xlu0 %v3659, 64
    %v3662 = vpop.permute.xlu0 %3661
    %v3664 = vmul.f32 %v3645, %v3662
    %v3665 = vld [vmem:[%s11] sm:$0x1]
    %v3666 = vld [vmem:[#allocation2] sm:$0x1]
    %v3668 = vlaneseq
    %v3669 = vshrl.u32 %v3668, 7
    %v3670 = vsub.s32 0, %v3669
    %v3671 = vrot.slane %v3665, %v3670
    %3672 = vrot.lane.b32.xlu0 %v3671, 96
    %v3673 = vpop.permute.xlu0 %3672
    %v3675 = vmul.f32 %v2223, %v3673
    %v3676 = vmul.f32 %v2429, %v3673
    %v3677 = vmul.f32 %v2635, %v3673
    %v3678 = vmul.f32 %v2841, %v3673
    %v3679 = vmul.f32 %v3047, %v3673
    %v3680 = vmul.f32 %v3253, %v3673
    %v3681 = vmul.f32 %v3459, %v3673
    %v3682 = vmul.f32 %v3664, %v3673
    %3691 = vrot.lane.b32.xlu0 %v3675, 32
    %v3692 = vpop.permute.xlu0 %3691
    %3693 = vrot.lane.b32.xlu0 %v3676, 32
    %v3694 = vpop.permute.xlu0 %3693
    %3695 = vrot.lane.b32.xlu0 %v3677, 32
    %v3696 = vpop.permute.xlu0 %3695
    %3697 = vrot.lane.b32.xlu0 %v3678, 32
    %v3698 = vpop.permute.xlu0 %3697
    %3699 = vrot.lane.b32.xlu0 %v3679, 32
    %v3700 = vpop.permute.xlu0 %3699
    %3701 = vrot.lane.b32.xlu0 %v3680, 32
    %v3702 = vpop.permute.xlu0 %3701
    %3703 = vrot.lane.b32.xlu0 %v3681, 32
    %v3704 = vpop.permute.xlu0 %3703
    %3705 = vrot.lane.b32.xlu0 %v3682, 32
    %v3706 = vpop.permute.xlu0 %3705
    %v3715 = vsel %vm288, %v3692, 0.0
    %3716 = vadd.xlane.f32.xlu0 %v3715
    %v3717 = vpop.xlane.xlu0 %3716
    %v3718 = vsel %vm288, %v3694, 0.0
    %3719 = vadd.xlane.f32.xlu0 %v3718
    %v3720 = vpop.xlane.xlu0 %3719
    %v3721 = vsel %vm288, %v3696, 0.0
    %3722 = vadd.xlane.f32.xlu0 %v3721
    %v3723 = vpop.xlane.xlu0 %3722
    %v3724 = vsel %vm288, %v3698, 0.0
    %3725 = vadd.xlane.f32.xlu0 %v3724
    %v3726 = vpop.xlane.xlu0 %3725
    %v3727 = vsel %vm288, %v3700, 0.0
    %3728 = vadd.xlane.f32.xlu0 %v3727
    %v3729 = vpop.xlane.xlu0 %3728
    %v3730 = vsel %vm288, %v3702, 0.0
    %3731 = vadd.xlane.f32.xlu0 %v3730
    %v3732 = vpop.xlane.xlu0 %3731
    %v3733 = vsel %vm288, %v3704, 0.0
    %3734 = vadd.xlane.f32.xlu0 %v3733
    %v3735 = vpop.xlane.xlu0 %3734
    %v3736 = vsel %vm288, %v3706, 0.0
    %3737 = vadd.xlane.f32.xlu0 %v3736
    %v3738 = vpop.xlane.xlu0 %3737
    %v3740 = vlaneseq
    %v3741 = vshrl.u32 %v3740, 7
    %v3742 = vsub.s32 0, %v3741
    %v3743 = vrot.slane %v3666, %v3742
    %3744 = vset.pattern.permute.xlu0 0
    %3745 = vperm.xlu0 %3744, %v3743
    %v3746 = vpop.permute.xlu0 %3745
    %v3748 = vadd.f32 %v3717, %v3746
    %v3749 = vadd.f32 %v3720, %v3746
    %v3750 = vadd.f32 %v3723, %v3746
    %v3751 = vadd.f32 %v3726, %v3746
    %v3752 = vadd.f32 %v3729, %v3746
    %v3753 = vadd.f32 %v3732, %v3746
    %v3754 = vadd.f32 %v3735, %v3746
    %v3755 = vadd.f32 %v3738, %v3746
    %v3764 = vlaneseq
    %v3765 = vand.u32 %v3764, 127
    %v3766 = vlaneseq
    %v3767 = vshrl.u32 %v3766, 7
    %v3768 = vsub.s32 %v3765, %v3767
    %v3769 = vrot.slane %v3748, %v3768
    %v3770 = vlaneseq
    %v3771 = vshrl.u32 %v3770, 7
    %v3772 = vsub.s32 %v3765, %v3771
    %v3773 = vrot.slane %v3749, %v3772
    %v3774 = vlaneseq
    %v3775 = vshrl.u32 %v3774, 7
    %v3776 = vsub.s32 %v3765, %v3775
    %v3777 = vrot.slane %v3750, %v3776
    %v3778 = vlaneseq
    %v3779 = vshrl.u32 %v3778, 7
    %v3780 = vsub.s32 %v3765, %v3779
    %v3781 = vrot.slane %v3751, %v3780
    %v3782 = vlaneseq
    %v3783 = vshrl.u32 %v3782, 7
    %v3784 = vsub.s32 %v3765, %v3783
    %v3785 = vrot.slane %v3752, %v3784
    %v3786 = vlaneseq
    %v3787 = vshrl.u32 %v3786, 7
    %v3788 = vsub.s32 %v3765, %v3787
    %v3789 = vrot.slane %v3753, %v3788
    %v3790 = vlaneseq
    %v3791 = vshrl.u32 %v3790, 7
    %v3792 = vsub.s32 %v3765, %v3791
    %v3793 = vrot.slane %v3754, %v3792
    %v3794 = vlaneseq
    %v3795 = vshrl.u32 %v3794, 7
    %v3796 = vsub.s32 %v3765, %v3795
    %v3797 = vrot.slane %v3755, %v3796
    %vm3798 = vcmask 1041409
    %v3799 = vsel %vm3798, %v3773, %v3769
    %vm3800 = vcmask 1042434
    %v3801 = vsel %vm3800, %v3777, %v3799
    %vm3802 = vcmask 1043459
    %v3803 = vsel %vm3802, %v3781, %v3801
    %vm3804 = vcmask 1044484
    %v3805 = vsel %vm3804, %v3785, %v3803
    %vm3806 = vcmask 1045509
    %v3807 = vsel %vm3806, %v3789, %v3805
    %vm3808 = vcmask 1046534
    %v3809 = vsel %vm3808, %v3793, %v3807
    %vm3810 = vcmask 1047559
    %v3811 = vsel %vm3810, %v3797, %v3809
    %vm3813 = vcmask 64512
    %3814 = vst.msk [vmem:[#allocation8] sm:$0xff] %vm3813, %v3811
    // Predicated region
    $region62: #{tpu_custom_call.1} parent=1 // pred_check
      _
    $region63: #{tpu_custom_call.1} parent=1 // pred_check_branch
      %3816 = sbr.rel (0) target = $region65
    $region64: #{tpu_custom_call.1} parent=1 // pred_region
      %s3818 = ssub.s32 128, 128
      %3819 = vsyncadd [#allocation5], %s3818
      %s3821 = sshll.u32 [#allocation8], 4
      %s3822 = int_to_ptr.vmem [resolvable:$true] %s3821
      %3824 = dma.vmem_to_hbm [thread:$0]  %s3822, 128, %s13, [#allocation5]
    $region65: #{tpu_custom_call.1} parent=1 // pred_fallthru
      _
    // Predicated region
    $region66: #{tpu_custom_call.1} parent=1 // pred_check
      _
    $region67: #{tpu_custom_call.1} parent=1 // pred_check_branch
      %3826 = sbr.rel (0) target = $region69
    $region68: #{tpu_custom_call.1} parent=1 // pred_region
      %3827 = dma.done [#allocation5], 128
    $region69: #{tpu_custom_call.1} parent=1 // pred_fallthru
      _
    %3828 = vsyncpa [#allocation4], 1
    %3829 = vsyncpa [#allocation7], 1
    %3830 = vsyncpa [#allocation5], 1

</llo_original>
